<compile_context>
chip_gen: v6e
topology: v6e:2x2x1
jax: 0.10.0
libtpu: 0.0.40
codegen_flags: <defaults>
</compile_context>

<pallas_src>
import functools

import jax
import jax.numpy as jnp
from jax import lax
from jax.experimental import pallas as pl
from jax.experimental.pallas import tpu as pltpu


# ----------------------------------------------------------------------------
# Fused Block kernel (one batch element per grid step, channels-first layout)
# ----------------------------------------------------------------------------
def _block_kernel(x_ref,
                  w11_ref, b11_ref, wdw1_ref, bdw1_ref,
                  w13_ref, b13_ref, w14_ref, b14_ref,
                  wtr_ref, btr_ref,
                  w21_ref, b21_ref, wdw2_ref, bdw2_ref,
                  w23_ref, b23_ref, w24_ref, b24_ref,
                  wsc_ref,
                  o_ref,
                  *, H, W):
    f32 = jnp.float32
    HW = H * W

    # ---- column-boundary masks (shared by all three 3x3 convs) -------------
    col = lax.broadcasted_iota(jnp.int32, (1, HW), 1) % W
    left_ok = (col > 0).astype(f32)          # reading x-1 is valid
    right_ok = (col < W - 1).astype(f32)     # reading x+1 is valid

    def taps(a):
        """9 'same'-padded 3x3 tap views of a (C, H*W) row-major activation.

        tap (dy, dx) gives v[:, y*W+x] == a_spatial[y+dy, x+dx] (0 if OOB).
        Row (dy) out-of-range is handled by the zero fill of the lane shift;
        column (dx) wrap across row boundaries is killed by the col masks.
        """
        c = a.shape[0]
        outs = []
        for dy in (-1, 0, 1):
            for dx in (-1, 0, 1):
                s = dy * W + dx
                if s == 0:
                    v = a
                elif s > 0:
                    v = jnp.concatenate(
                        [a[:, s:], jnp.zeros((c, s), f32)], axis=1)
                else:
                    v = jnp.concatenate(
                        [jnp.zeros((c, -s), f32), a[:, :s]], axis=1)
                if dx == 1:
                    v = v * right_ok
                elif dx == -1:
                    v = v * left_ok
                outs.append(v)
        return outs

    def mm(a, w_ref, b_ref=None, relu=False):
        """1x1 conv: (Cout, Cin) @ (Cin, HW) on the MXU (+bias, +ReLU)."""
        y = jnp.dot(w_ref[...], a, preferred_element_type=f32)
        if b_ref is not None:
            y = y + b_ref[...]
        if relu:
            y = jnp.maximum(y, 0.0)
        return y

    def dw3x3_relu(a, w_ref, b_ref):
        """Depthwise 3x3 ('same') + bias + ReLU: 9-tap VPU accumulation."""
        w = w_ref[...]                                   # (C, 9), BN folded
        acc = jnp.zeros(a.shape, f32)
        for k, v in enumerate(taps(a)):
            acc = acc + v * w[:, k:k + 1]
        return jnp.maximum(acc + b_ref[...], 0.0)

    def conv3x3_relu(a, w_ref, b_ref):
        """Dense 3x3 ('same') + bias + ReLU: 9 shifted MXU matmuls."""
        w = w_ref[...]                                   # (9, Cout, Cin)
        acc = None
        for k, v in enumerate(taps(a)):
            y = jnp.dot(w[k], v, preferred_element_type=f32)
            acc = y if acc is None else acc + y
        return jnp.maximum(acc + b_ref[...], 0.0)

    x = x_ref[...].astype(f32)                           # (Cin, HW)

    # ---- IB1: 1x1 expand -> dw3x3 -> 1x1 -> 1x1 project, + residual --------
    h = mm(x, w11_ref, b11_ref, relu=True)
    h = dw3x3_relu(h, wdw1_ref, bdw1_ref)
    h = mm(h, w13_ref, b13_ref, relu=True)
    h = mm(h, w14_ref, b14_ref) + x

    # ---- Transit: dense 3x3 + BN + ReLU -------------------------------------
    t = conv3x3_relu(h, wtr_ref, btr_ref)

    # ---- IB2 -----------------------------------------------------------------
    g = mm(t, w21_ref, b21_ref, relu=True)
    g = dw3x3_relu(g, wdw2_ref, bdw2_ref)
    g = mm(g, w23_ref, b23_ref, relu=True)
    g = mm(g, w24_ref, b24_ref) + t

    # ---- shortcut 1x1 conv (no BN / bias) + final add ------------------------
    out = g + mm(x, wsc_ref)
    o_ref[...] = out.astype(o_ref.dtype)


# ----------------------------------------------------------------------------
# Wrapper: fold BN into weights, transpose to channels-first, one pallas_call
# ----------------------------------------------------------------------------
def block_forward(x, p):
    """Fused Block forward. x: (N, H, W, Cin) NHWC -> (N, H, W, Cout)."""
    N, H, W, Cin = x.shape
    HW = H * W

    # Fold eval-mode BN scale into conv weights (per output channel) and
    # re-lay-out weights for the channels-first kernel.
    def fold_1x1(w, bn):            # (Cin, Cout) -> (Cout, Cin), (Cout, 1)
        s, b = bn
        return (w * s[None, :]).T, b.reshape(-1, 1)

    def fold_dw(w, bn):             # (3, 3, C) -> (C, 9), (C, 1)
        s, b = bn
        return (w * s).reshape(9, -1).T, b.reshape(-1, 1)

    def fold_c3(w, bn):             # (3, 3, Ci, Co) -> (9, Co, Ci), (Co, 1)
        s, b = bn
        w = (w * s).reshape(9, w.shape[2], w.shape[3])
        return jnp.transpose(w, (0, 2, 1)), b.reshape(-1, 1)

    w11, b11 = fold_1x1(p['ib1_w1'], p['ib1_bn1'])
    wdw1, bdw1 = fold_dw(p['ib1_dw'], p['ib1_bn2'])
    w13, b13 = fold_1x1(p['ib1_w3'], p['ib1_bn3'])
    w14, b14 = fold_1x1(p['ib1_w4'], p['ib1_bn4'])
    wtr, btr = fold_c3(p['tr_w'], p['tr_bn'])
    w21, b21 = fold_1x1(p['ib2_w1'], p['ib2_bn1'])
    wdw2, bdw2 = fold_dw(p['ib2_dw'], p['ib2_bn2'])
    w23, b23 = fold_1x1(p['ib2_w3'], p['ib2_bn3'])
    w24, b24 = fold_1x1(p['ib2_w4'], p['ib2_bn4'])
    wsc = p['sc_w'].T               # (Cout, Cin)

    Cout = wtr.shape[1]

    # NHWC -> (N, C, H*W): spatial axis (lane-dense) last.
    x_chw = jnp.transpose(x, (0, 3, 1, 2)).reshape(N, Cin, HW)

    args = (x_chw,
            w11, b11, wdw1, bdw1, w13, b13, w14, b14, wtr, btr,
            w21, b21, wdw2, bdw2, w23, b23, w24, b24, wsc)

    def _const_spec(a):             # whole (small) weight, replicated per step
        nd = a.ndim
        return pl.BlockSpec(a.shape, lambda n, _nd=nd: (0,) * _nd)

    in_specs = ([pl.BlockSpec((None, Cin, HW), lambda n: (n, 0, 0))]
                + [_const_spec(a) for a in args[1:]])

    out = pl.pallas_call(
        functools.partial(_block_kernel, H=H, W=W),
        out_shape=jax.ShapeDtypeStruct((N, Cout, HW), x.dtype),
        grid=(N,),
        in_specs=in_specs,
        out_specs=pl.BlockSpec((None, Cout, HW), lambda n: (n, 0, 0)),
        compiler_params=pltpu.CompilerParams(
            dimension_semantics=("parallel",),
            vmem_limit_bytes=32 * 1024 * 1024,
        ),
    )(*args)
    # (N, Cout, H*W) -> NHWC
    return jnp.transpose(out.reshape(N, Cout, H, W), (0, 2, 3, 1))


# ----------------------------------------------------------------------------
# Deterministic parameter construction (eval-mode BN -> scale/bias)
# ----------------------------------------------------------------------------
def _make_bn(key, c):
    k1, k2, k3, k4 = jax.random.split(key, 4)
    gamma = 1.0 + 0.1 * jax.random.normal(k1, (c,), jnp.float32)
    beta = 0.1 * jax.random.normal(k2, (c,), jnp.float32)
    mean = 0.1 * jax.random.normal(k3, (c,), jnp.float32)
    var = 1.0 + 0.1 * jax.random.uniform(k4, (c,), jnp.float32)
    eps = 1e-5
    scale = gamma / jnp.sqrt(var + eps)
    bias = beta - mean * scale
    return scale, bias


def make_block_params(key, c_in, c_out):
    ks = jax.random.split(key, 20)
    w = lambda k, shape: (0.2 * jax.random.normal(k, shape, jnp.float32))
    inter1, inter2 = 4 * c_in, 4 * c_out
    return {
        # IB1
        'ib1_w1': w(ks[0], (c_in, inter1)),  'ib1_bn1': _make_bn(ks[1], inter1),
        'ib1_dw': w(ks[2], (3, 3, inter1)),  'ib1_bn2': _make_bn(ks[3], inter1),
        'ib1_w3': w(ks[4], (inter1, inter1)),'ib1_bn3': _make_bn(ks[5], inter1),
        'ib1_w4': w(ks[6], (inter1, c_in)),  'ib1_bn4': _make_bn(ks[7], c_in),
        # Transit
        'tr_w': w(ks[8], (3, 3, c_in, c_out)), 'tr_bn': _make_bn(ks[9], c_out),
        # IB2
        'ib2_w1': w(ks[10], (c_out, inter2)),  'ib2_bn1': _make_bn(ks[11], inter2),
        'ib2_dw': w(ks[12], (3, 3, inter2)),   'ib2_bn2': _make_bn(ks[13], inter2),
        'ib2_w3': w(ks[14], (inter2, inter2)), 'ib2_bn3': _make_bn(ks[15], inter2),
        'ib2_w4': w(ks[16], (inter2, c_out)),  'ib2_bn4': _make_bn(ks[17], c_out),
        # shortcut conv
        'sc_w': w(ks[18], (c_in, c_out)),
    }


# ----------------------------------------------------------------------------
# Pure-JAX reference (lax.conv, unfolded BN) for verification
# ----------------------------------------------------------------------------
def _ref_forward(x, p):
    def conv(y, w_hwio, pad, groups=1):
        return lax.conv_general_dilated(
            y, w_hwio, (1, 1), pad,
            dimension_numbers=('NHWC', 'HWIO', 'NHWC'),
            feature_group_count=groups)

    bn = lambda y, sb: y * sb[0] + sb[1]
    relu = lambda z: jnp.maximum(z, 0.0)
    c1 = lambda y, w: conv(y, w.reshape(1, 1, *w.shape), [(0, 0), (0, 0)])
    dw = lambda y, w: conv(y, w.reshape(3, 3, 1, w.shape[-1]), [(1, 1), (1, 1)],
                           groups=w.shape[-1])
    c3 = lambda y, w: conv(y, w, [(1, 1), (1, 1)])

    # TODO(synk): Dropout(p=0.1) is identity in eval mode and omitted here.
    h = relu(bn(c1(x, p['ib1_w1']), p['ib1_bn1']))
    h = relu(bn(dw(h, p['ib1_dw']), p['ib1_bn2']))
    h = relu(bn(c1(h, p['ib1_w3']), p['ib1_bn3']))
    h = bn(c1(h, p['ib1_w4']), p['ib1_bn4']) + x
    h = relu(bn(c3(h, p['tr_w']), p['tr_bn']))
    g = relu(bn(c1(h, p['ib2_w1']), p['ib2_bn1']))
    g = relu(bn(dw(g, p['ib2_dw']), p['ib2_bn2']))
    g = relu(bn(c1(g, p['ib2_w3']), p['ib2_bn3']))
    g = bn(c1(g, p['ib2_w4']), p['ib2_bn4']) + h
    return g + c1(x, p['sc_w'])


# ----------------------------------------------------------------------------
if __name__ == "__main__":
    N, C_IN, C_OUT, H, W = 2, 4, 8, 16, 16

    key = jax.random.PRNGKey(0)
    kx, kp = jax.random.split(key)
    x = jax.random.normal(kx, (N, H, W, C_IN), jnp.float32)   # NHWC
    params = make_block_params(kp, C_IN, C_OUT)

    out = jax.jit(block_forward)(x, params)
    out = jax.block_until_ready(out)

    ref = _ref_forward(x, params)
    assert out.shape == (N, H, W, C_OUT)
    assert jnp.allclose(out, ref, atol=1e-3, rtol=1e-3), (
        float(jnp.max(jnp.abs(out - ref))))

    print("KERNEL_OK")
</pallas_src>

<mosaic_0001>
module attributes {stable_mosaic.version = 11 : i64} {
  func.func @_block_kernel(%arg0: i32, %arg1: memref<1x4x256xf32, #tpu.memory_space<vmem>>, %arg2: memref<16x4xf32, #tpu.memory_space<vmem>>, %arg3: memref<16x1xf32, #tpu.memory_space<vmem>>, %arg4: memref<16x9xf32, #tpu.memory_space<vmem>>, %arg5: memref<16x1xf32, #tpu.memory_space<vmem>>, %arg6: memref<16x16xf32, #tpu.memory_space<vmem>>, %arg7: memref<16x1xf32, #tpu.memory_space<vmem>>, %arg8: memref<4x16xf32, #tpu.memory_space<vmem>>, %arg9: memref<4x1xf32, #tpu.memory_space<vmem>>, %arg10: memref<9x8x4xf32, #tpu.memory_space<vmem>>, %arg11: memref<8x1xf32, #tpu.memory_space<vmem>>, %arg12: memref<32x8xf32, #tpu.memory_space<vmem>>, %arg13: memref<32x1xf32, #tpu.memory_space<vmem>>, %arg14: memref<32x9xf32, #tpu.memory_space<vmem>>, %arg15: memref<32x1xf32, #tpu.memory_space<vmem>>, %arg16: memref<32x32xf32, #tpu.memory_space<vmem>>, %arg17: memref<32x1xf32, #tpu.memory_space<vmem>>, %arg18: memref<8x32xf32, #tpu.memory_space<vmem>>, %arg19: memref<8x1xf32, #tpu.memory_space<vmem>>, %arg20: memref<8x4xf32, #tpu.memory_space<vmem>>, %arg21: memref<1x8x256xf32, #tpu.memory_space<vmem>>) attributes {dimension_semantics = [#tpu.dimension_semantics<parallel>], iteration_bounds = array<i64: 2>, scalar_prefetch = 0 : i64, scratch_operands = 0 : i64, tpu.core_type = #tpu.core_type<tc>, window_params = [{transform_indices = @transform_0, window_bounds = array<i64: 1, 4, 256>}, {pipeline_mode = #tpu.pipeline_mode<synchronous>, transform_indices = @transform_1, window_bounds = array<i64: 16, 4>}, {pipeline_mode = #tpu.pipeline_mode<synchronous>, transform_indices = @transform_2, window_bounds = array<i64: 16, 1>}, {pipeline_mode = #tpu.pipeline_mode<synchronous>, transform_indices = @transform_3, window_bounds = array<i64: 16, 9>}, {pipeline_mode = #tpu.pipeline_mode<synchronous>, transform_indices = @transform_4, window_bounds = array<i64: 16, 1>}, {pipeline_mode = #tpu.pipeline_mode<synchronous>, transform_indices = @transform_5, window_bounds = array<i64: 16, 16>}, {pipeline_mode = #tpu.pipeline_mode<synchronous>, transform_indices = @transform_6, window_bounds = array<i64: 16, 1>}, {pipeline_mode = #tpu.pipeline_mode<synchronous>, transform_indices = @transform_7, window_bounds = array<i64: 4, 16>}, {pipeline_mode = #tpu.pipeline_mode<synchronous>, transform_indices = @transform_8, window_bounds = array<i64: 4, 1>}, {pipeline_mode = #tpu.pipeline_mode<synchronous>, transform_indices = @transform_9, window_bounds = array<i64: 9, 8, 4>}, {pipeline_mode = #tpu.pipeline_mode<synchronous>, transform_indices = @transform_10, window_bounds = array<i64: 8, 1>}, {pipeline_mode = #tpu.pipeline_mode<synchronous>, transform_indices = @transform_11, window_bounds = array<i64: 32, 8>}, {pipeline_mode = #tpu.pipeline_mode<synchronous>, transform_indices = @transform_12, window_bounds = array<i64: 32, 1>}, {pipeline_mode = #tpu.pipeline_mode<synchronous>, transform_indices = @transform_13, window_bounds = array<i64: 32, 9>}, {pipeline_mode = #tpu.pipeline_mode<synchronous>, transform_indices = @transform_14, window_bounds = array<i64: 32, 1>}, {pipeline_mode = #tpu.pipeline_mode<synchronous>, transform_indices = @transform_15, window_bounds = array<i64: 32, 32>}, {pipeline_mode = #tpu.pipeline_mode<synchronous>, transform_indices = @transform_16, window_bounds = array<i64: 32, 1>}, {pipeline_mode = #tpu.pipeline_mode<synchronous>, transform_indices = @transform_17, window_bounds = array<i64: 8, 32>}, {pipeline_mode = #tpu.pipeline_mode<synchronous>, transform_indices = @transform_18, window_bounds = array<i64: 8, 1>}, {pipeline_mode = #tpu.pipeline_mode<synchronous>, transform_indices = @transform_19, window_bounds = array<i64: 8, 4>}, {transform_indices = @transform_20, window_bounds = array<i64: 1, 8, 256>}]} {
    %0 = tpu.iota {dimensions = array<i32: 1>} : vector<1x256xi32>
    %c16_i32 = arith.constant 16 : i32
    %c0_i32 = arith.constant 0 : i32
    %1 = arith.cmpi eq, %c16_i32, %c0_i32 : i32
    %c1_i32 = arith.constant 1 : i32
    %2 = arith.select %1, %c1_i32, %c16_i32 : i32
    %3 = vector.broadcast %2 : i32 to vector<1x256xi32>
    %4 = arith.remsi %0, %3 : vector<1x256xi32>
    %c0_i32_0 = arith.constant 0 : i32
    %5 = vector.broadcast %c0_i32_0 : i32 to vector<1x256xi32>
    %6 = arith.cmpi ne, %4, %5 : vector<1x256xi32>
    %c0_i32_1 = arith.constant 0 : i32
    %7 = vector.broadcast %c0_i32_1 : i32 to vector<1x256xi32>
    %8 = arith.cmpi slt, %4, %7 : vector<1x256xi32>
    %c0_i32_2 = arith.constant 0 : i32
    %9 = arith.cmpi slt, %2, %c0_i32_2 : i32
    %10 = vector.broadcast %9 : i1 to vector<1x256xi1>
    %11 = vector.broadcast %10 : vector<1x256xi1> to vector<1x256xi1>
    %12 = arith.xori %8, %11 : vector<1x256xi1>
    %13 = arith.andi %12, %6 : vector<1x256xi1>
    %14 = vector.broadcast %2 : i32 to vector<1x256xi32>
    %15 = arith.addi %4, %14 : vector<1x256xi32>
    %16 = arith.select %13, %15, %4 : vector<1x256xi1>, vector<1x256xi32>
    %c0_i32_3 = arith.constant 0 : i32
    %17 = vector.broadcast %c0_i32_3 : i32 to vector<1x256xi32>
    %18 = arith.cmpi sgt, %16, %17 : vector<1x256xi32>
    %19 = arith.extui %18 : vector<1x256xi1> to vector<1x256xi32>
    %20 = arith.sitofp %19 : vector<1x256xi32> to vector<1x256xf32>
    %c15_i32 = arith.constant 15 : i32
    %21 = vector.broadcast %c15_i32 : i32 to vector<1x256xi32>
    %22 = arith.cmpi slt, %16, %21 : vector<1x256xi32>
    %23 = arith.extui %22 : vector<1x256xi1> to vector<1x256xi32>
    %24 = arith.sitofp %23 : vector<1x256xi32> to vector<1x256xf32>
    %c0 = arith.constant 0 : index
    %c0_4 = arith.constant 0 : index
    %c0_5 = arith.constant 0 : index
    %25 = vector.load %arg1[%c0, %c0_4, %c0_5] : memref<1x4x256xf32, #tpu.memory_space<vmem>>, vector<1x4x256xf32>
    %26 = vector.shape_cast %25 : vector<1x4x256xf32> to vector<4x256xf32>
    %c0_6 = arith.constant 0 : index
    %c0_7 = arith.constant 0 : index
    %27 = vector.load %arg2[%c0_6, %c0_7] : memref<16x4xf32, #tpu.memory_space<vmem>>, vector<16x4xf32>
    %cst = arith.constant dense<0.000000e+00> : vector<16x256xf32>
    %28 = tpu.matmul %27, %26, %cst {dimension_numbers = #tpu.dot_dimension_numbers<[1], [0], [0], [1], [0, 0, 1, 1], [], []>} : vector<16x4xf32>, vector<4x256xf32>, vector<16x256xf32> -> vector<16x256xf32>
    %c0_8 = arith.constant 0 : index
    %c0_9 = arith.constant 0 : index
    %29 = vector.load %arg3[%c0_8, %c0_9] : memref<16x1xf32, #tpu.memory_space<vmem>>, vector<16x1xf32>
    %30 = vector.broadcast %29 : vector<16x1xf32> to vector<16x256xf32>
    %31 = arith.addf %28, %30 : vector<16x256xf32>
    %cst_10 = arith.constant 0.000000e+00 : f32
    %32 = vector.broadcast %cst_10 : f32 to vector<16x256xf32>
    %33 = arith.maximumf %31, %32 : vector<16x256xf32>
    %c0_11 = arith.constant 0 : index
    %c0_12 = arith.constant 0 : index
    %34 = vector.load %arg4[%c0_11, %c0_12] : memref<16x9xf32, #tpu.memory_space<vmem>>, vector<16x9xf32>
    %cst_13 = arith.constant 0.000000e+00 : f32
    %35 = vector.broadcast %cst_13 : f32 to vector<16x256xf32>
    %cst_14 = arith.constant 0.000000e+00 : f32
    %36 = vector.broadcast %cst_14 : f32 to vector<16x17xf32>
    %37 = vector.extract_strided_slice %33 {offsets = [0, 0], sizes = [16, 239], strides = [1, 1]} : vector<16x256xf32> to vector<16x239xf32>
    %38 = tpu.concatenate %36, %37 in 1 : vector<16x17xf32>, vector<16x239xf32> -> vector<16x256xf32>
    %39 = vector.broadcast %20 : vector<1x256xf32> to vector<16x256xf32>
    %40 = arith.mulf %38, %39 : vector<16x256xf32>
    %cst_15 = arith.constant 0.000000e+00 : f32
    %41 = vector.broadcast %cst_15 : f32 to vector<16x16xf32>
    %42 = vector.extract_strided_slice %33 {offsets = [0, 0], sizes = [16, 240], strides = [1, 1]} : vector<16x256xf32> to vector<16x240xf32>
    %43 = tpu.concatenate %41, %42 in 1 : vector<16x16xf32>, vector<16x240xf32> -> vector<16x256xf32>
    %cst_16 = arith.constant 0.000000e+00 : f32
    %44 = vector.broadcast %cst_16 : f32 to vector<16x15xf32>
    %45 = vector.extract_strided_slice %33 {offsets = [0, 0], sizes = [16, 241], strides = [1, 1]} : vector<16x256xf32> to vector<16x241xf32>
    %46 = tpu.concatenate %44, %45 in 1 : vector<16x15xf32>, vector<16x241xf32> -> vector<16x256xf32>
    %47 = vector.broadcast %24 : vector<1x256xf32> to vector<16x256xf32>
    %48 = arith.mulf %46, %47 : vector<16x256xf32>
    %cst_17 = arith.constant 0.000000e+00 : f32
    %49 = vector.broadcast %cst_17 : f32 to vector<16x1xf32>
    %50 = vector.extract_strided_slice %33 {offsets = [0, 0], sizes = [16, 255], strides = [1, 1]} : vector<16x256xf32> to vector<16x255xf32>
    %51 = tpu.concatenate %49, %50 in 1 : vector<16x1xf32>, vector<16x255xf32> -> vector<16x256xf32>
    %52 = vector.broadcast %20 : vector<1x256xf32> to vector<16x256xf32>
    %53 = arith.mulf %51, %52 : vector<16x256xf32>
    %54 = vector.extract_strided_slice %33 {offsets = [0, 1], sizes = [16, 255], strides = [1, 1]} : vector<16x256xf32> to vector<16x255xf32>
    %cst_18 = arith.constant 0.000000e+00 : f32
    %55 = vector.broadcast %cst_18 : f32 to vector<16x1xf32>
    %56 = tpu.concatenate %54, %55 in 1 : vector<16x255xf32>, vector<16x1xf32> -> vector<16x256xf32>
    %57 = vector.broadcast %24 : vector<1x256xf32> to vector<16x256xf32>
    %58 = arith.mulf %56, %57 : vector<16x256xf32>
    %59 = vector.extract_strided_slice %33 {offsets = [0, 15], sizes = [16, 241], strides = [1, 1]} : vector<16x256xf32> to vector<16x241xf32>
    %cst_19 = arith.constant 0.000000e+00 : f32
    %60 = vector.broadcast %cst_19 : f32 to vector<16x15xf32>
    %61 = tpu.concatenate %59, %60 in 1 : vector<16x241xf32>, vector<16x15xf32> -> vector<16x256xf32>
    %62 = vector.broadcast %20 : vector<1x256xf32> to vector<16x256xf32>
    %63 = arith.mulf %61, %62 : vector<16x256xf32>
    %64 = vector.extract_strided_slice %33 {offsets = [0, 16], sizes = [16, 240], strides = [1, 1]} : vector<16x256xf32> to vector<16x240xf32>
    %cst_20 = arith.constant 0.000000e+00 : f32
    %65 = vector.broadcast %cst_20 : f32 to vector<16x16xf32>
    %66 = tpu.concatenate %64, %65 in 1 : vector<16x240xf32>, vector<16x16xf32> -> vector<16x256xf32>
    %67 = vector.extract_strided_slice %33 {offsets = [0, 17], sizes = [16, 239], strides = [1, 1]} : vector<16x256xf32> to vector<16x239xf32>
    %cst_21 = arith.constant 0.000000e+00 : f32
    %68 = vector.broadcast %cst_21 : f32 to vector<16x17xf32>
    %69 = tpu.concatenate %67, %68 in 1 : vector<16x239xf32>, vector<16x17xf32> -> vector<16x256xf32>
    %70 = vector.broadcast %24 : vector<1x256xf32> to vector<16x256xf32>
    %71 = arith.mulf %69, %70 : vector<16x256xf32>
    %72 = vector.extract_strided_slice %34 {offsets = [0, 0], sizes = [16, 1], strides = [1, 1]} : vector<16x9xf32> to vector<16x1xf32>
    %73 = vector.broadcast %72 : vector<16x1xf32> to vector<16x256xf32>
    %74 = arith.mulf %40, %73 : vector<16x256xf32>
    %75 = arith.addf %35, %74 : vector<16x256xf32>
    %76 = vector.extract_strided_slice %34 {offsets = [0, 1], sizes = [16, 1], strides = [1, 1]} : vector<16x9xf32> to vector<16x1xf32>
    %77 = vector.broadcast %76 : vector<16x1xf32> to vector<16x256xf32>
    %78 = arith.mulf %43, %77 : vector<16x256xf32>
    %79 = arith.addf %75, %78 : vector<16x256xf32>
    %80 = vector.extract_strided_slice %34 {offsets = [0, 2], sizes = [16, 1], strides = [1, 1]} : vector<16x9xf32> to vector<16x1xf32>
    %81 = vector.broadcast %80 : vector<16x1xf32> to vector<16x256xf32>
    %82 = arith.mulf %48, %81 : vector<16x256xf32>
    %83 = arith.addf %79, %82 : vector<16x256xf32>
    %84 = vector.extract_strided_slice %34 {offsets = [0, 3], sizes = [16, 1], strides = [1, 1]} : vector<16x9xf32> to vector<16x1xf32>
    %85 = vector.broadcast %84 : vector<16x1xf32> to vector<16x256xf32>
    %86 = arith.mulf %53, %85 : vector<16x256xf32>
    %87 = arith.addf %83, %86 : vector<16x256xf32>
    %88 = vector.extract_strided_slice %34 {offsets = [0, 4], sizes = [16, 1], strides = [1, 1]} : vector<16x9xf32> to vector<16x1xf32>
    %89 = vector.broadcast %88 : vector<16x1xf32> to vector<16x256xf32>
    %90 = arith.mulf %33, %89 : vector<16x256xf32>
    %91 = arith.addf %87, %90 : vector<16x256xf32>
    %92 = vector.extract_strided_slice %34 {offsets = [0, 5], sizes = [16, 1], strides = [1, 1]} : vector<16x9xf32> to vector<16x1xf32>
    %93 = vector.broadcast %92 : vector<16x1xf32> to vector<16x256xf32>
    %94 = arith.mulf %58, %93 : vector<16x256xf32>
    %95 = arith.addf %91, %94 : vector<16x256xf32>
    %96 = vector.extract_strided_slice %34 {offsets = [0, 6], sizes = [16, 1], strides = [1, 1]} : vector<16x9xf32> to vector<16x1xf32>
    %97 = vector.broadcast %96 : vector<16x1xf32> to vector<16x256xf32>
    %98 = arith.mulf %63, %97 : vector<16x256xf32>
    %99 = arith.addf %95, %98 : vector<16x256xf32>
    %100 = vector.extract_strided_slice %34 {offsets = [0, 7], sizes = [16, 1], strides = [1, 1]} : vector<16x9xf32> to vector<16x1xf32>
    %101 = vector.broadcast %100 : vector<16x1xf32> to vector<16x256xf32>
    %102 = arith.mulf %66, %101 : vector<16x256xf32>
    %103 = arith.addf %99, %102 : vector<16x256xf32>
    %104 = vector.extract_strided_slice %34 {offsets = [0, 8], sizes = [16, 1], strides = [1, 1]} : vector<16x9xf32> to vector<16x1xf32>
    %105 = vector.broadcast %104 : vector<16x1xf32> to vector<16x256xf32>
    %106 = arith.mulf %71, %105 : vector<16x256xf32>
    %107 = arith.addf %103, %106 : vector<16x256xf32>
    %c0_22 = arith.constant 0 : index
    %c0_23 = arith.constant 0 : index
    %108 = vector.load %arg5[%c0_22, %c0_23] : memref<16x1xf32, #tpu.memory_space<vmem>>, vector<16x1xf32>
    %109 = vector.broadcast %108 : vector<16x1xf32> to vector<16x256xf32>
    %110 = arith.addf %107, %109 : vector<16x256xf32>
    %cst_24 = arith.constant 0.000000e+00 : f32
    %111 = vector.broadcast %cst_24 : f32 to vector<16x256xf32>
    %112 = arith.maximumf %110, %111 : vector<16x256xf32>
    %c0_25 = arith.constant 0 : index
    %c0_26 = arith.constant 0 : index
    %113 = vector.load %arg6[%c0_25, %c0_26] : memref<16x16xf32, #tpu.memory_space<vmem>>, vector<16x16xf32>
    %cst_27 = arith.constant dense<0.000000e+00> : vector<16x256xf32>
    %114 = tpu.matmul %113, %112, %cst_27 {dimension_numbers = #tpu.dot_dimension_numbers<[1], [0], [0], [1], [0, 0, 1, 1], [], []>} : vector<16x16xf32>, vector<16x256xf32>, vector<16x256xf32> -> vector<16x256xf32>
    %c0_28 = arith.constant 0 : index
    %c0_29 = arith.constant 0 : index
    %115 = vector.load %arg7[%c0_28, %c0_29] : memref<16x1xf32, #tpu.memory_space<vmem>>, vector<16x1xf32>
    %116 = vector.broadcast %115 : vector<16x1xf32> to vector<16x256xf32>
    %117 = arith.addf %114, %116 : vector<16x256xf32>
    %cst_30 = arith.constant 0.000000e+00 : f32
    %118 = vector.broadcast %cst_30 : f32 to vector<16x256xf32>
    %119 = arith.maximumf %117, %118 : vector<16x256xf32>
    %c0_31 = arith.constant 0 : index
    %c0_32 = arith.constant 0 : index
    %120 = vector.load %arg8[%c0_31, %c0_32] : memref<4x16xf32, #tpu.memory_space<vmem>>, vector<4x16xf32>
    %cst_33 = arith.constant dense<0.000000e+00> : vector<4x256xf32>
    %121 = tpu.matmul %120, %119, %cst_33 {dimension_numbers = #tpu.dot_dimension_numbers<[1], [0], [0], [1], [0, 0, 1, 1], [], []>} : vector<4x16xf32>, vector<16x256xf32>, vector<4x256xf32> -> vector<4x256xf32>
    %c0_34 = arith.constant 0 : index
    %c0_35 = arith.constant 0 : index
    %122 = vector.load %arg9[%c0_34, %c0_35] : memref<4x1xf32, #tpu.memory_space<vmem>>, vector<4x1xf32>
    %123 = vector.broadcast %122 : vector<4x1xf32> to vector<4x256xf32>
    %124 = arith.addf %121, %123 : vector<4x256xf32>
    %125 = arith.addf %124, %26 : vector<4x256xf32>
    %c0_36 = arith.constant 0 : index
    %c0_37 = arith.constant 0 : index
    %c0_38 = arith.constant 0 : index
    %126 = vector.load %arg10[%c0_36, %c0_37, %c0_38] : memref<9x8x4xf32, #tpu.memory_space<vmem>>, vector<9x8x4xf32>
    %cst_39 = arith.constant 0.000000e+00 : f32
    %127 = vector.broadcast %cst_39 : f32 to vector<4x17xf32>
    %128 = vector.extract_strided_slice %125 {offsets = [0, 0], sizes = [4, 239], strides = [1, 1]} : vector<4x256xf32> to vector<4x239xf32>
    %129 = tpu.concatenate %127, %128 in 1 : vector<4x17xf32>, vector<4x239xf32> -> vector<4x256xf32>
    %130 = vector.broadcast %20 : vector<1x256xf32> to vector<4x256xf32>
    %131 = arith.mulf %129, %130 : vector<4x256xf32>
    %cst_40 = arith.constant 0.000000e+00 : f32
    %132 = vector.broadcast %cst_40 : f32 to vector<4x16xf32>
    %133 = vector.extract_strided_slice %125 {offsets = [0, 0], sizes = [4, 240], strides = [1, 1]} : vector<4x256xf32> to vector<4x240xf32>
    %134 = tpu.concatenate %132, %133 in 1 : vector<4x16xf32>, vector<4x240xf32> -> vector<4x256xf32>
    %cst_41 = arith.constant 0.000000e+00 : f32
    %135 = vector.broadcast %cst_41 : f32 to vector<4x15xf32>
    %136 = vector.extract_strided_slice %125 {offsets = [0, 0], sizes = [4, 241], strides = [1, 1]} : vector<4x256xf32> to vector<4x241xf32>
    %137 = tpu.concatenate %135, %136 in 1 : vector<4x15xf32>, vector<4x241xf32> -> vector<4x256xf32>
    %138 = vector.broadcast %24 : vector<1x256xf32> to vector<4x256xf32>
    %139 = arith.mulf %137, %138 : vector<4x256xf32>
    %cst_42 = arith.constant 0.000000e+00 : f32
    %140 = vector.broadcast %cst_42 : f32 to vector<4x1xf32>
    %141 = vector.extract_strided_slice %125 {offsets = [0, 0], sizes = [4, 255], strides = [1, 1]} : vector<4x256xf32> to vector<4x255xf32>
    %142 = tpu.concatenate %140, %141 in 1 : vector<4x1xf32>, vector<4x255xf32> -> vector<4x256xf32>
    %143 = vector.broadcast %20 : vector<1x256xf32> to vector<4x256xf32>
    %144 = arith.mulf %142, %143 : vector<4x256xf32>
    %145 = vector.extract_strided_slice %125 {offsets = [0, 1], sizes = [4, 255], strides = [1, 1]} : vector<4x256xf32> to vector<4x255xf32>
    %cst_43 = arith.constant 0.000000e+00 : f32
    %146 = vector.broadcast %cst_43 : f32 to vector<4x1xf32>
    %147 = tpu.concatenate %145, %146 in 1 : vector<4x255xf32>, vector<4x1xf32> -> vector<4x256xf32>
    %148 = vector.broadcast %24 : vector<1x256xf32> to vector<4x256xf32>
    %149 = arith.mulf %147, %148 : vector<4x256xf32>
    %150 = vector.extract_strided_slice %125 {offsets = [0, 15], sizes = [4, 241], strides = [1, 1]} : vector<4x256xf32> to vector<4x241xf32>
    %cst_44 = arith.constant 0.000000e+00 : f32
    %151 = vector.broadcast %cst_44 : f32 to vector<4x15xf32>
    %152 = tpu.concatenate %150, %151 in 1 : vector<4x241xf32>, vector<4x15xf32> -> vector<4x256xf32>
    %153 = vector.broadcast %20 : vector<1x256xf32> to vector<4x256xf32>
    %154 = arith.mulf %152, %153 : vector<4x256xf32>
    %155 = vector.extract_strided_slice %125 {offsets = [0, 16], sizes = [4, 240], strides = [1, 1]} : vector<4x256xf32> to vector<4x240xf32>
    %cst_45 = arith.constant 0.000000e+00 : f32
    %156 = vector.broadcast %cst_45 : f32 to vector<4x16xf32>
    %157 = tpu.concatenate %155, %156 in 1 : vector<4x240xf32>, vector<4x16xf32> -> vector<4x256xf32>
    %158 = vector.extract_strided_slice %125 {offsets = [0, 17], sizes = [4, 239], strides = [1, 1]} : vector<4x256xf32> to vector<4x239xf32>
    %cst_46 = arith.constant 0.000000e+00 : f32
    %159 = vector.broadcast %cst_46 : f32 to vector<4x17xf32>
    %160 = tpu.concatenate %158, %159 in 1 : vector<4x239xf32>, vector<4x17xf32> -> vector<4x256xf32>
    %161 = vector.broadcast %24 : vector<1x256xf32> to vector<4x256xf32>
    %162 = arith.mulf %160, %161 : vector<4x256xf32>
    %163 = vector.extract_strided_slice %126 {offsets = [0, 0, 0], sizes = [1, 8, 4], strides = [1, 1, 1]} : vector<9x8x4xf32> to vector<1x8x4xf32>
    %164 = vector.shape_cast %163 : vector<1x8x4xf32> to vector<8x4xf32>
    %cst_47 = arith.constant dense<0.000000e+00> : vector<8x256xf32>
    %165 = tpu.matmul %164, %131, %cst_47 {dimension_numbers = #tpu.dot_dimension_numbers<[1], [0], [0], [1], [0, 0, 1, 1], [], []>} : vector<8x4xf32>, vector<4x256xf32>, vector<8x256xf32> -> vector<8x256xf32>
    %166 = vector.extract_strided_slice %126 {offsets = [1, 0, 0], sizes = [1, 8, 4], strides = [1, 1, 1]} : vector<9x8x4xf32> to vector<1x8x4xf32>
    %167 = vector.shape_cast %166 : vector<1x8x4xf32> to vector<8x4xf32>
    %cst_48 = arith.constant dense<0.000000e+00> : vector<8x256xf32>
    %168 = tpu.matmul %167, %134, %cst_48 {dimension_numbers = #tpu.dot_dimension_numbers<[1], [0], [0], [1], [0, 0, 1, 1], [], []>} : vector<8x4xf32>, vector<4x256xf32>, vector<8x256xf32> -> vector<8x256xf32>
    %169 = arith.addf %165, %168 : vector<8x256xf32>
    %170 = vector.extract_strided_slice %126 {offsets = [2, 0, 0], sizes = [1, 8, 4], strides = [1, 1, 1]} : vector<9x8x4xf32> to vector<1x8x4xf32>
    %171 = vector.shape_cast %170 : vector<1x8x4xf32> to vector<8x4xf32>
    %cst_49 = arith.constant dense<0.000000e+00> : vector<8x256xf32>
    %172 = tpu.matmul %171, %139, %cst_49 {dimension_numbers = #tpu.dot_dimension_numbers<[1], [0], [0], [1], [0, 0, 1, 1], [], []>} : vector<8x4xf32>, vector<4x256xf32>, vector<8x256xf32> -> vector<8x256xf32>
    %173 = arith.addf %169, %172 : vector<8x256xf32>
    %174 = vector.extract_strided_slice %126 {offsets = [3, 0, 0], sizes = [1, 8, 4], strides = [1, 1, 1]} : vector<9x8x4xf32> to vector<1x8x4xf32>
    %175 = vector.shape_cast %174 : vector<1x8x4xf32> to vector<8x4xf32>
    %cst_50 = arith.constant dense<0.000000e+00> : vector<8x256xf32>
    %176 = tpu.matmul %175, %144, %cst_50 {dimension_numbers = #tpu.dot_dimension_numbers<[1], [0], [0], [1], [0, 0, 1, 1], [], []>} : vector<8x4xf32>, vector<4x256xf32>, vector<8x256xf32> -> vector<8x256xf32>
    %177 = arith.addf %173, %176 : vector<8x256xf32>
    %178 = vector.extract_strided_slice %126 {offsets = [4, 0, 0], sizes = [1, 8, 4], strides = [1, 1, 1]} : vector<9x8x4xf32> to vector<1x8x4xf32>
    %179 = vector.shape_cast %178 : vector<1x8x4xf32> to vector<8x4xf32>
    %cst_51 = arith.constant dense<0.000000e+00> : vector<8x256xf32>
    %180 = tpu.matmul %179, %125, %cst_51 {dimension_numbers = #tpu.dot_dimension_numbers<[1], [0], [0], [1], [0, 0, 1, 1], [], []>} : vector<8x4xf32>, vector<4x256xf32>, vector<8x256xf32> -> vector<8x256xf32>
    %181 = arith.addf %177, %180 : vector<8x256xf32>
    %182 = vector.extract_strided_slice %126 {offsets = [5, 0, 0], sizes = [1, 8, 4], strides = [1, 1, 1]} : vector<9x8x4xf32> to vector<1x8x4xf32>
    %183 = vector.shape_cast %182 : vector<1x8x4xf32> to vector<8x4xf32>
    %cst_52 = arith.constant dense<0.000000e+00> : vector<8x256xf32>
    %184 = tpu.matmul %183, %149, %cst_52 {dimension_numbers = #tpu.dot_dimension_numbers<[1], [0], [0], [1], [0, 0, 1, 1], [], []>} : vector<8x4xf32>, vector<4x256xf32>, vector<8x256xf32> -> vector<8x256xf32>
    %185 = arith.addf %181, %184 : vector<8x256xf32>
    %186 = vector.extract_strided_slice %126 {offsets = [6, 0, 0], sizes = [1, 8, 4], strides = [1, 1, 1]} : vector<9x8x4xf32> to vector<1x8x4xf32>
    %187 = vector.shape_cast %186 : vector<1x8x4xf32> to vector<8x4xf32>
    %cst_53 = arith.constant dense<0.000000e+00> : vector<8x256xf32>
    %188 = tpu.matmul %187, %154, %cst_53 {dimension_numbers = #tpu.dot_dimension_numbers<[1], [0], [0], [1], [0, 0, 1, 1], [], []>} : vector<8x4xf32>, vector<4x256xf32>, vector<8x256xf32> -> vector<8x256xf32>
    %189 = arith.addf %185, %188 : vector<8x256xf32>
    %190 = vector.extract_strided_slice %126 {offsets = [7, 0, 0], sizes = [1, 8, 4], strides = [1, 1, 1]} : vector<9x8x4xf32> to vector<1x8x4xf32>
    %191 = vector.shape_cast %190 : vector<1x8x4xf32> to vector<8x4xf32>
    %cst_54 = arith.constant dense<0.000000e+00> : vector<8x256xf32>
    %192 = tpu.matmul %191, %157, %cst_54 {dimension_numbers = #tpu.dot_dimension_numbers<[1], [0], [0], [1], [0, 0, 1, 1], [], []>} : vector<8x4xf32>, vector<4x256xf32>, vector<8x256xf32> -> vector<8x256xf32>
    %193 = arith.addf %189, %192 : vector<8x256xf32>
    %194 = vector.extract_strided_slice %126 {offsets = [8, 0, 0], sizes = [1, 8, 4], strides = [1, 1, 1]} : vector<9x8x4xf32> to vector<1x8x4xf32>
    %195 = vector.shape_cast %194 : vector<1x8x4xf32> to vector<8x4xf32>
    %cst_55 = arith.constant dense<0.000000e+00> : vector<8x256xf32>
    %196 = tpu.matmul %195, %162, %cst_55 {dimension_numbers = #tpu.dot_dimension_numbers<[1], [0], [0], [1], [0, 0, 1, 1], [], []>} : vector<8x4xf32>, vector<4x256xf32>, vector<8x256xf32> -> vector<8x256xf32>
    %197 = arith.addf %193, %196 : vector<8x256xf32>
    %c0_56 = arith.constant 0 : index
    %c0_57 = arith.constant 0 : index
    %198 = vector.load %arg11[%c0_56, %c0_57] : memref<8x1xf32, #tpu.memory_space<vmem>>, vector<8x1xf32>
    %199 = vector.broadcast %198 : vector<8x1xf32> to vector<8x256xf32>
    %200 = arith.addf %197, %199 : vector<8x256xf32>
    %cst_58 = arith.constant 0.000000e+00 : f32
    %201 = vector.broadcast %cst_58 : f32 to vector<8x256xf32>
    %202 = arith.maximumf %200, %201 : vector<8x256xf32>
    %c0_59 = arith.constant 0 : index
    %c0_60 = arith.constant 0 : index
    %203 = vector.load %arg12[%c0_59, %c0_60] : memref<32x8xf32, #tpu.memory_space<vmem>>, vector<32x8xf32>
    %cst_61 = arith.constant dense<0.000000e+00> : vector<32x256xf32>
    %204 = tpu.matmul %203, %202, %cst_61 {dimension_numbers = #tpu.dot_dimension_numbers<[1], [0], [0], [1], [0, 0, 1, 1], [], []>} : vector<32x8xf32>, vector<8x256xf32>, vector<32x256xf32> -> vector<32x256xf32>
    %c0_62 = arith.constant 0 : index
    %c0_63 = arith.constant 0 : index
    %205 = vector.load %arg13[%c0_62, %c0_63] : memref<32x1xf32, #tpu.memory_space<vmem>>, vector<32x1xf32>
    %206 = vector.broadcast %205 : vector<32x1xf32> to vector<32x256xf32>
    %207 = arith.addf %204, %206 : vector<32x256xf32>
    %cst_64 = arith.constant 0.000000e+00 : f32
    %208 = vector.broadcast %cst_64 : f32 to vector<32x256xf32>
    %209 = arith.maximumf %207, %208 : vector<32x256xf32>
    %c0_65 = arith.constant 0 : index
    %c0_66 = arith.constant 0 : index
    %210 = vector.load %arg14[%c0_65, %c0_66] : memref<32x9xf32, #tpu.memory_space<vmem>>, vector<32x9xf32>
    %cst_67 = arith.constant 0.000000e+00 : f32
    %211 = vector.broadcast %cst_67 : f32 to vector<32x256xf32>
    %cst_68 = arith.constant 0.000000e+00 : f32
    %212 = vector.broadcast %cst_68 : f32 to vector<32x17xf32>
    %213 = vector.extract_strided_slice %209 {offsets = [0, 0], sizes = [32, 239], strides = [1, 1]} : vector<32x256xf32> to vector<32x239xf32>
    %214 = tpu.concatenate %212, %213 in 1 : vector<32x17xf32>, vector<32x239xf32> -> vector<32x256xf32>
    %215 = vector.broadcast %20 : vector<1x256xf32> to vector<32x256xf32>
    %216 = arith.mulf %214, %215 : vector<32x256xf32>
    %cst_69 = arith.constant 0.000000e+00 : f32
    %217 = vector.broadcast %cst_69 : f32 to vector<32x16xf32>
    %218 = vector.extract_strided_slice %209 {offsets = [0, 0], sizes = [32, 240], strides = [1, 1]} : vector<32x256xf32> to vector<32x240xf32>
    %219 = tpu.concatenate %217, %218 in 1 : vector<32x16xf32>, vector<32x240xf32> -> vector<32x256xf32>
    %cst_70 = arith.constant 0.000000e+00 : f32
    %220 = vector.broadcast %cst_70 : f32 to vector<32x15xf32>
    %221 = vector.extract_strided_slice %209 {offsets = [0, 0], sizes = [32, 241], strides = [1, 1]} : vector<32x256xf32> to vector<32x241xf32>
    %222 = tpu.concatenate %220, %221 in 1 : vector<32x15xf32>, vector<32x241xf32> -> vector<32x256xf32>
    %223 = vector.broadcast %24 : vector<1x256xf32> to vector<32x256xf32>
    %224 = arith.mulf %222, %223 : vector<32x256xf32>
    %cst_71 = arith.constant 0.000000e+00 : f32
    %225 = vector.broadcast %cst_71 : f32 to vector<32x1xf32>
    %226 = vector.extract_strided_slice %209 {offsets = [0, 0], sizes = [32, 255], strides = [1, 1]} : vector<32x256xf32> to vector<32x255xf32>
    %227 = tpu.concatenate %225, %226 in 1 : vector<32x1xf32>, vector<32x255xf32> -> vector<32x256xf32>
    %228 = vector.broadcast %20 : vector<1x256xf32> to vector<32x256xf32>
    %229 = arith.mulf %227, %228 : vector<32x256xf32>
    %230 = vector.extract_strided_slice %209 {offsets = [0, 1], sizes = [32, 255], strides = [1, 1]} : vector<32x256xf32> to vector<32x255xf32>
    %cst_72 = arith.constant 0.000000e+00 : f32
    %231 = vector.broadcast %cst_72 : f32 to vector<32x1xf32>
    %232 = tpu.concatenate %230, %231 in 1 : vector<32x255xf32>, vector<32x1xf32> -> vector<32x256xf32>
    %233 = vector.broadcast %24 : vector<1x256xf32> to vector<32x256xf32>
    %234 = arith.mulf %232, %233 : vector<32x256xf32>
    %235 = vector.extract_strided_slice %209 {offsets = [0, 15], sizes = [32, 241], strides = [1, 1]} : vector<32x256xf32> to vector<32x241xf32>
    %cst_73 = arith.constant 0.000000e+00 : f32
    %236 = vector.broadcast %cst_73 : f32 to vector<32x15xf32>
    %237 = tpu.concatenate %235, %236 in 1 : vector<32x241xf32>, vector<32x15xf32> -> vector<32x256xf32>
    %238 = vector.broadcast %20 : vector<1x256xf32> to vector<32x256xf32>
    %239 = arith.mulf %237, %238 : vector<32x256xf32>
    %240 = vector.extract_strided_slice %209 {offsets = [0, 16], sizes = [32, 240], strides = [1, 1]} : vector<32x256xf32> to vector<32x240xf32>
    %cst_74 = arith.constant 0.000000e+00 : f32
    %241 = vector.broadcast %cst_74 : f32 to vector<32x16xf32>
    %242 = tpu.concatenate %240, %241 in 1 : vector<32x240xf32>, vector<32x16xf32> -> vector<32x256xf32>
    %243 = vector.extract_strided_slice %209 {offsets = [0, 17], sizes = [32, 239], strides = [1, 1]} : vector<32x256xf32> to vector<32x239xf32>
    %cst_75 = arith.constant 0.000000e+00 : f32
    %244 = vector.broadcast %cst_75 : f32 to vector<32x17xf32>
    %245 = tpu.concatenate %243, %244 in 1 : vector<32x239xf32>, vector<32x17xf32> -> vector<32x256xf32>
    %246 = vector.broadcast %24 : vector<1x256xf32> to vector<32x256xf32>
    %247 = arith.mulf %245, %246 : vector<32x256xf32>
    %248 = vector.extract_strided_slice %210 {offsets = [0, 0], sizes = [32, 1], strides = [1, 1]} : vector<32x9xf32> to vector<32x1xf32>
    %249 = vector.broadcast %248 : vector<32x1xf32> to vector<32x256xf32>
    %250 = arith.mulf %216, %249 : vector<32x256xf32>
    %251 = arith.addf %211, %250 : vector<32x256xf32>
    %252 = vector.extract_strided_slice %210 {offsets = [0, 1], sizes = [32, 1], strides = [1, 1]} : vector<32x9xf32> to vector<32x1xf32>
    %253 = vector.broadcast %252 : vector<32x1xf32> to vector<32x256xf32>
    %254 = arith.mulf %219, %253 : vector<32x256xf32>
    %255 = arith.addf %251, %254 : vector<32x256xf32>
    %256 = vector.extract_strided_slice %210 {offsets = [0, 2], sizes = [32, 1], strides = [1, 1]} : vector<32x9xf32> to vector<32x1xf32>
    %257 = vector.broadcast %256 : vector<32x1xf32> to vector<32x256xf32>
    %258 = arith.mulf %224, %257 : vector<32x256xf32>
    %259 = arith.addf %255, %258 : vector<32x256xf32>
    %260 = vector.extract_strided_slice %210 {offsets = [0, 3], sizes = [32, 1], strides = [1, 1]} : vector<32x9xf32> to vector<32x1xf32>
    %261 = vector.broadcast %260 : vector<32x1xf32> to vector<32x256xf32>
    %262 = arith.mulf %229, %261 : vector<32x256xf32>
    %263 = arith.addf %259, %262 : vector<32x256xf32>
    %264 = vector.extract_strided_slice %210 {offsets = [0, 4], sizes = [32, 1], strides = [1, 1]} : vector<32x9xf32> to vector<32x1xf32>
    %265 = vector.broadcast %264 : vector<32x1xf32> to vector<32x256xf32>
    %266 = arith.mulf %209, %265 : vector<32x256xf32>
    %267 = arith.addf %263, %266 : vector<32x256xf32>
    %268 = vector.extract_strided_slice %210 {offsets = [0, 5], sizes = [32, 1], strides = [1, 1]} : vector<32x9xf32> to vector<32x1xf32>
    %269 = vector.broadcast %268 : vector<32x1xf32> to vector<32x256xf32>
    %270 = arith.mulf %234, %269 : vector<32x256xf32>
    %271 = arith.addf %267, %270 : vector<32x256xf32>
    %272 = vector.extract_strided_slice %210 {offsets = [0, 6], sizes = [32, 1], strides = [1, 1]} : vector<32x9xf32> to vector<32x1xf32>
    %273 = vector.broadcast %272 : vector<32x1xf32> to vector<32x256xf32>
    %274 = arith.mulf %239, %273 : vector<32x256xf32>
    %275 = arith.addf %271, %274 : vector<32x256xf32>
    %276 = vector.extract_strided_slice %210 {offsets = [0, 7], sizes = [32, 1], strides = [1, 1]} : vector<32x9xf32> to vector<32x1xf32>
    %277 = vector.broadcast %276 : vector<32x1xf32> to vector<32x256xf32>
    %278 = arith.mulf %242, %277 : vector<32x256xf32>
    %279 = arith.addf %275, %278 : vector<32x256xf32>
    %280 = vector.extract_strided_slice %210 {offsets = [0, 8], sizes = [32, 1], strides = [1, 1]} : vector<32x9xf32> to vector<32x1xf32>
    %281 = vector.broadcast %280 : vector<32x1xf32> to vector<32x256xf32>
    %282 = arith.mulf %247, %281 : vector<32x256xf32>
    %283 = arith.addf %279, %282 : vector<32x256xf32>
    %c0_76 = arith.constant 0 : index
    %c0_77 = arith.constant 0 : index
    %284 = vector.load %arg15[%c0_76, %c0_77] : memref<32x1xf32, #tpu.memory_space<vmem>>, vector<32x1xf32>
    %285 = vector.broadcast %284 : vector<32x1xf32> to vector<32x256xf32>
    %286 = arith.addf %283, %285 : vector<32x256xf32>
    %cst_78 = arith.constant 0.000000e+00 : f32
    %287 = vector.broadcast %cst_78 : f32 to vector<32x256xf32>
    %288 = arith.maximumf %286, %287 : vector<32x256xf32>
    %c0_79 = arith.constant 0 : index
    %c0_80 = arith.constant 0 : index
    %289 = vector.load %arg16[%c0_79, %c0_80] : memref<32x32xf32, #tpu.memory_space<vmem>>, vector<32x32xf32>
    %cst_81 = arith.constant dense<0.000000e+00> : vector<32x256xf32>
    %290 = tpu.matmul %289, %288, %cst_81 {dimension_numbers = #tpu.dot_dimension_numbers<[1], [0], [0], [1], [0, 0, 1, 1], [], []>} : vector<32x32xf32>, vector<32x256xf32>, vector<32x256xf32> -> vector<32x256xf32>
    %c0_82 = arith.constant 0 : index
    %c0_83 = arith.constant 0 : index
    %291 = vector.load %arg17[%c0_82, %c0_83] : memref<32x1xf32, #tpu.memory_space<vmem>>, vector<32x1xf32>
    %292 = vector.broadcast %291 : vector<32x1xf32> to vector<32x256xf32>
    %293 = arith.addf %290, %292 : vector<32x256xf32>
    %cst_84 = arith.constant 0.000000e+00 : f32
    %294 = vector.broadcast %cst_84 : f32 to vector<32x256xf32>
    %295 = arith.maximumf %293, %294 : vector<32x256xf32>
    %c0_85 = arith.constant 0 : index
    %c0_86 = arith.constant 0 : index
    %296 = vector.load %arg18[%c0_85, %c0_86] : memref<8x32xf32, #tpu.memory_space<vmem>>, vector<8x32xf32>
    %cst_87 = arith.constant dense<0.000000e+00> : vector<8x256xf32>
    %297 = tpu.matmul %296, %295, %cst_87 {dimension_numbers = #tpu.dot_dimension_numbers<[1], [0], [0], [1], [0, 0, 1, 1], [], []>} : vector<8x32xf32>, vector<32x256xf32>, vector<8x256xf32> -> vector<8x256xf32>
    %c0_88 = arith.constant 0 : index
    %c0_89 = arith.constant 0 : index
    %298 = vector.load %arg19[%c0_88, %c0_89] : memref<8x1xf32, #tpu.memory_space<vmem>>, vector<8x1xf32>
    %299 = vector.broadcast %298 : vector<8x1xf32> to vector<8x256xf32>
    %300 = arith.addf %297, %299 : vector<8x256xf32>
    %301 = arith.addf %300, %202 : vector<8x256xf32>
    %c0_90 = arith.constant 0 : index
    %c0_91 = arith.constant 0 : index
    %302 = vector.load %arg20[%c0_90, %c0_91] : memref<8x4xf32, #tpu.memory_space<vmem>>, vector<8x4xf32>
    %cst_92 = arith.constant dense<0.000000e+00> : vector<8x256xf32>
    %303 = tpu.matmul %302, %26, %cst_92 {dimension_numbers = #tpu.dot_dimension_numbers<[1], [0], [0], [1], [0, 0, 1, 1], [], []>} : vector<8x4xf32>, vector<4x256xf32>, vector<8x256xf32> -> vector<8x256xf32>
    %304 = arith.addf %301, %303 : vector<8x256xf32>
    %c0_93 = arith.constant 0 : index
    %c0_94 = arith.constant 0 : index
    %c0_95 = arith.constant 0 : index
    %305 = vector.load %arg21[%c0_93, %c0_94, %c0_95] : memref<1x8x256xf32, #tpu.memory_space<vmem>>, vector<1x8x256xf32>
    %306 = vector.shape_cast %305 : vector<1x8x256xf32> to vector<8x256xf32>
    %307 = vector.shape_cast %304 : vector<8x256xf32> to vector<1x8x256xf32>
    tpu.vector_store %arg21[%c0_93, %c0_94, %c0_95], %307 {strides = array<i32>} : memref<1x8x256xf32, #tpu.memory_space<vmem>>, vector<1x8x256xf32>,
    return
  }
  func.func @transform_0(%arg0: i32) -> (i32, i32, i32) {
    %c0_i32 = arith.constant 0 : i32
    %c0_i32_0 = arith.constant 0 : i32
    %c0_i32_1 = arith.constant 0 : i32
    return %arg0, %c0_i32, %c0_i32_0 : i32, i32, i32
  }
  func.func @transform_1(%arg0: i32) -> (i32, i32) {
    %c0_i32 = arith.constant 0 : i32
    %c0_i32_0 = arith.constant 0 : i32
    %c0_i32_1 = arith.constant 0 : i32
    return %c0_i32, %c0_i32_0 : i32, i32
  }
  func.func @transform_2(%arg0: i32) -> (i32, i32) {
    %c0_i32 = arith.constant 0 : i32
    %c0_i32_0 = arith.constant 0 : i32
    %c0_i32_1 = arith.constant 0 : i32
    return %c0_i32, %c0_i32_0 : i32, i32
  }
  func.func @transform_3(%arg0: i32) -> (i32, i32) {
    %c0_i32 = arith.constant 0 : i32
    %c0_i32_0 = arith.constant 0 : i32
    %c0_i32_1 = arith.constant 0 : i32
    return %c0_i32, %c0_i32_0 : i32, i32
  }
  func.func @transform_4(%arg0: i32) -> (i32, i32) {
    %c0_i32 = arith.constant 0 : i32
    %c0_i32_0 = arith.constant 0 : i32
    %c0_i32_1 = arith.constant 0 : i32
    return %c0_i32, %c0_i32_0 : i32, i32
  }
  func.func @transform_5(%arg0: i32) -> (i32, i32) {
    %c0_i32 = arith.constant 0 : i32
    %c0_i32_0 = arith.constant 0 : i32
    %c0_i32_1 = arith.constant 0 : i32
    return %c0_i32, %c0_i32_0 : i32, i32
  }
  func.func @transform_6(%arg0: i32) -> (i32, i32) {
    %c0_i32 = arith.constant 0 : i32
    %c0_i32_0 = arith.constant 0 : i32
    %c0_i32_1 = arith.constant 0 : i32
    return %c0_i32, %c0_i32_0 : i32, i32
  }
  func.func @transform_7(%arg0: i32) -> (i32, i32) {
    %c0_i32 = arith.constant 0 : i32
    %c0_i32_0 = arith.constant 0 : i32
    %c0_i32_1 = arith.constant 0 : i32
    return %c0_i32, %c0_i32_0 : i32, i32
  }
  func.func @transform_8(%arg0: i32) -> (i32, i32) {
    %c0_i32 = arith.constant 0 : i32
    %c0_i32_0 = arith.constant 0 : i32
    %c0_i32_1 = arith.constant 0 : i32
    return %c0_i32, %c0_i32_0 : i32, i32
  }
  func.func @transform_9(%arg0: i32) -> (i32, i32, i32) {
    %c0_i32 = arith.constant 0 : i32
    %c0_i32_0 = arith.constant 0 : i32
    %c0_i32_1 = arith.constant 0 : i32
    %c0_i32_2 = arith.constant 0 : i32
    return %c0_i32, %c0_i32_0, %c0_i32_1 : i32, i32, i32
  }
  func.func @transform_10(%arg0: i32) -> (i32, i32) {
    %c0_i32 = arith.constant 0 : i32
    %c0_i32_0 = arith.constant 0 : i32
    %c0_i32_1 = arith.constant 0 : i32
    return %c0_i32, %c0_i32_0 : i32, i32
  }
  func.func @transform_11(%arg0: i32) -> (i32, i32) {
    %c0_i32 = arith.constant 0 : i32
    %c0_i32_0 = arith.constant 0 : i32
    %c0_i32_1 = arith.constant 0 : i32
    return %c0_i32, %c0_i32_0 : i32, i32
  }
  func.func @transform_12(%arg0: i32) -> (i32, i32) {
    %c0_i32 = arith.constant 0 : i32
    %c0_i32_0 = arith.constant 0 : i32
    %c0_i32_1 = arith.constant 0 : i32
    return %c0_i32, %c0_i32_0 : i32, i32
  }
  func.func @transform_13(%arg0: i32) -> (i32, i32) {
    %c0_i32 = arith.constant 0 : i32
    %c0_i32_0 = arith.constant 0 : i32
    %c0_i32_1 = arith.constant 0 : i32
    return %c0_i32, %c0_i32_0 : i32, i32
  }
  func.func @transform_14(%arg0: i32) -> (i32, i32) {
    %c0_i32 = arith.constant 0 : i32
    %c0_i32_0 = arith.constant 0 : i32
    %c0_i32_1 = arith.constant 0 : i32
    return %c0_i32, %c0_i32_0 : i32, i32
  }
  func.func @transform_15(%arg0: i32) -> (i32, i32) {
    %c0_i32 = arith.constant 0 : i32
    %c0_i32_0 = arith.constant 0 : i32
    %c0_i32_1 = arith.constant 0 : i32
    return %c0_i32, %c0_i32_0 : i32, i32
  }
  func.func @transform_16(%arg0: i32) -> (i32, i32) {
    %c0_i32 = arith.constant 0 : i32
    %c0_i32_0 = arith.constant 0 : i32
    %c0_i32_1 = arith.constant 0 : i32
    return %c0_i32, %c0_i32_0 : i32, i32
  }
  func.func @transform_17(%arg0: i32) -> (i32, i32) {
    %c0_i32 = arith.constant 0 : i32
    %c0_i32_0 = arith.constant 0 : i32
    %c0_i32_1 = arith.constant 0 : i32
    return %c0_i32, %c0_i32_0 : i32, i32
  }
  func.func @transform_18(%arg0: i32) -> (i32, i32) {
    %c0_i32 = arith.constant 0 : i32
    %c0_i32_0 = arith.constant 0 : i32
    %c0_i32_1 = arith.constant 0 : i32
    return %c0_i32, %c0_i32_0 : i32, i32
  }
  func.func @transform_19(%arg0: i32) -> (i32, i32) {
    %c0_i32 = arith.constant 0 : i32
    %c0_i32_0 = arith.constant 0 : i32
    %c0_i32_1 = arith.constant 0 : i32
    return %c0_i32, %c0_i32_0 : i32, i32
  }
  func.func @transform_20(%arg0: i32) -> (i32, i32, i32) {
    %c0_i32 = arith.constant 0 : i32
    %c0_i32_0 = arith.constant 0 : i32
    %c0_i32_1 = arith.constant 0 : i32
    return %arg0, %c0_i32, %c0_i32_0 : i32, i32, i32
  }
}

</mosaic_0001>

<llo_original>
// kernel: block_forward.1
$region0: #{block_forward.1}
  #allocation0 [shape = 'u32[]', space=smem, size = 0x4, offset = 0x4, fixed_abs, tag = 'smem constant byte address 0x4 - core index']
  #allocation1 [shape = 'u32[144,128]{1,0:T(1,128)}', space=vmem, size = 0x12000, scoped, tag = 'internal scratch']
  %s0 = inlined_call_operand.vmem [shape: f32[2,4,256], index: 0, kind: input, shape index: {}]
  %s1 = inlined_call_operand.vmem [shape: f32[16,4], index: 1, kind: input, shape index: {}]
  %s2 = inlined_call_operand.vmem [shape: f32[16,1], index: 2, kind: input, shape index: {}]
  %s3 = inlined_call_operand.vmem [shape: f32[16,9], index: 3, kind: input, shape index: {}]
  %s4 = inlined_call_operand.vmem [shape: f32[16,1], index: 4, kind: input, shape index: {}]
  %s5 = inlined_call_operand.vmem [shape: f32[16,16], index: 5, kind: input, shape index: {}]
  %s6 = inlined_call_operand.vmem [shape: f32[16,1], index: 6, kind: input, shape index: {}]
  %s7 = inlined_call_operand.vmem [shape: f32[4,16], index: 7, kind: input, shape index: {}]
  %s8 = inlined_call_operand.vmem [shape: f32[4,1], index: 8, kind: input, shape index: {}]
  %s9 = inlined_call_operand.vmem [shape: f32[9,8,4], index: 9, kind: input, shape index: {}]
  %s10 = inlined_call_operand.vmem [shape: f32[8,1], index: 10, kind: input, shape index: {}]
  %s11 = inlined_call_operand.vmem [shape: f32[32,8], index: 11, kind: input, shape index: {}]
  %s12 = inlined_call_operand.vmem [shape: f32[32,1], index: 12, kind: input, shape index: {}]
  %s13 = inlined_call_operand.vmem [shape: f32[32,9], index: 13, kind: input, shape index: {}]
  %s14 = inlined_call_operand.vmem [shape: f32[32,1], index: 14, kind: input, shape index: {}]
  %s15 = inlined_call_operand.vmem [shape: f32[32,32], index: 15, kind: input, shape index: {}]
  %s16 = inlined_call_operand.vmem [shape: f32[32,1], index: 16, kind: input, shape index: {}]
  %s17 = inlined_call_operand.vmem [shape: f32[8,32], index: 17, kind: input, shape index: {}]
  %s18 = inlined_call_operand.vmem [shape: f32[8,1], index: 18, kind: input, shape index: {}]
  %s19 = inlined_call_operand.vmem [shape: f32[8,4], index: 19, kind: input, shape index: {}]
  %s20 = inlined_call_operand.vmem [shape: f32[2,8,256], index: 20, kind: output, shape index: {}]
  %s21 = sld [smem:[#allocation0]]
  $region113: #{block_forward.1} parent=0
    _
  %s23 = ssub.s32 1, %s21
  %s24 = scalar_select 0, %s23, %s21
  loop: start=0, step=1, limit=4
  $region2: #{block_forward.1} parent=0 // loop_pre_header
    _
  $region3: #{block_forward.1} parent=0 // loop_header
    %s26 = sphi 0, %s30
    %p27 = scmp.ge.s32.totalorder %s26, 4
    %s36 = sphi 0, %s38
    %s39 = sphi 0, %s36
    %s40 = sphi 0, %s39
    %s56 = sphi 0, %s40
    %s60 = sphi 0, %s60
    %s62 = sphi 0, %s60
    %s63 = sphi 0, %s62
    %s77 = sphi 0, %s63
    %s81 = sphi 0, %s81
    %s83 = sphi 0, %s81
    %s84 = sphi 0, %s83
    %s98 = sphi 0, %s84
    %s102 = sphi 0, %s102
    %s104 = sphi 0, %s102
    %s105 = sphi 0, %s104
    %s119 = sphi 0, %s105
    %s123 = sphi 0, %s123
    %s125 = sphi 0, %s123
    %s126 = sphi 0, %s125
    %s140 = sphi 0, %s126
    %s144 = sphi 0, %s144
    %s146 = sphi 0, %s144
    %s147 = sphi 0, %s146
    %s161 = sphi 0, %s147
    %s165 = sphi 0, %s165
    %s167 = sphi 0, %s165
    %s168 = sphi 0, %s167
    %s182 = sphi 0, %s168
    %s186 = sphi 0, %s186
    %s188 = sphi 0, %s186
    %s189 = sphi 0, %s188
    %s203 = sphi 0, %s189
    %s207 = sphi 0, %s207
    %s209 = sphi 0, %s207
    %s210 = sphi 0, %s209
    %s224 = sphi 0, %s210
    %s228 = sphi 0, %s228
    %s230 = sphi 0, %s228
    %s231 = sphi 0, %s230
    %s245 = sphi 0, %s231
    %s249 = sphi 0, %s249
    %s251 = sphi 0, %s249
    %s252 = sphi 0, %s251
    %s266 = sphi 0, %s252
    %s270 = sphi 0, %s270
    %s272 = sphi 0, %s270
    %s273 = sphi 0, %s272
    %s287 = sphi 0, %s273
    %s291 = sphi 0, %s291
    %s293 = sphi 0, %s291
    %s294 = sphi 0, %s293
    %s308 = sphi 0, %s294
    %s312 = sphi 0, %s312
    %s314 = sphi 0, %s312
    %s315 = sphi 0, %s314
    %s329 = sphi 0, %s315
    %s333 = sphi 0, %s333
    %s335 = sphi 0, %s333
    %s336 = sphi 0, %s335
    %s350 = sphi 0, %s336
    %s354 = sphi 0, %s354
    %s356 = sphi 0, %s354
    %s357 = sphi 0, %s356
    %s371 = sphi 0, %s357
    %s375 = sphi 0, %s375
    %s377 = sphi 0, %s375
    %s378 = sphi 0, %s377
    %s392 = sphi 0, %s378
    %s396 = sphi 0, %s396
    %s398 = sphi 0, %s396
    %s399 = sphi 0, %s398
    %s413 = sphi 0, %s399
    %s417 = sphi 0, %s417
    %s419 = sphi 0, %s417
    %s420 = sphi 0, %s419
    %s434 = sphi 0, %s420
    %s438 = sphi 0, %s438
    %s440 = sphi 0, %s438
    %s441 = sphi 0, %s440
    %s455 = sphi 0, %s441
    %s461 = sphi 0, %s463
    %s464 = sphi 0, %s461
    %s465 = sphi 0, %s464
    %s481 = sphi 0, %s465
  $region4: #{block_forward.1} parent=0 // loop_header_branch
    %29 = sbr.rel (%p27) target = $region8
  $region5: #{block_forward.1} parent=0 // loop_body
    %s31 = ssub.s32 %s26, 1
    %s32 = ssub.s32 %s26, 2
    %s33 = sadd.s32 %s26, 1
    %s34 = ssub.s32 %s26, %s33
    %p35 = scmp.eq.s32.totalorder %s34, 0
    %s37 = sadd.s32 %s36, 1
    %s38 = scalar_select %p35, %s36, %s37
    %p41 = pneg %p35
    %p42 = scmp.eq.s32.totalorder %s26, 1
    %p43 = por %p41, %p42
    %p44 = scmp.ne.s32.totalorder %s36, %s39
    %p45 = scmp.eq.s32.totalorder %s26, 0
    %p46 = por %p44, %p45
    %p47 = scmp.ne.s32.totalorder %s36, %s39
    %p48 = scmp.eq.s32.totalorder %s31, 1
    %p49 = por %p47, %p48
    %p50 = scmp.ne.s32.totalorder %s39, %s40
    %p51 = scmp.eq.s32.totalorder %s31, 0
    %p52 = por %p50, %p51
    %p53 = scmp.ne.s32.totalorder %s39, %s40
    %p54 = scmp.eq.s32.totalorder %s32, 1
    %p55 = por %p53, %p54
    %p57 = scmp.ne.s32.totalorder %s40, %s56
    %p58 = scmp.eq.s32.totalorder %s32, 0
    %p59 = por %p57, %p58
    %s61 = sadd.s32 %s60, 1
    %p64 = scmp.eq.s32.totalorder %s26, 1
    %p65 = scmp.ne.s32.totalorder %s60, %s62
    %p66 = scmp.eq.s32.totalorder %s26, 0
    %p67 = por %p65, %p66
    %p68 = scmp.ne.s32.totalorder %s60, %s62
    %p69 = scmp.eq.s32.totalorder %s31, 1
    %p70 = por %p68, %p69
    %p71 = scmp.ne.s32.totalorder %s62, %s63
    %p72 = scmp.eq.s32.totalorder %s31, 0
    %p73 = por %p71, %p72
    %p74 = scmp.ne.s32.totalorder %s62, %s63
    %p75 = scmp.eq.s32.totalorder %s32, 1
    %p76 = por %p74, %p75
    %p78 = scmp.ne.s32.totalorder %s63, %s77
    %p79 = scmp.eq.s32.totalorder %s32, 0
    %p80 = por %p78, %p79
    %s82 = sadd.s32 %s81, 1
    %p85 = scmp.eq.s32.totalorder %s26, 1
    %p86 = scmp.ne.s32.totalorder %s81, %s83
    %p87 = scmp.eq.s32.totalorder %s26, 0
    %p88 = por %p86, %p87
    %p89 = scmp.ne.s32.totalorder %s81, %s83
    %p90 = scmp.eq.s32.totalorder %s31, 1
    %p91 = por %p89, %p90
    %p92 = scmp.ne.s32.totalorder %s83, %s84
    %p93 = scmp.eq.s32.totalorder %s31, 0
    %p94 = por %p92, %p93
    %p95 = scmp.ne.s32.totalorder %s83, %s84
    %p96 = scmp.eq.s32.totalorder %s32, 1
    %p97 = por %p95, %p96
    %p99 = scmp.ne.s32.totalorder %s84, %s98
    %p100 = scmp.eq.s32.totalorder %s32, 0
    %p101 = por %p99, %p100
    %s103 = sadd.s32 %s102, 1
    %p106 = scmp.eq.s32.totalorder %s26, 1
    %p107 = scmp.ne.s32.totalorder %s102, %s104
    %p108 = scmp.eq.s32.totalorder %s26, 0
    %p109 = por %p107, %p108
    %p110 = scmp.ne.s32.totalorder %s102, %s104
    %p111 = scmp.eq.s32.totalorder %s31, 1
    %p112 = por %p110, %p111
    %p113 = scmp.ne.s32.totalorder %s104, %s105
    %p114 = scmp.eq.s32.totalorder %s31, 0
    %p115 = por %p113, %p114
    %p116 = scmp.ne.s32.totalorder %s104, %s105
    %p117 = scmp.eq.s32.totalorder %s32, 1
    %p118 = por %p116, %p117
    %p120 = scmp.ne.s32.totalorder %s105, %s119
    %p121 = scmp.eq.s32.totalorder %s32, 0
    %p122 = por %p120, %p121
    %s124 = sadd.s32 %s123, 1
    %p127 = scmp.eq.s32.totalorder %s26, 1
    %p128 = scmp.ne.s32.totalorder %s123, %s125
    %p129 = scmp.eq.s32.totalorder %s26, 0
    %p130 = por %p128, %p129
    %p131 = scmp.ne.s32.totalorder %s123, %s125
    %p132 = scmp.eq.s32.totalorder %s31, 1
    %p133 = por %p131, %p132
    %p134 = scmp.ne.s32.totalorder %s125, %s126
    %p135 = scmp.eq.s32.totalorder %s31, 0
    %p136 = por %p134, %p135
    %p137 = scmp.ne.s32.totalorder %s125, %s126
    %p138 = scmp.eq.s32.totalorder %s32, 1
    %p139 = por %p137, %p138
    %p141 = scmp.ne.s32.totalorder %s126, %s140
    %p142 = scmp.eq.s32.totalorder %s32, 0
    %p143 = por %p141, %p142
    %s145 = sadd.s32 %s144, 1
    %p148 = scmp.eq.s32.totalorder %s26, 1
    %p149 = scmp.ne.s32.totalorder %s144, %s146
    %p150 = scmp.eq.s32.totalorder %s26, 0
    %p151 = por %p149, %p150
    %p152 = scmp.ne.s32.totalorder %s144, %s146
    %p153 = scmp.eq.s32.totalorder %s31, 1
    %p154 = por %p152, %p153
    %p155 = scmp.ne.s32.totalorder %s146, %s147
    %p156 = scmp.eq.s32.totalorder %s31, 0
    %p157 = por %p155, %p156
    %p158 = scmp.ne.s32.totalorder %s146, %s147
    %p159 = scmp.eq.s32.totalorder %s32, 1
    %p160 = por %p158, %p159
    %p162 = scmp.ne.s32.totalorder %s147, %s161
    %p163 = scmp.eq.s32.totalorder %s32, 0
    %p164 = por %p162, %p163
    %s166 = sadd.s32 %s165, 1
    %p169 = scmp.eq.s32.totalorder %s26, 1
    %p170 = scmp.ne.s32.totalorder %s165, %s167
    %p171 = scmp.eq.s32.totalorder %s26, 0
    %p172 = por %p170, %p171
    %p173 = scmp.ne.s32.totalorder %s165, %s167
    %p174 = scmp.eq.s32.totalorder %s31, 1
    %p175 = por %p173, %p174
    %p176 = scmp.ne.s32.totalorder %s167, %s168
    %p177 = scmp.eq.s32.totalorder %s31, 0
    %p178 = por %p176, %p177
    %p179 = scmp.ne.s32.totalorder %s167, %s168
    %p180 = scmp.eq.s32.totalorder %s32, 1
    %p181 = por %p179, %p180
    %p183 = scmp.ne.s32.totalorder %s168, %s182
    %p184 = scmp.eq.s32.totalorder %s32, 0
    %p185 = por %p183, %p184
    %s187 = sadd.s32 %s186, 1
    %p190 = scmp.eq.s32.totalorder %s26, 1
    %p191 = scmp.ne.s32.totalorder %s186, %s188
    %p192 = scmp.eq.s32.totalorder %s26, 0
    %p193 = por %p191, %p192
    %p194 = scmp.ne.s32.totalorder %s186, %s188
    %p195 = scmp.eq.s32.totalorder %s31, 1
    %p196 = por %p194, %p195
    %p197 = scmp.ne.s32.totalorder %s188, %s189
    %p198 = scmp.eq.s32.totalorder %s31, 0
    %p199 = por %p197, %p198
    %p200 = scmp.ne.s32.totalorder %s188, %s189
    %p201 = scmp.eq.s32.totalorder %s32, 1
    %p202 = por %p200, %p201
    %p204 = scmp.ne.s32.totalorder %s189, %s203
    %p205 = scmp.eq.s32.totalorder %s32, 0
    %p206 = por %p204, %p205
    %s208 = sadd.s32 %s207, 1
    %p211 = scmp.eq.s32.totalorder %s26, 1
    %p212 = scmp.ne.s32.totalorder %s207, %s209
    %p213 = scmp.eq.s32.totalorder %s26, 0
    %p214 = por %p212, %p213
    %p215 = scmp.ne.s32.totalorder %s207, %s209
    %p216 = scmp.eq.s32.totalorder %s31, 1
    %p217 = por %p215, %p216
    %p218 = scmp.ne.s32.totalorder %s209, %s210
    %p219 = scmp.eq.s32.totalorder %s31, 0
    %p220 = por %p218, %p219
    %p221 = scmp.ne.s32.totalorder %s209, %s210
    %p222 = scmp.eq.s32.totalorder %s32, 1
    %p223 = por %p221, %p222
    %p225 = scmp.ne.s32.totalorder %s210, %s224
    %p226 = scmp.eq.s32.totalorder %s32, 0
    %p227 = por %p225, %p226
    %s229 = sadd.s32 %s228, 1
    %p232 = scmp.eq.s32.totalorder %s26, 1
    %p233 = scmp.ne.s32.totalorder %s228, %s230
    %p234 = scmp.eq.s32.totalorder %s26, 0
    %p235 = por %p233, %p234
    %p236 = scmp.ne.s32.totalorder %s228, %s230
    %p237 = scmp.eq.s32.totalorder %s31, 1
    %p238 = por %p236, %p237
    %p239 = scmp.ne.s32.totalorder %s230, %s231
    %p240 = scmp.eq.s32.totalorder %s31, 0
    %p241 = por %p239, %p240
    %p242 = scmp.ne.s32.totalorder %s230, %s231
    %p243 = scmp.eq.s32.totalorder %s32, 1
    %p244 = por %p242, %p243
    %p246 = scmp.ne.s32.totalorder %s231, %s245
    %p247 = scmp.eq.s32.totalorder %s32, 0
    %p248 = por %p246, %p247
    %s250 = sadd.s32 %s249, 1
    %p253 = scmp.eq.s32.totalorder %s26, 1
    %p254 = scmp.ne.s32.totalorder %s249, %s251
    %p255 = scmp.eq.s32.totalorder %s26, 0
    %p256 = por %p254, %p255
    %p257 = scmp.ne.s32.totalorder %s249, %s251
    %p258 = scmp.eq.s32.totalorder %s31, 1
    %p259 = por %p257, %p258
    %p260 = scmp.ne.s32.totalorder %s251, %s252
    %p261 = scmp.eq.s32.totalorder %s31, 0
    %p262 = por %p260, %p261
    %p263 = scmp.ne.s32.totalorder %s251, %s252
    %p264 = scmp.eq.s32.totalorder %s32, 1
    %p265 = por %p263, %p264
    %p267 = scmp.ne.s32.totalorder %s252, %s266
    %p268 = scmp.eq.s32.totalorder %s32, 0
    %p269 = por %p267, %p268
    %s271 = sadd.s32 %s270, 1
    %p274 = scmp.eq.s32.totalorder %s26, 1
    %p275 = scmp.ne.s32.totalorder %s270, %s272
    %p276 = scmp.eq.s32.totalorder %s26, 0
    %p277 = por %p275, %p276
    %p278 = scmp.ne.s32.totalorder %s270, %s272
    %p279 = scmp.eq.s32.totalorder %s31, 1
    %p280 = por %p278, %p279
    %p281 = scmp.ne.s32.totalorder %s272, %s273
    %p282 = scmp.eq.s32.totalorder %s31, 0
    %p283 = por %p281, %p282
    %p284 = scmp.ne.s32.totalorder %s272, %s273
    %p285 = scmp.eq.s32.totalorder %s32, 1
    %p286 = por %p284, %p285
    %p288 = scmp.ne.s32.totalorder %s273, %s287
    %p289 = scmp.eq.s32.totalorder %s32, 0
    %p290 = por %p288, %p289
    %s292 = sadd.s32 %s291, 1
    %p295 = scmp.eq.s32.totalorder %s26, 1
    %p296 = scmp.ne.s32.totalorder %s291, %s293
    %p297 = scmp.eq.s32.totalorder %s26, 0
    %p298 = por %p296, %p297
    %p299 = scmp.ne.s32.totalorder %s291, %s293
    %p300 = scmp.eq.s32.totalorder %s31, 1
    %p301 = por %p299, %p300
    %p302 = scmp.ne.s32.totalorder %s293, %s294
    %p303 = scmp.eq.s32.totalorder %s31, 0
    %p304 = por %p302, %p303
    %p305 = scmp.ne.s32.totalorder %s293, %s294
    %p306 = scmp.eq.s32.totalorder %s32, 1
    %p307 = por %p305, %p306
    %p309 = scmp.ne.s32.totalorder %s294, %s308
    %p310 = scmp.eq.s32.totalorder %s32, 0
    %p311 = por %p309, %p310
    %s313 = sadd.s32 %s312, 1
    %p316 = scmp.eq.s32.totalorder %s26, 1
    %p317 = scmp.ne.s32.totalorder %s312, %s314
    %p318 = scmp.eq.s32.totalorder %s26, 0
    %p319 = por %p317, %p318
    %p320 = scmp.ne.s32.totalorder %s312, %s314
    %p321 = scmp.eq.s32.totalorder %s31, 1
    %p322 = por %p320, %p321
    %p323 = scmp.ne.s32.totalorder %s314, %s315
    %p324 = scmp.eq.s32.totalorder %s31, 0
    %p325 = por %p323, %p324
    %p326 = scmp.ne.s32.totalorder %s314, %s315
    %p327 = scmp.eq.s32.totalorder %s32, 1
    %p328 = por %p326, %p327
    %p330 = scmp.ne.s32.totalorder %s315, %s329
    %p331 = scmp.eq.s32.totalorder %s32, 0
    %p332 = por %p330, %p331
    %s334 = sadd.s32 %s333, 1
    %p337 = scmp.eq.s32.totalorder %s26, 1
    %p338 = scmp.ne.s32.totalorder %s333, %s335
    %p339 = scmp.eq.s32.totalorder %s26, 0
    %p340 = por %p338, %p339
    %p341 = scmp.ne.s32.totalorder %s333, %s335
    %p342 = scmp.eq.s32.totalorder %s31, 1
    %p343 = por %p341, %p342
    %p344 = scmp.ne.s32.totalorder %s335, %s336
    %p345 = scmp.eq.s32.totalorder %s31, 0
    %p346 = por %p344, %p345
    %p347 = scmp.ne.s32.totalorder %s335, %s336
    %p348 = scmp.eq.s32.totalorder %s32, 1
    %p349 = por %p347, %p348
    %p351 = scmp.ne.s32.totalorder %s336, %s350
    %p352 = scmp.eq.s32.totalorder %s32, 0
    %p353 = por %p351, %p352
    %s355 = sadd.s32 %s354, 1
    %p358 = scmp.eq.s32.totalorder %s26, 1
    %p359 = scmp.ne.s32.totalorder %s354, %s356
    %p360 = scmp.eq.s32.totalorder %s26, 0
    %p361 = por %p359, %p360
    %p362 = scmp.ne.s32.totalorder %s354, %s356
    %p363 = scmp.eq.s32.totalorder %s31, 1
    %p364 = por %p362, %p363
    %p365 = scmp.ne.s32.totalorder %s356, %s357
    %p366 = scmp.eq.s32.totalorder %s31, 0
    %p367 = por %p365, %p366
    %p368 = scmp.ne.s32.totalorder %s356, %s357
    %p369 = scmp.eq.s32.totalorder %s32, 1
    %p370 = por %p368, %p369
    %p372 = scmp.ne.s32.totalorder %s357, %s371
    %p373 = scmp.eq.s32.totalorder %s32, 0
    %p374 = por %p372, %p373
    %s376 = sadd.s32 %s375, 1
    %p379 = scmp.eq.s32.totalorder %s26, 1
    %p380 = scmp.ne.s32.totalorder %s375, %s377
    %p381 = scmp.eq.s32.totalorder %s26, 0
    %p382 = por %p380, %p381
    %p383 = scmp.ne.s32.totalorder %s375, %s377
    %p384 = scmp.eq.s32.totalorder %s31, 1
    %p385 = por %p383, %p384
    %p386 = scmp.ne.s32.totalorder %s377, %s378
    %p387 = scmp.eq.s32.totalorder %s31, 0
    %p388 = por %p386, %p387
    %p389 = scmp.ne.s32.totalorder %s377, %s378
    %p390 = scmp.eq.s32.totalorder %s32, 1
    %p391 = por %p389, %p390
    %p393 = scmp.ne.s32.totalorder %s378, %s392
    %p394 = scmp.eq.s32.totalorder %s32, 0
    %p395 = por %p393, %p394
    %s397 = sadd.s32 %s396, 1
    %p400 = scmp.eq.s32.totalorder %s26, 1
    %p401 = scmp.ne.s32.totalorder %s396, %s398
    %p402 = scmp.eq.s32.totalorder %s26, 0
    %p403 = por %p401, %p402
    %p404 = scmp.ne.s32.totalorder %s396, %s398
    %p405 = scmp.eq.s32.totalorder %s31, 1
    %p406 = por %p404, %p405
    %p407 = scmp.ne.s32.totalorder %s398, %s399
    %p408 = scmp.eq.s32.totalorder %s31, 0
    %p409 = por %p407, %p408
    %p410 = scmp.ne.s32.totalorder %s398, %s399
    %p411 = scmp.eq.s32.totalorder %s32, 1
    %p412 = por %p410, %p411
    %p414 = scmp.ne.s32.totalorder %s399, %s413
    %p415 = scmp.eq.s32.totalorder %s32, 0
    %p416 = por %p414, %p415
    %s418 = sadd.s32 %s417, 1
    %p421 = scmp.eq.s32.totalorder %s26, 1
    %p422 = scmp.ne.s32.totalorder %s417, %s419
    %p423 = scmp.eq.s32.totalorder %s26, 0
    %p424 = por %p422, %p423
    %p425 = scmp.ne.s32.totalorder %s417, %s419
    %p426 = scmp.eq.s32.totalorder %s31, 1
    %p427 = por %p425, %p426
    %p428 = scmp.ne.s32.totalorder %s419, %s420
    %p429 = scmp.eq.s32.totalorder %s31, 0
    %p430 = por %p428, %p429
    %p431 = scmp.ne.s32.totalorder %s419, %s420
    %p432 = scmp.eq.s32.totalorder %s32, 1
    %p433 = por %p431, %p432
    %p435 = scmp.ne.s32.totalorder %s420, %s434
    %p436 = scmp.eq.s32.totalorder %s32, 0
    %p437 = por %p435, %p436
    %s439 = sadd.s32 %s438, 1
    %p442 = scmp.eq.s32.totalorder %s26, 1
    %p443 = scmp.ne.s32.totalorder %s438, %s440
    %p444 = scmp.eq.s32.totalorder %s26, 0
    %p445 = por %p443, %p444
    %p446 = scmp.ne.s32.totalorder %s438, %s440
    %p447 = scmp.eq.s32.totalorder %s31, 1
    %p448 = por %p446, %p447
    %p449 = scmp.ne.s32.totalorder %s440, %s441
    %p450 = scmp.eq.s32.totalorder %s31, 0
    %p451 = por %p449, %p450
    %p452 = scmp.ne.s32.totalorder %s440, %s441
    %p453 = scmp.eq.s32.totalorder %s32, 1
    %p454 = por %p452, %p453
    %p456 = scmp.ne.s32.totalorder %s441, %s455
    %p457 = scmp.eq.s32.totalorder %s32, 0
    %p458 = por %p456, %p457
    %s459 = ssub.s32 %s26, %s33
    %p460 = scmp.eq.s32.totalorder %s459, 0
    %s462 = sadd.s32 %s461, 1
    %s463 = scalar_select %p460, %s461, %s462
    %p466 = pneg %p460
    %p467 = scmp.eq.s32.totalorder %s26, 1
    %p468 = por %p466, %p467
    %p469 = scmp.ne.s32.totalorder %s461, %s464
    %p470 = scmp.eq.s32.totalorder %s26, 0
    %p471 = por %p469, %p470
    %p472 = scmp.ne.s32.totalorder %s461, %s464
    %p473 = scmp.eq.s32.totalorder %s31, 1
    %p474 = por %p472, %p473
    %p475 = scmp.ne.s32.totalorder %s464, %s465
    %p476 = scmp.eq.s32.totalorder %s31, 0
    %p477 = por %p475, %p476
    %p478 = scmp.ne.s32.totalorder %s464, %s465
    %p479 = scmp.eq.s32.totalorder %s32, 1
    %p480 = por %p478, %p479
    %p482 = scmp.ne.s32.totalorder %s465, %s481
    %p483 = scmp.eq.s32.totalorder %s32, 0
    %p484 = por %p482, %p483
    %p485 = scmp.le.s32.totalorder 1, %s26
    %p486 = scmp.lt.s32.totalorder %s26, 3
    %p487 = pnand %p485, %p486
    %p488 = pneg %p487
    // Predicated region
    $region9: #{block_forward.1} parent=5 // pred_check
      _
    $region10: #{block_forward.1} parent=5 // pred_check_branch
      %490 = sbr.rel (%p487) target = $region12
    $region11: #{block_forward.1} parent=5 // pred_region
      %s491 = ssub.s32 %s26, 1
      // Predicated region
      $region13: #{block_forward.1} parent=11 // pred_check
        %p492 = pneg %p73
      $region14: #{block_forward.1} parent=11 // pred_check_branch
        %494 = sbr.rel (%p492) target = $region16
      $region15: #{block_forward.1} parent=11 // pred_region
        _
      $region16: #{block_forward.1} parent=11 // pred_fallthru
        _
      // Predicated region
      $region17: #{block_forward.1} parent=11 // pred_check
        %p495 = pneg %p94
      $region18: #{block_forward.1} parent=11 // pred_check_branch
        %497 = sbr.rel (%p495) target = $region20
      $region19: #{block_forward.1} parent=11 // pred_region
        _
      $region20: #{block_forward.1} parent=11 // pred_fallthru
        _
      // Predicated region
      $region21: #{block_forward.1} parent=11 // pred_check
        %p498 = pneg %p115
      $region22: #{block_forward.1} parent=11 // pred_check_branch
        %500 = sbr.rel (%p498) target = $region24
      $region23: #{block_forward.1} parent=11 // pred_region
        _
      $region24: #{block_forward.1} parent=11 // pred_fallthru
        _
      // Predicated region
      $region25: #{block_forward.1} parent=11 // pred_check
        %p501 = pneg %p136
      $region26: #{block_forward.1} parent=11 // pred_check_branch
        %503 = sbr.rel (%p501) target = $region28
      $region27: #{block_forward.1} parent=11 // pred_region
        _
      $region28: #{block_forward.1} parent=11 // pred_fallthru
        _
      // Predicated region
      $region29: #{block_forward.1} parent=11 // pred_check
        %p504 = pneg %p157
      $region30: #{block_forward.1} parent=11 // pred_check_branch
        %506 = sbr.rel (%p504) target = $region32
      $region31: #{block_forward.1} parent=11 // pred_region
        _
      $region32: #{block_forward.1} parent=11 // pred_fallthru
        _
      // Predicated region
      $region33: #{block_forward.1} parent=11 // pred_check
        %p507 = pneg %p178
      $region34: #{block_forward.1} parent=11 // pred_check_branch
        %509 = sbr.rel (%p507) target = $region36
      $region35: #{block_forward.1} parent=11 // pred_region
        _
      $region36: #{block_forward.1} parent=11 // pred_fallthru
        _
      // Predicated region
      $region37: #{block_forward.1} parent=11 // pred_check
        %p510 = pneg %p199
      $region38: #{block_forward.1} parent=11 // pred_check_branch
        %512 = sbr.rel (%p510) target = $region40
      $region39: #{block_forward.1} parent=11 // pred_region
        _
      $region40: #{block_forward.1} parent=11 // pred_fallthru
        _
      // Predicated region
      $region41: #{block_forward.1} parent=11 // pred_check
        %p513 = pneg %p220
      $region42: #{block_forward.1} parent=11 // pred_check_branch
        %515 = sbr.rel (%p513) target = $region44
      $region43: #{block_forward.1} parent=11 // pred_region
        _
      $region44: #{block_forward.1} parent=11 // pred_fallthru
        _
      // Predicated region
      $region45: #{block_forward.1} parent=11 // pred_check
        %p516 = pneg %p241
      $region46: #{block_forward.1} parent=11 // pred_check_branch
        %518 = sbr.rel (%p516) target = $region48
      $region47: #{block_forward.1} parent=11 // pred_region
        _
      $region48: #{block_forward.1} parent=11 // pred_fallthru
        _
      // Predicated region
      $region49: #{block_forward.1} parent=11 // pred_check
        %p519 = pneg %p262
      $region50: #{block_forward.1} parent=11 // pred_check_branch
        %521 = sbr.rel (%p519) target = $region52
      $region51: #{block_forward.1} parent=11 // pred_region
        _
      $region52: #{block_forward.1} parent=11 // pred_fallthru
        _
      // Predicated region
      $region53: #{block_forward.1} parent=11 // pred_check
        %p522 = pneg %p283
      $region54: #{block_forward.1} parent=11 // pred_check_branch
        %524 = sbr.rel (%p522) target = $region56
      $region55: #{block_forward.1} parent=11 // pred_region
        _
      $region56: #{block_forward.1} parent=11 // pred_fallthru
        _
      // Predicated region
      $region57: #{block_forward.1} parent=11 // pred_check
        %p525 = pneg %p304
      $region58: #{block_forward.1} parent=11 // pred_check_branch
        %527 = sbr.rel (%p525) target = $region60
      $region59: #{block_forward.1} parent=11 // pred_region
        _
      $region60: #{block_forward.1} parent=11 // pred_fallthru
        _
      // Predicated region
      $region61: #{block_forward.1} parent=11 // pred_check
        %p528 = pneg %p325
      $region62: #{block_forward.1} parent=11 // pred_check_branch
        %530 = sbr.rel (%p528) target = $region64
      $region63: #{block_forward.1} parent=11 // pred_region
        _
      $region64: #{block_forward.1} parent=11 // pred_fallthru
        _
      // Predicated region
      $region65: #{block_forward.1} parent=11 // pred_check
        %p531 = pneg %p346
      $region66: #{block_forward.1} parent=11 // pred_check_branch
        %533 = sbr.rel (%p531) target = $region68
      $region67: #{block_forward.1} parent=11 // pred_region
        _
      $region68: #{block_forward.1} parent=11 // pred_fallthru
        _
      // Predicated region
      $region69: #{block_forward.1} parent=11 // pred_check
        %p534 = pneg %p367
      $region70: #{block_forward.1} parent=11 // pred_check_branch
        %536 = sbr.rel (%p534) target = $region72
      $region71: #{block_forward.1} parent=11 // pred_region
        _
      $region72: #{block_forward.1} parent=11 // pred_fallthru
        _
      // Predicated region
      $region73: #{block_forward.1} parent=11 // pred_check
        %p537 = pneg %p388
      $region74: #{block_forward.1} parent=11 // pred_check_branch
        %539 = sbr.rel (%p537) target = $region76
      $region75: #{block_forward.1} parent=11 // pred_region
        _
      $region76: #{block_forward.1} parent=11 // pred_fallthru
        _
      // Predicated region
      $region77: #{block_forward.1} parent=11 // pred_check
        %p540 = pneg %p409
      $region78: #{block_forward.1} parent=11 // pred_check_branch
        %542 = sbr.rel (%p540) target = $region80
      $region79: #{block_forward.1} parent=11 // pred_region
        _
      $region80: #{block_forward.1} parent=11 // pred_fallthru
        _
      // Predicated region
      $region81: #{block_forward.1} parent=11 // pred_check
        %p543 = pneg %p430
      $region82: #{block_forward.1} parent=11 // pred_check_branch
        %545 = sbr.rel (%p543) target = $region84
      $region83: #{block_forward.1} parent=11 // pred_region
        _
      $region84: #{block_forward.1} parent=11 // pred_fallthru
        _
      // Predicated region
      $region85: #{block_forward.1} parent=11 // pred_check
        %p546 = pneg %p451
      $region86: #{block_forward.1} parent=11 // pred_check_branch
        %548 = sbr.rel (%p546) target = $region88
      $region87: #{block_forward.1} parent=11 // pred_region
        _
      $region88: #{block_forward.1} parent=11 // pred_fallthru
        _
    $region12: #{block_forward.1} parent=5 // pred_fallthru
      _
    %p549 = scmp.lt.s32.totalorder %s26, 2
    // Predicated region
    $region89: #{block_forward.1} parent=5 // pred_check
      %p550 = pneg %p549
    $region90: #{block_forward.1} parent=5 // pred_check_branch
      %552 = sbr.rel (%p550) target = $region92
    $region91: #{block_forward.1} parent=5 // pred_region
      // Predicated region
      $region93: #{block_forward.1} parent=91 // pred_check
        %p553 = pneg %p46
      $region94: #{block_forward.1} parent=91 // pred_check_branch
        %555 = sbr.rel (%p553) target = $region96
      $region95: #{block_forward.1} parent=91 // pred_region
        %p556 = scmp.lt.s32.totalorder %s26, 1
        %s557 = scalar_select %p556, %s26, 1
        %s558 = smul.addr %s557, 2
        %s559 = smul.addr %s558, 4
        %s560 = scalar_lea.vmem %s0, %s559
      $region96: #{block_forward.1} parent=91 // pred_fallthru
        _
    $region92: #{block_forward.1} parent=5 // pred_fallthru
      _
    %p561 = scmp.le.s32.totalorder 1, %s26
    %p562 = scmp.lt.s32.totalorder %s26, 3
    %p563 = pnand %p561, %p562
    %p564 = pneg %p563
    // Predicated region
    $region97: #{block_forward.1} parent=5 // pred_check
      _
    $region98: #{block_forward.1} parent=5 // pred_check_branch
      %566 = sbr.rel (%p563) target = $region100
    $region99: #{block_forward.1} parent=5 // pred_region
      %s567 = ssub.s32 %s26, 1
      %p568 = scmp.lt.s32.totalorder %s31, 1
      %s569 = scalar_select %p568, %s31, 1
      %s570 = smul.addr %s569, 2
      %s571 = smul.addr %s570, 4
      %s572 = scalar_lea.vmem %s0, %s571
      %p573 = pneg %p52
      %p574 = pneg %p49
      %p575 = pneg %p73
      %p576 = pneg %p70
      %p577 = pneg %p94
      %p578 = pneg %p91
      %p579 = pneg %p115
      %p580 = pneg %p112
      %p581 = pneg %p136
      %p582 = pneg %p133
      %p583 = pneg %p157
      %p584 = pneg %p154
      %p585 = pneg %p178
      %p586 = pneg %p175
      %p587 = pneg %p199
      %p588 = pneg %p196
      %p589 = pneg %p220
      %p590 = pneg %p217
      %p591 = pneg %p241
      %p592 = pneg %p238
      %p593 = pneg %p262
      %p594 = pneg %p259
      %p595 = pneg %p283
      %p596 = pneg %p280
      %p597 = pneg %p304
      %p598 = pneg %p301
      %p599 = pneg %p325
      %p600 = pneg %p322
      %p601 = pneg %p346
      %p602 = pneg %p343
      %p603 = pneg %p367
      %p604 = pneg %p364
      %p605 = pneg %p388
      %p606 = pneg %p385
      %p607 = pneg %p409
      %p608 = pneg %p406
      %p609 = pneg %p430
      %p610 = pneg %p427
      %p611 = pneg %p451
      %p612 = pneg %p448
      %p613 = pneg %p477
      %p614 = pneg %p474
      %p615 = scmp.lt.s32.totalorder %s31, 1
      %s616 = scalar_select %p615, %s31, 1
      %s617 = smul.addr %s616, 2
      %s618 = smul.addr %s617, 8
      %s619 = scalar_lea.vmem %s20, %s618
      %p620 = scmp.lt.s32.totalorder %s31, 1
      %s621 = scalar_select %p620, %s31, 1
      %s622 = smul.addr %s621, 2
      %s623 = smul.addr %s622, 4
      %s624 = scalar_lea.vmem %s0, %s623
      %p625 = scmp.lt.s32.totalorder %s31, 1
      %s626 = scalar_select %p625, %s31, 1
      %s627 = smul.addr %s626, 2
      %s628 = smul.addr %s627, 8
      %s629 = scalar_lea.vmem %s20, %s628
      %v630 = vlaneseq
      %v631 = vand.u32 %v630, 127
      %v632 = vadd.s32 %v631, 128
      %vm633 = vcmp.lt.s32.totalorder %v631, 0
      %v634 = vsub.s32 0, %v631
      %v635 = vsel %vm633, %v634, %v631
      %v636 = vshrl.u32 %v635, 4
      %v637 = vand.u32 %v635, 15
      %v638 = vsub.s32 0, %v637
      %v639 = vsel %vm633, %v638, %v637
      %vm640 = vcmp.lt.s32.totalorder %v632, 0
      %v641 = vsub.s32 0, %v632
      %v642 = vsel %vm640, %v641, %v632
      %v643 = vshrl.u32 %v642, 4
      %v644 = vand.u32 %v642, 15
      %v645 = vsub.s32 0, %v644
      %v646 = vsel %vm640, %v645, %v644
      %vm647 = vcmp.ne.s32.totalorder %v639, 0
      %vm648 = vcmp.ne.s32.totalorder %v646, 0
      %vm649 = vcmp.lt.s32.totalorder %v639, 0
      %vm650 = vcmp.lt.s32.totalorder %v646, 0
      %vm651 = vmand %vm649, %vm647
      %vm652 = vmand %vm650, %vm648
      %v653 = vadd.s32 %v639, 16
      %v654 = vadd.s32 %v646, 16
      %v655 = vsel %vm651, %v653, %v639
      %v656 = vsel %vm652, %v654, %v646
      %vm657 = vcmp.gt.s32.totalorder %v655, 0
      %vm658 = vcmp.gt.s32.totalorder %v656, 0
      %v659 = vsel %vm657, 1, 0
      %v660 = vsel %vm658, 1, 0
      %v661 = vcvt.s32.f32 %v659
      %v662 = vcvt.s32.f32 %v660
      %vm663 = vcmp.lt.s32.totalorder %v655, 15
      %vm664 = vcmp.lt.s32.totalorder %v656, 15
      %v665 = vsel %vm663, 1, 0
      %v666 = vsel %vm664, 1, 0
      %v667 = vcvt.s32.f32 %v665
      %v668 = vcvt.s32.f32 %v666
      %v669 = vld [vmem:[%s624] sm:$0xff]
      %v670 = vld [vmem:[%s1] sm:$0xff]
      %v671 = vld [vmem:[%s1 + $0x8] sm:$0xff]
      %v672 = vld [vmem:[%s2] sm:$0xff]
      %v673 = vld [vmem:[%s2 + $0x8] sm:$0xff]
      %675 = vset.pattern.permute.xlu0 0
      %676 = vperm.xlu0 %675, %v672
      %v677 = vpop.permute.xlu0 %676
      %680 = vset.pattern.permute.xlu0 0
      %681 = vperm.xlu0 %680, %v673
      %v682 = vpop.permute.xlu0 %681
      %v685 = vcombine.high %v669, %v669
      %vm686 = vcmask 31744
      %v688 = vsel %vm686, %v670, 0
      %v691 = vsel %vm686, %v671, 0
      %vm693 = vcmask 1043456
      %v694 = vsel %vm693, %v669, 0
      %v696 = vsel %vm693, %v685, 0
      %698 = vmatprep.subr.mxu0 0.0
      %699 = vmatpush1.msra.mxu0 0.0
      %700 = vmatprep.subr.mxu0 0.0
      %701 = vmatpush1.msra.mxu0 0.0
      %702 = vmatprep.subr.mxu0 0.0
      %703 = vmatpush1.msra.mxu0 0.0
      %704 = vmatprep.subr.mxu0 0.0
      %705 = vmatpush1.msra.mxu0 0.0
      %706 = vmatprep.subr.mxu0 0.0
      %707 = vmatpush1.msra.mxu0 0.0
      %708 = vmatprep.subr.mxu0 0.0
      %709 = vmatpush1.msra.mxu0 0.0
      %710 = vmatprep.subr.mxu0 0.0
      %711 = vmatpush1.msra.mxu0 0.0
      %712 = vmatprep.subr.mxu0 0.0
      %713 = vmatpush1.msra.mxu0 0.0
      %714 = vmatprep.subr.mxu0 0.0
      %715 = vmatpush1.msra.mxu0 0.0
      %716 = vmatprep.subr.mxu0 0.0
      %717 = vmatpush1.msra.mxu0 0.0
      %718 = vmatprep.subr.mxu0 0.0
      %719 = vmatpush1.msra.mxu0 0.0
      %720 = vmatprep.subr.mxu0 0.0
      %721 = vmatpush1.msra.mxu0 0.0
      %722 = vmatprep.subr.mxu0 0.0
      %723 = vmatpush1.msra.mxu0 0.0
      %724 = vmatprep.subr.mxu0 0.0
      %725 = vmatpush1.msra.mxu0 0.0
      %726 = vmatprep.subr.mxu0 0.0
      %727 = vmatpush1.msra.mxu0 0.0
      %728 = vmatprep.subr.mxu0 %v696
      %729 = vmatpush1.msra.mxu0 %v694
      %730 = vmatprep.subr.mxu0 0.0
      %731 = vmatpush2.msra.mxu0 0.0
      %732 = vmatprep.subr.mxu0 0.0
      %733 = vmatpush2.msra.mxu0 0.0
      %734 = vmatprep.subr.mxu0 0.0
      %735 = vmatpush2.msra.mxu0 0.0
      %736 = vmatprep.subr.mxu0 0.0
      %737 = vmatpush2.msra.mxu0 0.0
      %738 = vmatprep.subr.mxu0 0.0
      %739 = vmatpush2.msra.mxu0 0.0
      %740 = vmatprep.subr.mxu0 0.0
      %741 = vmatpush2.msra.mxu0 0.0
      %742 = vmatprep.subr.mxu0 0.0
      %743 = vmatpush2.msra.mxu0 0.0
      %744 = vmatprep.subr.mxu0 0.0
      %745 = vmatpush2.msra.mxu0 0.0
      %746 = vmatprep.subr.mxu0 0.0
      %747 = vmatpush2.msra.mxu0 0.0
      %748 = vmatprep.subr.mxu0 0.0
      %749 = vmatpush2.msra.mxu0 0.0
      %750 = vmatprep.subr.mxu0 0.0
      %751 = vmatpush2.msra.mxu0 0.0
      %752 = vmatprep.subr.mxu0 0.0
      %753 = vmatpush2.msra.mxu0 0.0
      %754 = vmatprep.subr.mxu0 0.0
      %755 = vmatpush2.msra.mxu0 0.0
      %756 = vmatprep.subr.mxu0 0.0
      %757 = vmatpush2.msra.mxu0 0.0
      %758 = vmatprep.subr.mxu0 0.0
      %759 = vmatpush2.msra.mxu0 0.0
      %760 = vmatprep.subr.mxu0 0.0
      %761 = vmatpush2.msra.mxu0 0.0
      %762 = vmatprep.mubr.f32.mxu0 0.0
      %763 = vmatmul.mubr.f32.gmra.mxu0 %v688
      %v764 = vpop.f32.mrf.mxu0
      %v765 = vadd.f32 %v677, %v764
      %v766 = vpop.f32.mrf.mxu0
      %v767 = vadd.f32 %v677, %v766
      %768 = vmatprep.mubr.f32.mxu0 0.0
      %769 = vmatmul.mubr.f32.gmra.mxu0 %v691
      %v770 = vpop.f32.mrf.mxu0
      %v771 = vadd.f32 %v682, %v770
      %v772 = vpop.f32.mrf.mxu0
      %v773 = vadd.f32 %v682, %v772
      %774 = vdwg.mxu0
      %v775 = vmax.f32 %v765, 0.0
      %v776 = vmax.f32 %v767, 0.0
      %v777 = vmax.f32 %v771, 0.0
      %v778 = vmax.f32 %v773, 0.0
      %v779 = vld [vmem:[%s3] sm:$0xff]
      %v780 = vld [vmem:[%s3 + $0x8] sm:$0xff]
      %785 = vrot.lane.b32.xlu0 %v775, 17
      %v786 = vpop.permute.xlu0 %785
      %787 = vrot.lane.b32.xlu0 %v776, 17
      %v788 = vpop.permute.xlu0 %787
      %789 = vrot.lane.b32.xlu0 %v777, 17
      %v790 = vpop.permute.xlu0 %789
      %791 = vrot.lane.b32.xlu0 %v778, 17
      %v792 = vpop.permute.xlu0 %791
      %vm793 = vcmask 138240
      %v794 = vsel %vm793, %v786, %v788
      %v795 = vsel %vm793, %v790, %v792
      %v800 = vsel %vm793, 0.0, %v786
      %v801 = vsel %vm793, 0.0, %v790
      %v802 = vmul.f32 %v800, %v661
      %v803 = vmul.f32 %v794, %v662
      %v804 = vmul.f32 %v801, %v661
      %v805 = vmul.f32 %v795, %v662
      %806 = vrot.lane.b32.xlu0 %v775, 16
      %v807 = vpop.permute.xlu0 %806
      %808 = vrot.lane.b32.xlu0 %v776, 16
      %v809 = vpop.permute.xlu0 %808
      %810 = vrot.lane.b32.xlu0 %v777, 16
      %v811 = vpop.permute.xlu0 %810
      %812 = vrot.lane.b32.xlu0 %v778, 16
      %v813 = vpop.permute.xlu0 %812
      %vm814 = vcmask 130048
      %v815 = vsel %vm814, %v807, %v809
      %v816 = vsel %vm814, %v811, %v813
      %v821 = vsel %vm814, 0.0, %v807
      %v822 = vsel %vm814, 0.0, %v811
      %823 = vrot.lane.b32.xlu0 %v775, 15
      %v824 = vpop.permute.xlu0 %823
      %825 = vrot.lane.b32.xlu0 %v776, 15
      %v826 = vpop.permute.xlu0 %825
      %827 = vrot.lane.b32.xlu0 %v777, 15
      %v828 = vpop.permute.xlu0 %827
      %829 = vrot.lane.b32.xlu0 %v778, 15
      %v830 = vpop.permute.xlu0 %829
      %vm831 = vcmask 121856
      %v832 = vsel %vm831, %v824, %v826
      %v833 = vsel %vm831, %v828, %v830
      %v838 = vsel %vm831, 0.0, %v824
      %v839 = vsel %vm831, 0.0, %v828
      %v840 = vmul.f32 %v838, %v667
      %v841 = vmul.f32 %v832, %v668
      %v842 = vmul.f32 %v839, %v667
      %v843 = vmul.f32 %v833, %v668
      %844 = vrot.lane.b32.xlu0 %v775, 1
      %v845 = vpop.permute.xlu0 %844
      %846 = vrot.lane.b32.xlu0 %v776, 1
      %v847 = vpop.permute.xlu0 %846
      %848 = vrot.lane.b32.xlu0 %v777, 1
      %v849 = vpop.permute.xlu0 %848
      %850 = vrot.lane.b32.xlu0 %v778, 1
      %v851 = vpop.permute.xlu0 %850
      %vm852 = vcmask 7168
      %v853 = vsel %vm852, %v845, %v847
      %v854 = vsel %vm852, %v849, %v851
      %v859 = vsel %vm852, 0.0, %v845
      %v860 = vsel %vm852, 0.0, %v849
      %v861 = vmul.f32 %v859, %v661
      %v862 = vmul.f32 %v853, %v662
      %v863 = vmul.f32 %v860, %v661
      %v864 = vmul.f32 %v854, %v662
      %865 = vrot.lane.b32.xlu0 %v775, 127
      %v866 = vpop.permute.xlu0 %865
      %867 = vrot.lane.b32.xlu0 %v776, 127
      %v868 = vpop.permute.xlu0 %867
      %869 = vrot.lane.b32.xlu0 %v777, 127
      %v870 = vpop.permute.xlu0 %869
      %871 = vrot.lane.b32.xlu0 %v778, 127
      %v872 = vpop.permute.xlu0 %871
      %vm873 = vcmask 1039360
      %v874 = vsel %vm873, %v866, %v868
      %v875 = vsel %vm873, %v870, %v872
      %v880 = vsel %vm873, %v868, 0.0
      %v881 = vsel %vm873, %v872, 0.0
      %v882 = vmul.f32 %v874, %v667
      %v883 = vmul.f32 %v880, %v668
      %v884 = vmul.f32 %v875, %v667
      %v885 = vmul.f32 %v881, %v668
      %886 = vrot.lane.b32.xlu0 %v775, 113
      %v887 = vpop.permute.xlu0 %886
      %888 = vrot.lane.b32.xlu0 %v776, 113
      %v889 = vpop.permute.xlu0 %888
      %890 = vrot.lane.b32.xlu0 %v777, 113
      %v891 = vpop.permute.xlu0 %890
      %892 = vrot.lane.b32.xlu0 %v778, 113
      %v893 = vpop.permute.xlu0 %892
      %vm894 = vcmask 924672
      %v895 = vsel %vm894, %v887, %v889
      %v896 = vsel %vm894, %v891, %v893
      %v901 = vsel %vm894, %v889, 0.0
      %v902 = vsel %vm894, %v893, 0.0
      %v903 = vmul.f32 %v895, %v661
      %v904 = vmul.f32 %v901, %v662
      %v905 = vmul.f32 %v896, %v661
      %v906 = vmul.f32 %v902, %v662
      %907 = vrot.lane.b32.xlu0 %v775, 112
      %v908 = vpop.permute.xlu0 %907
      %909 = vrot.lane.b32.xlu0 %v776, 112
      %v910 = vpop.permute.xlu0 %909
      %911 = vrot.lane.b32.xlu0 %v777, 112
      %v912 = vpop.permute.xlu0 %911
      %913 = vrot.lane.b32.xlu0 %v778, 112
      %v914 = vpop.permute.xlu0 %913
      %vm915 = vcmask 916480
      %v916 = vsel %vm915, %v908, %v910
      %v917 = vsel %vm915, %v912, %v914
      %v922 = vsel %vm915, %v910, 0.0
      %v923 = vsel %vm915, %v914, 0.0
      %924 = vrot.lane.b32.xlu0 %v775, 111
      %v925 = vpop.permute.xlu0 %924
      %926 = vrot.lane.b32.xlu0 %v776, 111
      %v927 = vpop.permute.xlu0 %926
      %928 = vrot.lane.b32.xlu0 %v777, 111
      %v929 = vpop.permute.xlu0 %928
      %930 = vrot.lane.b32.xlu0 %v778, 111
      %v931 = vpop.permute.xlu0 %930
      %vm932 = vcmask 908288
      %v933 = vsel %vm932, %v925, %v927
      %v934 = vsel %vm932, %v929, %v931
      %v939 = vsel %vm932, %v927, 0.0
      %v940 = vsel %vm932, %v931, 0.0
      %v941 = vmul.f32 %v933, %v667
      %v942 = vmul.f32 %v939, %v668
      %v943 = vmul.f32 %v934, %v667
      %v944 = vmul.f32 %v940, %v668
      %946 = vset.pattern.permute.xlu0 0
      %947 = vperm.xlu0 %946, %v779
      %v948 = vpop.permute.xlu0 %947
      %951 = vset.pattern.permute.xlu0 0
      %952 = vperm.xlu0 %951, %v780
      %v953 = vpop.permute.xlu0 %952
      %v955 = vmul.f32 %v802, %v948
      %v956 = vmul.f32 %v803, %v948
      %v957 = vmul.f32 %v804, %v953
      %v958 = vmul.f32 %v805, %v953
      %v959 = vadd.f32 %v955, 0.0
      %v960 = vadd.f32 %v956, 0.0
      %v961 = vadd.f32 %v957, 0.0
      %v962 = vadd.f32 %v958, 0.0
      %963 = vset.pattern.permute.xlu0 1
      %964 = vperm.xlu0 %963, %v779
      %v965 = vpop.permute.xlu0 %964
      %967 = vset.pattern.permute.xlu0 1
      %968 = vperm.xlu0 %967, %v780
      %v969 = vpop.permute.xlu0 %968
      %v971 = vmul.f32 %v821, %v965
      %v972 = vmul.f32 %v815, %v965
      %v973 = vmul.f32 %v822, %v969
      %v974 = vmul.f32 %v816, %v969
      %v975 = vadd.f32 %v959, %v971
      %v976 = vadd.f32 %v960, %v972
      %v977 = vadd.f32 %v961, %v973
      %v978 = vadd.f32 %v962, %v974
      %979 = vset.pattern.permute.xlu0 2
      %980 = vperm.xlu0 %979, %v779
      %v981 = vpop.permute.xlu0 %980
      %983 = vset.pattern.permute.xlu0 2
      %984 = vperm.xlu0 %983, %v780
      %v985 = vpop.permute.xlu0 %984
      %v987 = vmul.f32 %v840, %v981
      %v988 = vmul.f32 %v841, %v981
      %v989 = vmul.f32 %v842, %v985
      %v990 = vmul.f32 %v843, %v985
      %v991 = vadd.f32 %v975, %v987
      %v992 = vadd.f32 %v976, %v988
      %v993 = vadd.f32 %v977, %v989
      %v994 = vadd.f32 %v978, %v990
      %995 = vset.pattern.permute.xlu0 3
      %996 = vperm.xlu0 %995, %v779
      %v997 = vpop.permute.xlu0 %996
      %999 = vset.pattern.permute.xlu0 3
      %1000 = vperm.xlu0 %999, %v780
      %v1001 = vpop.permute.xlu0 %1000
      %v1003 = vmul.f32 %v861, %v997
      %v1004 = vmul.f32 %v862, %v997
      %v1005 = vmul.f32 %v863, %v1001
      %v1006 = vmul.f32 %v864, %v1001
      %v1007 = vadd.f32 %v991, %v1003
      %v1008 = vadd.f32 %v992, %v1004
      %v1009 = vadd.f32 %v993, %v1005
      %v1010 = vadd.f32 %v994, %v1006
      %1011 = vset.pattern.permute.xlu0 4
      %1012 = vperm.xlu0 %1011, %v779
      %v1013 = vpop.permute.xlu0 %1012
      %1015 = vset.pattern.permute.xlu0 4
      %1016 = vperm.xlu0 %1015, %v780
      %v1017 = vpop.permute.xlu0 %1016
      %v1019 = vmul.f32 %v775, %v1013
      %v1020 = vmul.f32 %v776, %v1013
      %v1021 = vmul.f32 %v777, %v1017
      %v1022 = vmul.f32 %v778, %v1017
      %v1023 = vadd.f32 %v1007, %v1019
      %v1024 = vadd.f32 %v1008, %v1020
      %v1025 = vadd.f32 %v1009, %v1021
      %v1026 = vadd.f32 %v1010, %v1022
      %1027 = vset.pattern.permute.xlu0 5
      %1028 = vperm.xlu0 %1027, %v779
      %v1029 = vpop.permute.xlu0 %1028
      %1031 = vset.pattern.permute.xlu0 5
      %1032 = vperm.xlu0 %1031, %v780
      %v1033 = vpop.permute.xlu0 %1032
      %v1035 = vmul.f32 %v882, %v1029
      %v1036 = vmul.f32 %v883, %v1029
      %v1037 = vmul.f32 %v884, %v1033
      %v1038 = vmul.f32 %v885, %v1033
      %v1039 = vadd.f32 %v1023, %v1035
      %v1040 = vadd.f32 %v1024, %v1036
      %v1041 = vadd.f32 %v1025, %v1037
      %v1042 = vadd.f32 %v1026, %v1038
      %1043 = vset.pattern.permute.xlu0 6
      %1044 = vperm.xlu0 %1043, %v779
      %v1045 = vpop.permute.xlu0 %1044
      %1047 = vset.pattern.permute.xlu0 6
      %1048 = vperm.xlu0 %1047, %v780
      %v1049 = vpop.permute.xlu0 %1048
      %v1051 = vmul.f32 %v903, %v1045
      %v1052 = vmul.f32 %v904, %v1045
      %v1053 = vmul.f32 %v905, %v1049
      %v1054 = vmul.f32 %v906, %v1049
      %v1055 = vadd.f32 %v1039, %v1051
      %v1056 = vadd.f32 %v1040, %v1052
      %v1057 = vadd.f32 %v1041, %v1053
      %v1058 = vadd.f32 %v1042, %v1054
      %1059 = vset.pattern.permute.xlu0 7
      %1060 = vperm.xlu0 %1059, %v779
      %v1061 = vpop.permute.xlu0 %1060
      %1063 = vset.pattern.permute.xlu0 7
      %1064 = vperm.xlu0 %1063, %v780
      %v1065 = vpop.permute.xlu0 %1064
      %v1067 = vmul.f32 %v916, %v1061
      %v1068 = vmul.f32 %v922, %v1061
      %v1069 = vmul.f32 %v917, %v1065
      %v1070 = vmul.f32 %v923, %v1065
      %v1071 = vadd.f32 %v1055, %v1067
      %v1072 = vadd.f32 %v1056, %v1068
      %v1073 = vadd.f32 %v1057, %v1069
      %v1074 = vadd.f32 %v1058, %v1070
      %1075 = vset.pattern.permute.xlu0 8
      %1076 = vperm.xlu0 %1075, %v779
      %v1077 = vpop.permute.xlu0 %1076
      %1079 = vset.pattern.permute.xlu0 8
      %1080 = vperm.xlu0 %1079, %v780
      %v1081 = vpop.permute.xlu0 %1080
      %v1083 = vmul.f32 %v941, %v1077
      %v1084 = vmul.f32 %v942, %v1077
      %v1085 = vmul.f32 %v943, %v1081
      %v1086 = vmul.f32 %v944, %v1081
      %v1087 = vadd.f32 %v1071, %v1083
      %v1088 = vadd.f32 %v1072, %v1084
      %v1089 = vadd.f32 %v1073, %v1085
      %v1090 = vadd.f32 %v1074, %v1086
      %v1091 = vld [vmem:[%s4] sm:$0xff]
      %v1092 = vld [vmem:[%s4 + $0x8] sm:$0xff]
      %1094 = vset.pattern.permute.xlu0 0
      %1095 = vperm.xlu0 %1094, %v1091
      %v1096 = vpop.permute.xlu0 %1095
      %1099 = vset.pattern.permute.xlu0 0
      %1100 = vperm.xlu0 %1099, %v1092
      %v1101 = vpop.permute.xlu0 %1100
      %v1103 = vadd.f32 %v1087, %v1096
      %v1104 = vadd.f32 %v1088, %v1096
      %v1105 = vadd.f32 %v1089, %v1101
      %v1106 = vadd.f32 %v1090, %v1101
      %v1107 = vmax.f32 %v1103, 0.0
      %v1108 = vmax.f32 %v1104, 0.0
      %v1109 = vmax.f32 %v1105, 0.0
      %v1110 = vmax.f32 %v1106, 0.0
      %v1111 = vld [vmem:[%s5] sm:$0xff]
      %v1112 = vld [vmem:[%s5 + $0x8] sm:$0xff]
      %v1113 = vld [vmem:[%s6] sm:$0xff]
      %v1114 = vld [vmem:[%s6 + $0x8] sm:$0xff]
      %1116 = vset.pattern.permute.xlu0 0
      %1117 = vperm.xlu0 %1116, %v1113
      %v1118 = vpop.permute.xlu0 %1117
      %1121 = vset.pattern.permute.xlu0 0
      %1122 = vperm.xlu0 %1121, %v1114
      %v1123 = vpop.permute.xlu0 %1122
      %v1126 = vsel %vm814, %v1111, 0
      %v1129 = vsel %vm814, %v1112, 0
      %1131 = vmatprep.subr.mxu0 0.0
      %1132 = vmatpush1.msra.mxu0 0.0
      %1133 = vmatprep.subr.mxu0 0.0
      %1134 = vmatpush1.msra.mxu0 0.0
      %1135 = vmatprep.subr.mxu0 0.0
      %1136 = vmatpush1.msra.mxu0 0.0
      %1137 = vmatprep.subr.mxu0 0.0
      %1138 = vmatpush1.msra.mxu0 0.0
      %1139 = vmatprep.subr.mxu0 0.0
      %1140 = vmatpush1.msra.mxu0 0.0
      %1141 = vmatprep.subr.mxu0 0.0
      %1142 = vmatpush1.msra.mxu0 0.0
      %1143 = vmatprep.subr.mxu0 0.0
      %1144 = vmatpush1.msra.mxu0 0.0
      %1145 = vmatprep.subr.mxu0 0.0
      %1146 = vmatpush1.msra.mxu0 0.0
      %1147 = vmatprep.subr.mxu0 0.0
      %1148 = vmatpush1.msra.mxu0 0.0
      %1149 = vmatprep.subr.mxu0 0.0
      %1150 = vmatpush1.msra.mxu0 0.0
      %1151 = vmatprep.subr.mxu0 0.0
      %1152 = vmatpush1.msra.mxu0 0.0
      %1153 = vmatprep.subr.mxu0 0.0
      %1154 = vmatpush1.msra.mxu0 0.0
      %1155 = vmatprep.subr.mxu0 0.0
      %1156 = vmatpush1.msra.mxu0 0.0
      %1157 = vmatprep.subr.mxu0 0.0
      %1158 = vmatpush1.msra.mxu0 0.0
      %1159 = vmatprep.subr.mxu0 %v1110
      %1160 = vmatpush1.msra.mxu0 %v1109
      %1161 = vmatprep.subr.mxu0 %v1108
      %1162 = vmatpush1.msra.mxu0 %v1107
      %1163 = vmatprep.subr.mxu0 0.0
      %1164 = vmatpush2.msra.mxu0 0.0
      %1165 = vmatprep.subr.mxu0 0.0
      %1166 = vmatpush2.msra.mxu0 0.0
      %1167 = vmatprep.subr.mxu0 0.0
      %1168 = vmatpush2.msra.mxu0 0.0
      %1169 = vmatprep.subr.mxu0 0.0
      %1170 = vmatpush2.msra.mxu0 0.0
      %1171 = vmatprep.subr.mxu0 0.0
      %1172 = vmatpush2.msra.mxu0 0.0
      %1173 = vmatprep.subr.mxu0 0.0
      %1174 = vmatpush2.msra.mxu0 0.0
      %1175 = vmatprep.subr.mxu0 0.0
      %1176 = vmatpush2.msra.mxu0 0.0
      %1177 = vmatprep.subr.mxu0 0.0
      %1178 = vmatpush2.msra.mxu0 0.0
      %1179 = vmatprep.subr.mxu0 0.0
      %1180 = vmatpush2.msra.mxu0 0.0
      %1181 = vmatprep.subr.mxu0 0.0
      %1182 = vmatpush2.msra.mxu0 0.0
      %1183 = vmatprep.subr.mxu0 0.0
      %1184 = vmatpush2.msra.mxu0 0.0
      %1185 = vmatprep.subr.mxu0 0.0
      %1186 = vmatpush2.msra.mxu0 0.0
      %1187 = vmatprep.subr.mxu0 0.0
      %1188 = vmatpush2.msra.mxu0 0.0
      %1189 = vmatprep.subr.mxu0 0.0
      %1190 = vmatpush2.msra.mxu0 0.0
      %1191 = vmatprep.subr.mxu0 0.0
      %1192 = vmatpush2.msra.mxu0 0.0
      %1193 = vmatprep.subr.mxu0 0.0
      %1194 = vmatpush2.msra.mxu0 0.0
      %1195 = vmatprep.mubr.f32.mxu0 0.0
      %1196 = vmatmul.mubr.f32.gmra.mxu0 %v1126
      %v1197 = vpop.f32.mrf.mxu0
      %v1198 = vadd.f32 %v1118, %v1197
      %v1199 = vpop.f32.mrf.mxu0
      %v1200 = vadd.f32 %v1118, %v1199
      %1201 = vmatprep.mubr.f32.mxu0 0.0
      %1202 = vmatmul.mubr.f32.gmra.mxu0 %v1129
      %v1203 = vpop.f32.mrf.mxu0
      %v1204 = vadd.f32 %v1123, %v1203
      %v1205 = vpop.f32.mrf.mxu0
      %v1206 = vadd.f32 %v1123, %v1205
      %1207 = vdwg.mxu0
      %v1208 = vmax.f32 %v1198, 0.0
      %v1209 = vmax.f32 %v1200, 0.0
      %v1210 = vmax.f32 %v1204, 0.0
      %v1211 = vmax.f32 %v1206, 0.0
      %v1212 = vld [vmem:[%s7] sm:$0xf]
      %v1213 = vld [vmem:[%s8] sm:$0xf]
      %1215 = vset.pattern.permute.xlu0 0
      %1216 = vperm.xlu0 %1215, %v1213
      %v1217 = vpop.permute.xlu0 %1216
      %v1220 = vsel %vm814, %v1212, 0
      %1222 = vmatprep.subr.mxu0 0.0
      %1223 = vmatpush1.msra.mxu0 0.0
      %1224 = vmatprep.subr.mxu0 0.0
      %1225 = vmatpush1.msra.mxu0 0.0
      %1226 = vmatprep.subr.mxu0 0.0
      %1227 = vmatpush1.msra.mxu0 0.0
      %1228 = vmatprep.subr.mxu0 0.0
      %1229 = vmatpush1.msra.mxu0 0.0
      %1230 = vmatprep.subr.mxu0 0.0
      %1231 = vmatpush1.msra.mxu0 0.0
      %1232 = vmatprep.subr.mxu0 0.0
      %1233 = vmatpush1.msra.mxu0 0.0
      %1234 = vmatprep.subr.mxu0 0.0
      %1235 = vmatpush1.msra.mxu0 0.0
      %1236 = vmatprep.subr.mxu0 0.0
      %1237 = vmatpush1.msra.mxu0 0.0
      %1238 = vmatprep.subr.mxu0 0.0
      %1239 = vmatpush1.msra.mxu0 0.0
      %1240 = vmatprep.subr.mxu0 0.0
      %1241 = vmatpush1.msra.mxu0 0.0
      %1242 = vmatprep.subr.mxu0 0.0
      %1243 = vmatpush1.msra.mxu0 0.0
      %1244 = vmatprep.subr.mxu0 0.0
      %1245 = vmatpush1.msra.mxu0 0.0
      %1246 = vmatprep.subr.mxu0 0.0
      %1247 = vmatpush1.msra.mxu0 0.0
      %1248 = vmatprep.subr.mxu0 0.0
      %1249 = vmatpush1.msra.mxu0 0.0
      %1250 = vmatprep.subr.mxu0 %v1211
      %1251 = vmatpush1.msra.mxu0 %v1210
      %1252 = vmatprep.subr.mxu0 %v1209
      %1253 = vmatpush1.msra.mxu0 %v1208
      %1254 = vmatprep.subr.mxu0 0.0
      %1255 = vmatpush2.msra.mxu0 0.0
      %1256 = vmatprep.subr.mxu0 0.0
      %1257 = vmatpush2.msra.mxu0 0.0
      %1258 = vmatprep.subr.mxu0 0.0
      %1259 = vmatpush2.msra.mxu0 0.0
      %1260 = vmatprep.subr.mxu0 0.0
      %1261 = vmatpush2.msra.mxu0 0.0
      %1262 = vmatprep.subr.mxu0 0.0
      %1263 = vmatpush2.msra.mxu0 0.0
      %1264 = vmatprep.subr.mxu0 0.0
      %1265 = vmatpush2.msra.mxu0 0.0
      %1266 = vmatprep.subr.mxu0 0.0
      %1267 = vmatpush2.msra.mxu0 0.0
      %1268 = vmatprep.subr.mxu0 0.0
      %1269 = vmatpush2.msra.mxu0 0.0
      %1270 = vmatprep.subr.mxu0 0.0
      %1271 = vmatpush2.msra.mxu0 0.0
      %1272 = vmatprep.subr.mxu0 0.0
      %1273 = vmatpush2.msra.mxu0 0.0
      %1274 = vmatprep.subr.mxu0 0.0
      %1275 = vmatpush2.msra.mxu0 0.0
      %1276 = vmatprep.subr.mxu0 0.0
      %1277 = vmatpush2.msra.mxu0 0.0
      %1278 = vmatprep.subr.mxu0 0.0
      %1279 = vmatpush2.msra.mxu0 0.0
      %1280 = vmatprep.subr.mxu0 0.0
      %1281 = vmatpush2.msra.mxu0 0.0
      %1282 = vmatprep.subr.mxu0 0.0
      %1283 = vmatpush2.msra.mxu0 0.0
      %1284 = vmatprep.subr.mxu0 0.0
      %1285 = vmatpush2.msra.mxu0 0.0
      %1286 = vmatprep.mubr.f32.mxu0 0.0
      %1287 = vmatmul.mubr.f32.gmra.mxu0 %v1220
      %v1288 = vpop.f32.mrf.mxu0
      %v1289 = vadd.f32 %v1217, %v1288
      %v1290 = vpop.f32.mrf.mxu0
      %v1291 = vadd.f32 %v1217, %v1290
      %1292 = vdwg.mxu0
      %v1294 = vadd.f32 %v1289, %v669
      %v1295 = vadd.f32 %v1291, %v685
      %v1296 = vld [vmem:[%s9] sm:$0xff]
      %v1297 = vld [vmem:[%s9 + $0x8] sm:$0xff]
      %v1298 = vld [vmem:[%s9 + $0x10] sm:$0xff]
      %v1299 = vld [vmem:[%s9 + $0x18] sm:$0xff]
      %v1300 = vld [vmem:[%s9 + $0x20] sm:$0xff]
      %v1301 = vld [vmem:[%s9 + $0x28] sm:$0xff]
      %v1302 = vld [vmem:[%s9 + $0x30] sm:$0xff]
      %v1303 = vld [vmem:[%s9 + $0x38] sm:$0xff]
      %v1304 = vld [vmem:[%s9 + $0x40] sm:$0xff]
      %1307 = vrot.lane.b32.xlu0 %v1294, 17
      %v1308 = vpop.permute.xlu0 %1307
      %1309 = vrot.lane.b32.xlu0 %v1295, 17
      %v1310 = vpop.permute.xlu0 %1309
      %v1311 = vsel %vm793, %v1308, %v1310
      %v1314 = vsel %vm793, 0.0, %v1308
      %v1315 = vmul.f32 %v1314, %v661
      %v1316 = vmul.f32 %v1311, %v662
      %1317 = vrot.lane.b32.xlu0 %v1294, 16
      %v1318 = vpop.permute.xlu0 %1317
      %1319 = vrot.lane.b32.xlu0 %v1295, 16
      %v1320 = vpop.permute.xlu0 %1319
      %v1321 = vsel %vm814, %v1318, %v1320
      %v1323 = vsel %vm814, 0.0, %v1318
      %1324 = vrot.lane.b32.xlu0 %v1294, 15
      %v1325 = vpop.permute.xlu0 %1324
      %1326 = vrot.lane.b32.xlu0 %v1295, 15
      %v1327 = vpop.permute.xlu0 %1326
      %v1328 = vsel %vm831, %v1325, %v1327
      %v1331 = vsel %vm831, 0.0, %v1325
      %v1332 = vmul.f32 %v1331, %v667
      %v1333 = vmul.f32 %v1328, %v668
      %1334 = vrot.lane.b32.xlu0 %v1294, 1
      %v1335 = vpop.permute.xlu0 %1334
      %1336 = vrot.lane.b32.xlu0 %v1295, 1
      %v1337 = vpop.permute.xlu0 %1336
      %v1338 = vsel %vm852, %v1335, %v1337
      %v1341 = vsel %vm852, 0.0, %v1335
      %v1342 = vmul.f32 %v1341, %v661
      %v1343 = vmul.f32 %v1338, %v662
      %1344 = vrot.lane.b32.xlu0 %v1294, 127
      %v1345 = vpop.permute.xlu0 %1344
      %1346 = vrot.lane.b32.xlu0 %v1295, 127
      %v1347 = vpop.permute.xlu0 %1346
      %v1348 = vsel %vm873, %v1345, %v1347
      %v1351 = vsel %vm873, %v1347, 0.0
      %v1352 = vmul.f32 %v1348, %v667
      %v1353 = vmul.f32 %v1351, %v668
      %1354 = vrot.lane.b32.xlu0 %v1294, 113
      %v1355 = vpop.permute.xlu0 %1354
      %1356 = vrot.lane.b32.xlu0 %v1295, 113
      %v1357 = vpop.permute.xlu0 %1356
      %v1358 = vsel %vm894, %v1355, %v1357
      %v1361 = vsel %vm894, %v1357, 0.0
      %v1362 = vmul.f32 %v1358, %v661
      %v1363 = vmul.f32 %v1361, %v662
      %1364 = vrot.lane.b32.xlu0 %v1294, 112
      %v1365 = vpop.permute.xlu0 %1364
      %1366 = vrot.lane.b32.xlu0 %v1295, 112
      %v1367 = vpop.permute.xlu0 %1366
      %v1368 = vsel %vm915, %v1365, %v1367
      %v1370 = vsel %vm915, %v1367, 0.0
      %1371 = vrot.lane.b32.xlu0 %v1294, 111
      %v1372 = vpop.permute.xlu0 %1371
      %1373 = vrot.lane.b32.xlu0 %v1295, 111
      %v1374 = vpop.permute.xlu0 %1373
      %v1375 = vsel %vm932, %v1372, %v1374
      %v1378 = vsel %vm932, %v1374, 0.0
      %v1379 = vmul.f32 %v1375, %v667
      %v1380 = vmul.f32 %v1378, %v668
      %v1382 = vsel %vm686, %v1297, 0
      %v1385 = vsel %vm693, %v1323, 0
      %v1387 = vsel %vm693, %v1321, 0
      %1389 = vmatprep.subr.mxu0 0.0
      %1390 = vmatpush1.msra.mxu0 0.0
      %1391 = vmatprep.subr.mxu0 0.0
      %1392 = vmatpush1.msra.mxu0 0.0
      %1393 = vmatprep.subr.mxu0 0.0
      %1394 = vmatpush1.msra.mxu0 0.0
      %1395 = vmatprep.subr.mxu0 0.0
      %1396 = vmatpush1.msra.mxu0 0.0
      %1397 = vmatprep.subr.mxu0 0.0
      %1398 = vmatpush1.msra.mxu0 0.0
      %1399 = vmatprep.subr.mxu0 0.0
      %1400 = vmatpush1.msra.mxu0 0.0
      %1401 = vmatprep.subr.mxu0 0.0
      %1402 = vmatpush1.msra.mxu0 0.0
      %1403 = vmatprep.subr.mxu0 0.0
      %1404 = vmatpush1.msra.mxu0 0.0
      %1405 = vmatprep.subr.mxu0 0.0
      %1406 = vmatpush1.msra.mxu0 0.0
      %1407 = vmatprep.subr.mxu0 0.0
      %1408 = vmatpush1.msra.mxu0 0.0
      %1409 = vmatprep.subr.mxu0 0.0
      %1410 = vmatpush1.msra.mxu0 0.0
      %1411 = vmatprep.subr.mxu0 0.0
      %1412 = vmatpush1.msra.mxu0 0.0
      %1413 = vmatprep.subr.mxu0 0.0
      %1414 = vmatpush1.msra.mxu0 0.0
      %1415 = vmatprep.subr.mxu0 0.0
      %1416 = vmatpush1.msra.mxu0 0.0
      %1417 = vmatprep.subr.mxu0 0.0
      %1418 = vmatpush1.msra.mxu0 0.0
      %1419 = vmatprep.subr.mxu0 %v1387
      %1420 = vmatpush1.msra.mxu0 %v1385
      %1421 = vmatprep.subr.mxu0 0.0
      %1422 = vmatpush2.msra.mxu0 0.0
      %1423 = vmatprep.subr.mxu0 0.0
      %1424 = vmatpush2.msra.mxu0 0.0
      %1425 = vmatprep.subr.mxu0 0.0
      %1426 = vmatpush2.msra.mxu0 0.0
      %1427 = vmatprep.subr.mxu0 0.0
      %1428 = vmatpush2.msra.mxu0 0.0
      %1429 = vmatprep.subr.mxu0 0.0
      %1430 = vmatpush2.msra.mxu0 0.0
      %1431 = vmatprep.subr.mxu0 0.0
      %1432 = vmatpush2.msra.mxu0 0.0
      %1433 = vmatprep.subr.mxu0 0.0
      %1434 = vmatpush2.msra.mxu0 0.0
      %1435 = vmatprep.subr.mxu0 0.0
      %1436 = vmatpush2.msra.mxu0 0.0
      %1437 = vmatprep.subr.mxu0 0.0
      %1438 = vmatpush2.msra.mxu0 0.0
      %1439 = vmatprep.subr.mxu0 0.0
      %1440 = vmatpush2.msra.mxu0 0.0
      %1441 = vmatprep.subr.mxu0 0.0
      %1442 = vmatpush2.msra.mxu0 0.0
      %1443 = vmatprep.subr.mxu0 0.0
      %1444 = vmatpush2.msra.mxu0 0.0
      %1445 = vmatprep.subr.mxu0 0.0
      %1446 = vmatpush2.msra.mxu0 0.0
      %1447 = vmatprep.subr.mxu0 0.0
      %1448 = vmatpush2.msra.mxu0 0.0
      %1449 = vmatprep.subr.mxu0 0.0
      %1450 = vmatpush2.msra.mxu0 0.0
      %1451 = vmatprep.subr.mxu0 0.0
      %1452 = vmatpush2.msra.mxu0 0.0
      %1453 = vmatprep.mubr.f32.mxu0 0.0
      %1454 = vmatmul.mubr.f32.gmra.mxu0 %v1382
      %v1455 = vpop.f32.mrf.mxu0
      %v1456 = vadd.f32 0.0, %v1455
      %v1457 = vpop.f32.mrf.mxu0
      %v1458 = vadd.f32 0.0, %v1457
      %1459 = vdwg.mxu0
      %v1461 = vsel %vm686, %v1296, 0
      %v1464 = vsel %vm693, %v1315, 0
      %v1467 = vsel %vm693, %v1316, 0
      %1469 = vmatprep.subr.mxu0 0.0
      %1470 = vmatpush1.msra.mxu0 0.0
      %1471 = vmatprep.subr.mxu0 0.0
      %1472 = vmatpush1.msra.mxu0 0.0
      %1473 = vmatprep.subr.mxu0 0.0
      %1474 = vmatpush1.msra.mxu0 0.0
      %1475 = vmatprep.subr.mxu0 0.0
      %1476 = vmatpush1.msra.mxu0 0.0
      %1477 = vmatprep.subr.mxu0 0.0
      %1478 = vmatpush1.msra.mxu0 0.0
      %1479 = vmatprep.subr.mxu0 0.0
      %1480 = vmatpush1.msra.mxu0 0.0
      %1481 = vmatprep.subr.mxu0 0.0
      %1482 = vmatpush1.msra.mxu0 0.0
      %1483 = vmatprep.subr.mxu0 0.0
      %1484 = vmatpush1.msra.mxu0 0.0
      %1485 = vmatprep.subr.mxu0 0.0
      %1486 = vmatpush1.msra.mxu0 0.0
      %1487 = vmatprep.subr.mxu0 0.0
      %1488 = vmatpush1.msra.mxu0 0.0
      %1489 = vmatprep.subr.mxu0 0.0
      %1490 = vmatpush1.msra.mxu0 0.0
      %1491 = vmatprep.subr.mxu0 0.0
      %1492 = vmatpush1.msra.mxu0 0.0
      %1493 = vmatprep.subr.mxu0 0.0
      %1494 = vmatpush1.msra.mxu0 0.0
      %1495 = vmatprep.subr.mxu0 0.0
      %1496 = vmatpush1.msra.mxu0 0.0
      %1497 = vmatprep.subr.mxu0 0.0
      %1498 = vmatpush1.msra.mxu0 0.0
      %1499 = vmatprep.subr.mxu0 %v1467
      %1500 = vmatpush1.msra.mxu0 %v1464
      %1501 = vmatprep.subr.mxu0 0.0
      %1502 = vmatpush2.msra.mxu0 0.0
      %1503 = vmatprep.subr.mxu0 0.0
      %1504 = vmatpush2.msra.mxu0 0.0
      %1505 = vmatprep.subr.mxu0 0.0
      %1506 = vmatpush2.msra.mxu0 0.0
      %1507 = vmatprep.subr.mxu0 0.0
      %1508 = vmatpush2.msra.mxu0 0.0
      %1509 = vmatprep.subr.mxu0 0.0
      %1510 = vmatpush2.msra.mxu0 0.0
      %1511 = vmatprep.subr.mxu0 0.0
      %1512 = vmatpush2.msra.mxu0 0.0
      %1513 = vmatprep.subr.mxu0 0.0
      %1514 = vmatpush2.msra.mxu0 0.0
      %1515 = vmatprep.subr.mxu0 0.0
      %1516 = vmatpush2.msra.mxu0 0.0
      %1517 = vmatprep.subr.mxu0 0.0
      %1518 = vmatpush2.msra.mxu0 0.0
      %1519 = vmatprep.subr.mxu0 0.0
      %1520 = vmatpush2.msra.mxu0 0.0
      %1521 = vmatprep.subr.mxu0 0.0
      %1522 = vmatpush2.msra.mxu0 0.0
      %1523 = vmatprep.subr.mxu0 0.0
      %1524 = vmatpush2.msra.mxu0 0.0
      %1525 = vmatprep.subr.mxu0 0.0
      %1526 = vmatpush2.msra.mxu0 0.0
      %1527 = vmatprep.subr.mxu0 0.0
      %1528 = vmatpush2.msra.mxu0 0.0
      %1529 = vmatprep.subr.mxu0 0.0
      %1530 = vmatpush2.msra.mxu0 0.0
      %1531 = vmatprep.subr.mxu0 0.0
      %1532 = vmatpush2.msra.mxu0 0.0
      %1533 = vmatprep.mubr.f32.mxu0 0.0
      %1534 = vmatmul.mubr.f32.gmra.mxu0 %v1461
      %v1535 = vpop.f32.mrf.mxu0
      %v1536 = vadd.f32 %v1456, %v1535
      %v1537 = vpop.f32.mrf.mxu0
      %v1538 = vadd.f32 %v1458, %v1537
      %1539 = vdwg.mxu0
      %v1541 = vsel %vm686, %v1298, 0
      %v1544 = vsel %vm693, %v1332, 0
      %v1547 = vsel %vm693, %v1333, 0
      %1549 = vmatprep.subr.mxu0 0.0
      %1550 = vmatpush1.msra.mxu0 0.0
      %1551 = vmatprep.subr.mxu0 0.0
      %1552 = vmatpush1.msra.mxu0 0.0
      %1553 = vmatprep.subr.mxu0 0.0
      %1554 = vmatpush1.msra.mxu0 0.0
      %1555 = vmatprep.subr.mxu0 0.0
      %1556 = vmatpush1.msra.mxu0 0.0
      %1557 = vmatprep.subr.mxu0 0.0
      %1558 = vmatpush1.msra.mxu0 0.0
      %1559 = vmatprep.subr.mxu0 0.0
      %1560 = vmatpush1.msra.mxu0 0.0
      %1561 = vmatprep.subr.mxu0 0.0
      %1562 = vmatpush1.msra.mxu0 0.0
      %1563 = vmatprep.subr.mxu0 0.0
      %1564 = vmatpush1.msra.mxu0 0.0
      %1565 = vmatprep.subr.mxu0 0.0
      %1566 = vmatpush1.msra.mxu0 0.0
      %1567 = vmatprep.subr.mxu0 0.0
      %1568 = vmatpush1.msra.mxu0 0.0
      %1569 = vmatprep.subr.mxu0 0.0
      %1570 = vmatpush1.msra.mxu0 0.0
      %1571 = vmatprep.subr.mxu0 0.0
      %1572 = vmatpush1.msra.mxu0 0.0
      %1573 = vmatprep.subr.mxu0 0.0
      %1574 = vmatpush1.msra.mxu0 0.0
      %1575 = vmatprep.subr.mxu0 0.0
      %1576 = vmatpush1.msra.mxu0 0.0
      %1577 = vmatprep.subr.mxu0 0.0
      %1578 = vmatpush1.msra.mxu0 0.0
      %1579 = vmatprep.subr.mxu0 %v1547
      %1580 = vmatpush1.msra.mxu0 %v1544
      %1581 = vmatprep.subr.mxu0 0.0
      %1582 = vmatpush2.msra.mxu0 0.0
      %1583 = vmatprep.subr.mxu0 0.0
      %1584 = vmatpush2.msra.mxu0 0.0
      %1585 = vmatprep.subr.mxu0 0.0
      %1586 = vmatpush2.msra.mxu0 0.0
      %1587 = vmatprep.subr.mxu0 0.0
      %1588 = vmatpush2.msra.mxu0 0.0
      %1589 = vmatprep.subr.mxu0 0.0
      %1590 = vmatpush2.msra.mxu0 0.0
      %1591 = vmatprep.subr.mxu0 0.0
      %1592 = vmatpush2.msra.mxu0 0.0
      %1593 = vmatprep.subr.mxu0 0.0
      %1594 = vmatpush2.msra.mxu0 0.0
      %1595 = vmatprep.subr.mxu0 0.0
      %1596 = vmatpush2.msra.mxu0 0.0
      %1597 = vmatprep.subr.mxu0 0.0
      %1598 = vmatpush2.msra.mxu0 0.0
      %1599 = vmatprep.subr.mxu0 0.0
      %1600 = vmatpush2.msra.mxu0 0.0
      %1601 = vmatprep.subr.mxu0 0.0
      %1602 = vmatpush2.msra.mxu0 0.0
      %1603 = vmatprep.subr.mxu0 0.0
      %1604 = vmatpush2.msra.mxu0 0.0
      %1605 = vmatprep.subr.mxu0 0.0
      %1606 = vmatpush2.msra.mxu0 0.0
      %1607 = vmatprep.subr.mxu0 0.0
      %1608 = vmatpush2.msra.mxu0 0.0
      %1609 = vmatprep.subr.mxu0 0.0
      %1610 = vmatpush2.msra.mxu0 0.0
      %1611 = vmatprep.subr.mxu0 0.0
      %1612 = vmatpush2.msra.mxu0 0.0
      %1613 = vmatprep.mubr.f32.mxu0 0.0
      %1614 = vmatmul.mubr.f32.gmra.mxu0 %v1541
      %v1615 = vpop.f32.mrf.mxu0
      %v1616 = vadd.f32 0.0, %v1615
      %v1617 = vpop.f32.mrf.mxu0
      %v1618 = vadd.f32 0.0, %v1617
      %1619 = vdwg.mxu0
      %v1620 = vadd.f32 %v1536, %v1616
      %v1621 = vadd.f32 %v1538, %v1618
      %v1623 = vsel %vm686, %v1299, 0
      %v1626 = vsel %vm693, %v1342, 0
      %v1629 = vsel %vm693, %v1343, 0
      %1631 = vmatprep.subr.mxu0 0.0
      %1632 = vmatpush1.msra.mxu0 0.0
      %1633 = vmatprep.subr.mxu0 0.0
      %1634 = vmatpush1.msra.mxu0 0.0
      %1635 = vmatprep.subr.mxu0 0.0
      %1636 = vmatpush1.msra.mxu0 0.0
      %1637 = vmatprep.subr.mxu0 0.0
      %1638 = vmatpush1.msra.mxu0 0.0
      %1639 = vmatprep.subr.mxu0 0.0
      %1640 = vmatpush1.msra.mxu0 0.0
      %1641 = vmatprep.subr.mxu0 0.0
      %1642 = vmatpush1.msra.mxu0 0.0
      %1643 = vmatprep.subr.mxu0 0.0
      %1644 = vmatpush1.msra.mxu0 0.0
      %1645 = vmatprep.subr.mxu0 0.0
      %1646 = vmatpush1.msra.mxu0 0.0
      %1647 = vmatprep.subr.mxu0 0.0
      %1648 = vmatpush1.msra.mxu0 0.0
      %1649 = vmatprep.subr.mxu0 0.0
      %1650 = vmatpush1.msra.mxu0 0.0
      %1651 = vmatprep.subr.mxu0 0.0
      %1652 = vmatpush1.msra.mxu0 0.0
      %1653 = vmatprep.subr.mxu0 0.0
      %1654 = vmatpush1.msra.mxu0 0.0
      %1655 = vmatprep.subr.mxu0 0.0
      %1656 = vmatpush1.msra.mxu0 0.0
      %1657 = vmatprep.subr.mxu0 0.0
      %1658 = vmatpush1.msra.mxu0 0.0
      %1659 = vmatprep.subr.mxu0 0.0
      %1660 = vmatpush1.msra.mxu0 0.0
      %1661 = vmatprep.subr.mxu0 %v1629
      %1662 = vmatpush1.msra.mxu0 %v1626
      %1663 = vmatprep.subr.mxu0 0.0
      %1664 = vmatpush2.msra.mxu0 0.0
      %1665 = vmatprep.subr.mxu0 0.0
      %1666 = vmatpush2.msra.mxu0 0.0
      %1667 = vmatprep.subr.mxu0 0.0
      %1668 = vmatpush2.msra.mxu0 0.0
      %1669 = vmatprep.subr.mxu0 0.0
      %1670 = vmatpush2.msra.mxu0 0.0
      %1671 = vmatprep.subr.mxu0 0.0
      %1672 = vmatpush2.msra.mxu0 0.0
      %1673 = vmatprep.subr.mxu0 0.0
      %1674 = vmatpush2.msra.mxu0 0.0
      %1675 = vmatprep.subr.mxu0 0.0
      %1676 = vmatpush2.msra.mxu0 0.0
      %1677 = vmatprep.subr.mxu0 0.0
      %1678 = vmatpush2.msra.mxu0 0.0
      %1679 = vmatprep.subr.mxu0 0.0
      %1680 = vmatpush2.msra.mxu0 0.0
      %1681 = vmatprep.subr.mxu0 0.0
      %1682 = vmatpush2.msra.mxu0 0.0
      %1683 = vmatprep.subr.mxu0 0.0
      %1684 = vmatpush2.msra.mxu0 0.0
      %1685 = vmatprep.subr.mxu0 0.0
      %1686 = vmatpush2.msra.mxu0 0.0
      %1687 = vmatprep.subr.mxu0 0.0
      %1688 = vmatpush2.msra.mxu0 0.0
      %1689 = vmatprep.subr.mxu0 0.0
      %1690 = vmatpush2.msra.mxu0 0.0
      %1691 = vmatprep.subr.mxu0 0.0
      %1692 = vmatpush2.msra.mxu0 0.0
      %1693 = vmatprep.subr.mxu0 0.0
      %1694 = vmatpush2.msra.mxu0 0.0
      %1695 = vmatprep.mubr.f32.mxu0 0.0
      %1696 = vmatmul.mubr.f32.gmra.mxu0 %v1623
      %v1697 = vpop.f32.mrf.mxu0
      %v1698 = vadd.f32 0.0, %v1697
      %v1699 = vpop.f32.mrf.mxu0
      %v1700 = vadd.f32 0.0, %v1699
      %1701 = vdwg.mxu0
      %v1702 = vadd.f32 %v1620, %v1698
      %v1703 = vadd.f32 %v1621, %v1700
      %v1705 = vsel %vm686, %v1300, 0
      %v1707 = vsel %vm693, %v1294, 0
      %v1709 = vsel %vm693, %v1295, 0
      %1711 = vmatprep.subr.mxu0 0.0
      %1712 = vmatpush1.msra.mxu0 0.0
      %1713 = vmatprep.subr.mxu0 0.0
      %1714 = vmatpush1.msra.mxu0 0.0
      %1715 = vmatprep.subr.mxu0 0.0
      %1716 = vmatpush1.msra.mxu0 0.0
      %1717 = vmatprep.subr.mxu0 0.0
      %1718 = vmatpush1.msra.mxu0 0.0
      %1719 = vmatprep.subr.mxu0 0.0
      %1720 = vmatpush1.msra.mxu0 0.0
      %1721 = vmatprep.subr.mxu0 0.0
      %1722 = vmatpush1.msra.mxu0 0.0
      %1723 = vmatprep.subr.mxu0 0.0
      %1724 = vmatpush1.msra.mxu0 0.0
      %1725 = vmatprep.subr.mxu0 0.0
      %1726 = vmatpush1.msra.mxu0 0.0
      %1727 = vmatprep.subr.mxu0 0.0
      %1728 = vmatpush1.msra.mxu0 0.0
      %1729 = vmatprep.subr.mxu0 0.0
      %1730 = vmatpush1.msra.mxu0 0.0
      %1731 = vmatprep.subr.mxu0 0.0
      %1732 = vmatpush1.msra.mxu0 0.0
      %1733 = vmatprep.subr.mxu0 0.0
      %1734 = vmatpush1.msra.mxu0 0.0
      %1735 = vmatprep.subr.mxu0 0.0
      %1736 = vmatpush1.msra.mxu0 0.0
      %1737 = vmatprep.subr.mxu0 0.0
      %1738 = vmatpush1.msra.mxu0 0.0
      %1739 = vmatprep.subr.mxu0 0.0
      %1740 = vmatpush1.msra.mxu0 0.0
      %1741 = vmatprep.subr.mxu0 %v1709
      %1742 = vmatpush1.msra.mxu0 %v1707
      %1743 = vmatprep.subr.mxu0 0.0
      %1744 = vmatpush2.msra.mxu0 0.0
      %1745 = vmatprep.subr.mxu0 0.0
      %1746 = vmatpush2.msra.mxu0 0.0
      %1747 = vmatprep.subr.mxu0 0.0
      %1748 = vmatpush2.msra.mxu0 0.0
      %1749 = vmatprep.subr.mxu0 0.0
      %1750 = vmatpush2.msra.mxu0 0.0
      %1751 = vmatprep.subr.mxu0 0.0
      %1752 = vmatpush2.msra.mxu0 0.0
      %1753 = vmatprep.subr.mxu0 0.0
      %1754 = vmatpush2.msra.mxu0 0.0
      %1755 = vmatprep.subr.mxu0 0.0
      %1756 = vmatpush2.msra.mxu0 0.0
      %1757 = vmatprep.subr.mxu0 0.0
      %1758 = vmatpush2.msra.mxu0 0.0
      %1759 = vmatprep.subr.mxu0 0.0
      %1760 = vmatpush2.msra.mxu0 0.0
      %1761 = vmatprep.subr.mxu0 0.0
      %1762 = vmatpush2.msra.mxu0 0.0
      %1763 = vmatprep.subr.mxu0 0.0
      %1764 = vmatpush2.msra.mxu0 0.0
      %1765 = vmatprep.subr.mxu0 0.0
      %1766 = vmatpush2.msra.mxu0 0.0
      %1767 = vmatprep.subr.mxu0 0.0
      %1768 = vmatpush2.msra.mxu0 0.0
      %1769 = vmatprep.subr.mxu0 0.0
      %1770 = vmatpush2.msra.mxu0 0.0
      %1771 = vmatprep.subr.mxu0 0.0
      %1772 = vmatpush2.msra.mxu0 0.0
      %1773 = vmatprep.subr.mxu0 0.0
      %1774 = vmatpush2.msra.mxu0 0.0
      %1775 = vmatprep.mubr.f32.mxu0 0.0
      %1776 = vmatmul.mubr.f32.gmra.mxu0 %v1705
      %v1777 = vpop.f32.mrf.mxu0
      %v1778 = vadd.f32 0.0, %v1777
      %v1779 = vpop.f32.mrf.mxu0
      %v1780 = vadd.f32 0.0, %v1779
      %1781 = vdwg.mxu0
      %v1782 = vadd.f32 %v1702, %v1778
      %v1783 = vadd.f32 %v1703, %v1780
      %v1785 = vsel %vm686, %v1301, 0
      %v1788 = vsel %vm693, %v1352, 0
      %v1791 = vsel %vm693, %v1353, 0
      %1793 = vmatprep.subr.mxu0 0.0
      %1794 = vmatpush1.msra.mxu0 0.0
      %1795 = vmatprep.subr.mxu0 0.0
      %1796 = vmatpush1.msra.mxu0 0.0
      %1797 = vmatprep.subr.mxu0 0.0
      %1798 = vmatpush1.msra.mxu0 0.0
      %1799 = vmatprep.subr.mxu0 0.0
      %1800 = vmatpush1.msra.mxu0 0.0
      %1801 = vmatprep.subr.mxu0 0.0
      %1802 = vmatpush1.msra.mxu0 0.0
      %1803 = vmatprep.subr.mxu0 0.0
      %1804 = vmatpush1.msra.mxu0 0.0
      %1805 = vmatprep.subr.mxu0 0.0
      %1806 = vmatpush1.msra.mxu0 0.0
      %1807 = vmatprep.subr.mxu0 0.0
      %1808 = vmatpush1.msra.mxu0 0.0
      %1809 = vmatprep.subr.mxu0 0.0
      %1810 = vmatpush1.msra.mxu0 0.0
      %1811 = vmatprep.subr.mxu0 0.0
      %1812 = vmatpush1.msra.mxu0 0.0
      %1813 = vmatprep.subr.mxu0 0.0
      %1814 = vmatpush1.msra.mxu0 0.0
      %1815 = vmatprep.subr.mxu0 0.0
      %1816 = vmatpush1.msra.mxu0 0.0
      %1817 = vmatprep.subr.mxu0 0.0
      %1818 = vmatpush1.msra.mxu0 0.0
      %1819 = vmatprep.subr.mxu0 0.0
      %1820 = vmatpush1.msra.mxu0 0.0
      %1821 = vmatprep.subr.mxu0 0.0
      %1822 = vmatpush1.msra.mxu0 0.0
      %1823 = vmatprep.subr.mxu0 %v1791
      %1824 = vmatpush1.msra.mxu0 %v1788
      %1825 = vmatprep.subr.mxu0 0.0
      %1826 = vmatpush2.msra.mxu0 0.0
      %1827 = vmatprep.subr.mxu0 0.0
      %1828 = vmatpush2.msra.mxu0 0.0
      %1829 = vmatprep.subr.mxu0 0.0
      %1830 = vmatpush2.msra.mxu0 0.0
      %1831 = vmatprep.subr.mxu0 0.0
      %1832 = vmatpush2.msra.mxu0 0.0
      %1833 = vmatprep.subr.mxu0 0.0
      %1834 = vmatpush2.msra.mxu0 0.0
      %1835 = vmatprep.subr.mxu0 0.0
      %1836 = vmatpush2.msra.mxu0 0.0
      %1837 = vmatprep.subr.mxu0 0.0
      %1838 = vmatpush2.msra.mxu0 0.0
      %1839 = vmatprep.subr.mxu0 0.0
      %1840 = vmatpush2.msra.mxu0 0.0
      %1841 = vmatprep.subr.mxu0 0.0
      %1842 = vmatpush2.msra.mxu0 0.0
      %1843 = vmatprep.subr.mxu0 0.0
      %1844 = vmatpush2.msra.mxu0 0.0
      %1845 = vmatprep.subr.mxu0 0.0
      %1846 = vmatpush2.msra.mxu0 0.0
      %1847 = vmatprep.subr.mxu0 0.0
      %1848 = vmatpush2.msra.mxu0 0.0
      %1849 = vmatprep.subr.mxu0 0.0
      %1850 = vmatpush2.msra.mxu0 0.0
      %1851 = vmatprep.subr.mxu0 0.0
      %1852 = vmatpush2.msra.mxu0 0.0
      %1853 = vmatprep.subr.mxu0 0.0
      %1854 = vmatpush2.msra.mxu0 0.0
      %1855 = vmatprep.subr.mxu0 0.0
      %1856 = vmatpush2.msra.mxu0 0.0
      %1857 = vmatprep.mubr.f32.mxu0 0.0
      %1858 = vmatmul.mubr.f32.gmra.mxu0 %v1785
      %v1859 = vpop.f32.mrf.mxu0
      %v1860 = vadd.f32 0.0, %v1859
      %v1861 = vpop.f32.mrf.mxu0
      %v1862 = vadd.f32 0.0, %v1861
      %1863 = vdwg.mxu0
      %v1864 = vadd.f32 %v1782, %v1860
      %v1865 = vadd.f32 %v1783, %v1862
      %v1867 = vsel %vm686, %v1302, 0
      %v1870 = vsel %vm693, %v1362, 0
      %v1873 = vsel %vm693, %v1363, 0
      %1875 = vmatprep.subr.mxu0 0.0
      %1876 = vmatpush1.msra.mxu0 0.0
      %1877 = vmatprep.subr.mxu0 0.0
      %1878 = vmatpush1.msra.mxu0 0.0
      %1879 = vmatprep.subr.mxu0 0.0
      %1880 = vmatpush1.msra.mxu0 0.0
      %1881 = vmatprep.subr.mxu0 0.0
      %1882 = vmatpush1.msra.mxu0 0.0
      %1883 = vmatprep.subr.mxu0 0.0
      %1884 = vmatpush1.msra.mxu0 0.0
      %1885 = vmatprep.subr.mxu0 0.0
      %1886 = vmatpush1.msra.mxu0 0.0
      %1887 = vmatprep.subr.mxu0 0.0
      %1888 = vmatpush1.msra.mxu0 0.0
      %1889 = vmatprep.subr.mxu0 0.0
      %1890 = vmatpush1.msra.mxu0 0.0
      %1891 = vmatprep.subr.mxu0 0.0
      %1892 = vmatpush1.msra.mxu0 0.0
      %1893 = vmatprep.subr.mxu0 0.0
      %1894 = vmatpush1.msra.mxu0 0.0
      %1895 = vmatprep.subr.mxu0 0.0
      %1896 = vmatpush1.msra.mxu0 0.0
      %1897 = vmatprep.subr.mxu0 0.0
      %1898 = vmatpush1.msra.mxu0 0.0
      %1899 = vmatprep.subr.mxu0 0.0
      %1900 = vmatpush1.msra.mxu0 0.0
      %1901 = vmatprep.subr.mxu0 0.0
      %1902 = vmatpush1.msra.mxu0 0.0
      %1903 = vmatprep.subr.mxu0 0.0
      %1904 = vmatpush1.msra.mxu0 0.0
      %1905 = vmatprep.subr.mxu0 %v1873
      %1906 = vmatpush1.msra.mxu0 %v1870
      %1907 = vmatprep.subr.mxu0 0.0
      %1908 = vmatpush2.msra.mxu0 0.0
      %1909 = vmatprep.subr.mxu0 0.0
      %1910 = vmatpush2.msra.mxu0 0.0
      %1911 = vmatprep.subr.mxu0 0.0
      %1912 = vmatpush2.msra.mxu0 0.0
      %1913 = vmatprep.subr.mxu0 0.0
      %1914 = vmatpush2.msra.mxu0 0.0
      %1915 = vmatprep.subr.mxu0 0.0
      %1916 = vmatpush2.msra.mxu0 0.0
      %1917 = vmatprep.subr.mxu0 0.0
      %1918 = vmatpush2.msra.mxu0 0.0
      %1919 = vmatprep.subr.mxu0 0.0
      %1920 = vmatpush2.msra.mxu0 0.0
      %1921 = vmatprep.subr.mxu0 0.0
      %1922 = vmatpush2.msra.mxu0 0.0
      %1923 = vmatprep.subr.mxu0 0.0
      %1924 = vmatpush2.msra.mxu0 0.0
      %1925 = vmatprep.subr.mxu0 0.0
      %1926 = vmatpush2.msra.mxu0 0.0
      %1927 = vmatprep.subr.mxu0 0.0
      %1928 = vmatpush2.msra.mxu0 0.0
      %1929 = vmatprep.subr.mxu0 0.0
      %1930 = vmatpush2.msra.mxu0 0.0
      %1931 = vmatprep.subr.mxu0 0.0
      %1932 = vmatpush2.msra.mxu0 0.0
      %1933 = vmatprep.subr.mxu0 0.0
      %1934 = vmatpush2.msra.mxu0 0.0
      %1935 = vmatprep.subr.mxu0 0.0
      %1936 = vmatpush2.msra.mxu0 0.0
      %1937 = vmatprep.subr.mxu0 0.0
      %1938 = vmatpush2.msra.mxu0 0.0
      %1939 = vmatprep.mubr.f32.mxu0 0.0
      %1940 = vmatmul.mubr.f32.gmra.mxu0 %v1867
      %v1941 = vpop.f32.mrf.mxu0
      %v1942 = vadd.f32 0.0, %v1941
      %v1943 = vpop.f32.mrf.mxu0
      %v1944 = vadd.f32 0.0, %v1943
      %1945 = vdwg.mxu0
      %v1946 = vadd.f32 %v1864, %v1942
      %v1947 = vadd.f32 %v1865, %v1944
      %v1949 = vsel %vm686, %v1303, 0
      %v1951 = vsel %vm693, %v1368, 0
      %v1954 = vsel %vm693, %v1370, 0
      %1956 = vmatprep.subr.mxu0 0.0
      %1957 = vmatpush1.msra.mxu0 0.0
      %1958 = vmatprep.subr.mxu0 0.0
      %1959 = vmatpush1.msra.mxu0 0.0
      %1960 = vmatprep.subr.mxu0 0.0
      %1961 = vmatpush1.msra.mxu0 0.0
      %1962 = vmatprep.subr.mxu0 0.0
      %1963 = vmatpush1.msra.mxu0 0.0
      %1964 = vmatprep.subr.mxu0 0.0
      %1965 = vmatpush1.msra.mxu0 0.0
      %1966 = vmatprep.subr.mxu0 0.0
      %1967 = vmatpush1.msra.mxu0 0.0
      %1968 = vmatprep.subr.mxu0 0.0
      %1969 = vmatpush1.msra.mxu0 0.0
      %1970 = vmatprep.subr.mxu0 0.0
      %1971 = vmatpush1.msra.mxu0 0.0
      %1972 = vmatprep.subr.mxu0 0.0
      %1973 = vmatpush1.msra.mxu0 0.0
      %1974 = vmatprep.subr.mxu0 0.0
      %1975 = vmatpush1.msra.mxu0 0.0
      %1976 = vmatprep.subr.mxu0 0.0
      %1977 = vmatpush1.msra.mxu0 0.0
      %1978 = vmatprep.subr.mxu0 0.0
      %1979 = vmatpush1.msra.mxu0 0.0
      %1980 = vmatprep.subr.mxu0 0.0
      %1981 = vmatpush1.msra.mxu0 0.0
      %1982 = vmatprep.subr.mxu0 0.0
      %1983 = vmatpush1.msra.mxu0 0.0
      %1984 = vmatprep.subr.mxu0 0.0
      %1985 = vmatpush1.msra.mxu0 0.0
      %1986 = vmatprep.subr.mxu0 %v1954
      %1987 = vmatpush1.msra.mxu0 %v1951
      %1988 = vmatprep.subr.mxu0 0.0
      %1989 = vmatpush2.msra.mxu0 0.0
      %1990 = vmatprep.subr.mxu0 0.0
      %1991 = vmatpush2.msra.mxu0 0.0
      %1992 = vmatprep.subr.mxu0 0.0
      %1993 = vmatpush2.msra.mxu0 0.0
      %1994 = vmatprep.subr.mxu0 0.0
      %1995 = vmatpush2.msra.mxu0 0.0
      %1996 = vmatprep.subr.mxu0 0.0
      %1997 = vmatpush2.msra.mxu0 0.0
      %1998 = vmatprep.subr.mxu0 0.0
      %1999 = vmatpush2.msra.mxu0 0.0
      %2000 = vmatprep.subr.mxu0 0.0
      %2001 = vmatpush2.msra.mxu0 0.0
      %2002 = vmatprep.subr.mxu0 0.0
      %2003 = vmatpush2.msra.mxu0 0.0
      %2004 = vmatprep.subr.mxu0 0.0
      %2005 = vmatpush2.msra.mxu0 0.0
      %2006 = vmatprep.subr.mxu0 0.0
      %2007 = vmatpush2.msra.mxu0 0.0
      %2008 = vmatprep.subr.mxu0 0.0
      %2009 = vmatpush2.msra.mxu0 0.0
      %2010 = vmatprep.subr.mxu0 0.0
      %2011 = vmatpush2.msra.mxu0 0.0
      %2012 = vmatprep.subr.mxu0 0.0
      %2013 = vmatpush2.msra.mxu0 0.0
      %2014 = vmatprep.subr.mxu0 0.0
      %2015 = vmatpush2.msra.mxu0 0.0
      %2016 = vmatprep.subr.mxu0 0.0
      %2017 = vmatpush2.msra.mxu0 0.0
      %2018 = vmatprep.subr.mxu0 0.0
      %2019 = vmatpush2.msra.mxu0 0.0
      %2020 = vmatprep.mubr.f32.mxu0 0.0
      %2021 = vmatmul.mubr.f32.gmra.mxu0 %v1949
      %v2022 = vpop.f32.mrf.mxu0
      %v2023 = vadd.f32 0.0, %v2022
      %v2024 = vpop.f32.mrf.mxu0
      %v2025 = vadd.f32 0.0, %v2024
      %2026 = vdwg.mxu0
      %v2027 = vadd.f32 %v1946, %v2023
      %v2028 = vadd.f32 %v1947, %v2025
      %v2030 = vsel %vm686, %v1304, 0
      %v2033 = vsel %vm693, %v1379, 0
      %v2036 = vsel %vm693, %v1380, 0
      %2038 = vmatprep.subr.mxu0 0.0
      %2039 = vmatpush1.msra.mxu0 0.0
      %2040 = vmatprep.subr.mxu0 0.0
      %2041 = vmatpush1.msra.mxu0 0.0
      %2042 = vmatprep.subr.mxu0 0.0
      %2043 = vmatpush1.msra.mxu0 0.0
      %2044 = vmatprep.subr.mxu0 0.0
      %2045 = vmatpush1.msra.mxu0 0.0
      %2046 = vmatprep.subr.mxu0 0.0
      %2047 = vmatpush1.msra.mxu0 0.0
      %2048 = vmatprep.subr.mxu0 0.0
      %2049 = vmatpush1.msra.mxu0 0.0
      %2050 = vmatprep.subr.mxu0 0.0
      %2051 = vmatpush1.msra.mxu0 0.0
      %2052 = vmatprep.subr.mxu0 0.0
      %2053 = vmatpush1.msra.mxu0 0.0
      %2054 = vmatprep.subr.mxu0 0.0
      %2055 = vmatpush1.msra.mxu0 0.0
      %2056 = vmatprep.subr.mxu0 0.0
      %2057 = vmatpush1.msra.mxu0 0.0
      %2058 = vmatprep.subr.mxu0 0.0
      %2059 = vmatpush1.msra.mxu0 0.0
      %2060 = vmatprep.subr.mxu0 0.0
      %2061 = vmatpush1.msra.mxu0 0.0
      %2062 = vmatprep.subr.mxu0 0.0
      %2063 = vmatpush1.msra.mxu0 0.0
      %2064 = vmatprep.subr.mxu0 0.0
      %2065 = vmatpush1.msra.mxu0 0.0
      %2066 = vmatprep.subr.mxu0 0.0
      %2067 = vmatpush1.msra.mxu0 0.0
      %2068 = vmatprep.subr.mxu0 %v2036
      %2069 = vmatpush1.msra.mxu0 %v2033
      %2070 = vmatprep.subr.mxu0 0.0
      %2071 = vmatpush2.msra.mxu0 0.0
      %2072 = vmatprep.subr.mxu0 0.0
      %2073 = vmatpush2.msra.mxu0 0.0
      %2074 = vmatprep.subr.mxu0 0.0
      %2075 = vmatpush2.msra.mxu0 0.0
      %2076 = vmatprep.subr.mxu0 0.0
      %2077 = vmatpush2.msra.mxu0 0.0
      %2078 = vmatprep.subr.mxu0 0.0
      %2079 = vmatpush2.msra.mxu0 0.0
      %2080 = vmatprep.subr.mxu0 0.0
      %2081 = vmatpush2.msra.mxu0 0.0
      %2082 = vmatprep.subr.mxu0 0.0
      %2083 = vmatpush2.msra.mxu0 0.0
      %2084 = vmatprep.subr.mxu0 0.0
      %2085 = vmatpush2.msra.mxu0 0.0
      %2086 = vmatprep.subr.mxu0 0.0
      %2087 = vmatpush2.msra.mxu0 0.0
      %2088 = vmatprep.subr.mxu0 0.0
      %2089 = vmatpush2.msra.mxu0 0.0
      %2090 = vmatprep.subr.mxu0 0.0
      %2091 = vmatpush2.msra.mxu0 0.0
      %2092 = vmatprep.subr.mxu0 0.0
      %2093 = vmatpush2.msra.mxu0 0.0
      %2094 = vmatprep.subr.mxu0 0.0
      %2095 = vmatpush2.msra.mxu0 0.0
      %2096 = vmatprep.subr.mxu0 0.0
      %2097 = vmatpush2.msra.mxu0 0.0
      %2098 = vmatprep.subr.mxu0 0.0
      %2099 = vmatpush2.msra.mxu0 0.0
      %2100 = vmatprep.subr.mxu0 0.0
      %2101 = vmatpush2.msra.mxu0 0.0
      %2102 = vmatprep.mubr.f32.mxu0 0.0
      %2103 = vmatmul.mubr.f32.gmra.mxu0 %v2030
      %v2104 = vpop.f32.mrf.mxu0
      %v2105 = vadd.f32 0.0, %v2104
      %v2106 = vpop.f32.mrf.mxu0
      %v2107 = vadd.f32 0.0, %v2106
      %2108 = vdwg.mxu0
      %v2109 = vadd.f32 %v2027, %v2105
      %v2110 = vadd.f32 %v2028, %v2107
      %v2111 = vld [vmem:[%s10] sm:$0xff]
      %2113 = vset.pattern.permute.xlu0 0
      %2114 = vperm.xlu0 %2113, %v2111
      %v2115 = vpop.permute.xlu0 %2114
      %v2117 = vadd.f32 %v2109, %v2115
      %v2118 = vadd.f32 %v2110, %v2115
      %v2119 = vmax.f32 %v2117, 0.0
      %v2120 = vmax.f32 %v2118, 0.0
      %v2121 = vld [vmem:[%s11] sm:$0xff]
      %v2122 = vld [vmem:[%s11 + $0x8] sm:$0xff]
      %v2123 = vld [vmem:[%s11 + $0x10] sm:$0xff]
      %v2124 = vld [vmem:[%s11 + $0x18] sm:$0xff]
      %v2125 = vld [vmem:[%s12] sm:$0xff]
      %v2126 = vld [vmem:[%s12 + $0x8] sm:$0xff]
      %v2127 = vld [vmem:[%s12 + $0x10] sm:$0xff]
      %v2128 = vld [vmem:[%s12 + $0x18] sm:$0xff]
      %2130 = vset.pattern.permute.xlu0 0
      %2131 = vperm.xlu0 %2130, %v2125
      %v2132 = vpop.permute.xlu0 %2131
      %2135 = vset.pattern.permute.xlu0 0
      %2136 = vperm.xlu0 %2135, %v2126
      %v2137 = vpop.permute.xlu0 %2136
      %2140 = vset.pattern.permute.xlu0 0
      %2141 = vperm.xlu0 %2140, %v2127
      %v2142 = vpop.permute.xlu0 %2141
      %2145 = vset.pattern.permute.xlu0 0
      %2146 = vperm.xlu0 %2145, %v2128
      %v2147 = vpop.permute.xlu0 %2146
      %vm2149 = vcmask 64512
      %v2151 = vsel %vm2149, %v2121, 0
      %v2154 = vsel %vm2149, %v2122, 0
      %v2157 = vsel %vm2149, %v2123, 0
      %v2160 = vsel %vm2149, %v2124, 0
      %2162 = vmatprep.subr.mxu0 0.0
      %2163 = vmatpush1.msra.mxu0 0.0
      %2164 = vmatprep.subr.mxu0 0.0
      %2165 = vmatpush1.msra.mxu0 0.0
      %2166 = vmatprep.subr.mxu0 0.0
      %2167 = vmatpush1.msra.mxu0 0.0
      %2168 = vmatprep.subr.mxu0 0.0
      %2169 = vmatpush1.msra.mxu0 0.0
      %2170 = vmatprep.subr.mxu0 0.0
      %2171 = vmatpush1.msra.mxu0 0.0
      %2172 = vmatprep.subr.mxu0 0.0
      %2173 = vmatpush1.msra.mxu0 0.0
      %2174 = vmatprep.subr.mxu0 0.0
      %2175 = vmatpush1.msra.mxu0 0.0
      %2176 = vmatprep.subr.mxu0 0.0
      %2177 = vmatpush1.msra.mxu0 0.0
      %2178 = vmatprep.subr.mxu0 0.0
      %2179 = vmatpush1.msra.mxu0 0.0
      %2180 = vmatprep.subr.mxu0 0.0
      %2181 = vmatpush1.msra.mxu0 0.0
      %2182 = vmatprep.subr.mxu0 0.0
      %2183 = vmatpush1.msra.mxu0 0.0
      %2184 = vmatprep.subr.mxu0 0.0
      %2185 = vmatpush1.msra.mxu0 0.0
      %2186 = vmatprep.subr.mxu0 0.0
      %2187 = vmatpush1.msra.mxu0 0.0
      %2188 = vmatprep.subr.mxu0 0.0
      %2189 = vmatpush1.msra.mxu0 0.0
      %2190 = vmatprep.subr.mxu0 0.0
      %2191 = vmatpush1.msra.mxu0 0.0
      %2192 = vmatprep.subr.mxu0 %v2120
      %2193 = vmatpush1.msra.mxu0 %v2119
      %2194 = vmatprep.subr.mxu0 0.0
      %2195 = vmatpush2.msra.mxu0 0.0
      %2196 = vmatprep.subr.mxu0 0.0
      %2197 = vmatpush2.msra.mxu0 0.0
      %2198 = vmatprep.subr.mxu0 0.0
      %2199 = vmatpush2.msra.mxu0 0.0
      %2200 = vmatprep.subr.mxu0 0.0
      %2201 = vmatpush2.msra.mxu0 0.0
      %2202 = vmatprep.subr.mxu0 0.0
      %2203 = vmatpush2.msra.mxu0 0.0
      %2204 = vmatprep.subr.mxu0 0.0
      %2205 = vmatpush2.msra.mxu0 0.0
      %2206 = vmatprep.subr.mxu0 0.0
      %2207 = vmatpush2.msra.mxu0 0.0
      %2208 = vmatprep.subr.mxu0 0.0
      %2209 = vmatpush2.msra.mxu0 0.0
      %2210 = vmatprep.subr.mxu0 0.0
      %2211 = vmatpush2.msra.mxu0 0.0
      %2212 = vmatprep.subr.mxu0 0.0
      %2213 = vmatpush2.msra.mxu0 0.0
      %2214 = vmatprep.subr.mxu0 0.0
      %2215 = vmatpush2.msra.mxu0 0.0
      %2216 = vmatprep.subr.mxu0 0.0
      %2217 = vmatpush2.msra.mxu0 0.0
      %2218 = vmatprep.subr.mxu0 0.0
      %2219 = vmatpush2.msra.mxu0 0.0
      %2220 = vmatprep.subr.mxu0 0.0
      %2221 = vmatpush2.msra.mxu0 0.0
      %2222 = vmatprep.subr.mxu0 0.0
      %2223 = vmatpush2.msra.mxu0 0.0
      %2224 = vmatprep.subr.mxu0 0.0
      %2225 = vmatpush2.msra.mxu0 0.0
      %2226 = vmatprep.mubr.f32.mxu0 0.0
      %2227 = vmatmul.mubr.f32.gmra.mxu0 %v2151
      %v2228 = vpop.f32.mrf.mxu0
      %v2229 = vadd.f32 %v2132, %v2228
      %v2230 = vpop.f32.mrf.mxu0
      %v2231 = vadd.f32 %v2132, %v2230
      %2232 = vmatprep.mubr.f32.mxu0 0.0
      %2233 = vmatmul.mubr.f32.gmra.mxu0 %v2154
      %v2234 = vpop.f32.mrf.mxu0
      %v2235 = vadd.f32 %v2137, %v2234
      %v2236 = vpop.f32.mrf.mxu0
      %v2237 = vadd.f32 %v2137, %v2236
      %2238 = vmatprep.mubr.f32.mxu0 0.0
      %2239 = vmatmul.mubr.f32.gmra.mxu0 %v2157
      %v2240 = vpop.f32.mrf.mxu0
      %v2241 = vadd.f32 %v2142, %v2240
      %v2242 = vpop.f32.mrf.mxu0
      %v2243 = vadd.f32 %v2142, %v2242
      %2244 = vmatprep.mubr.f32.mxu0 0.0
      %2245 = vmatmul.mubr.f32.gmra.mxu0 %v2160
      %v2246 = vpop.f32.mrf.mxu0
      %v2247 = vadd.f32 %v2147, %v2246
      %v2248 = vpop.f32.mrf.mxu0
      %v2249 = vadd.f32 %v2147, %v2248
      %2250 = vdwg.mxu0
      %v2251 = vmax.f32 %v2229, 0.0
      %v2252 = vmax.f32 %v2231, 0.0
      %v2253 = vmax.f32 %v2235, 0.0
      %v2254 = vmax.f32 %v2237, 0.0
      %v2255 = vmax.f32 %v2241, 0.0
      %v2256 = vmax.f32 %v2243, 0.0
      %v2257 = vmax.f32 %v2247, 0.0
      %v2258 = vmax.f32 %v2249, 0.0
      %v2259 = vld [vmem:[%s13] sm:$0xff]
      %v2260 = vld [vmem:[%s13 + $0x8] sm:$0xff]
      %v2261 = vld [vmem:[%s13 + $0x10] sm:$0xff]
      %v2262 = vld [vmem:[%s13 + $0x18] sm:$0xff]
      %2271 = vrot.lane.b32.xlu0 %v2251, 17
      %v2272 = vpop.permute.xlu0 %2271
      %2273 = vrot.lane.b32.xlu0 %v2252, 17
      %v2274 = vpop.permute.xlu0 %2273
      %2275 = vrot.lane.b32.xlu0 %v2253, 17
      %v2276 = vpop.permute.xlu0 %2275
      %2277 = vrot.lane.b32.xlu0 %v2254, 17
      %v2278 = vpop.permute.xlu0 %2277
      %2279 = vrot.lane.b32.xlu0 %v2255, 17
      %v2280 = vpop.permute.xlu0 %2279
      %2281 = vrot.lane.b32.xlu0 %v2256, 17
      %v2282 = vpop.permute.xlu0 %2281
      %2283 = vrot.lane.b32.xlu0 %v2257, 17
      %v2284 = vpop.permute.xlu0 %2283
      %2285 = vrot.lane.b32.xlu0 %v2258, 17
      %v2286 = vpop.permute.xlu0 %2285
      %v2287 = vsel %vm793, %v2272, %v2274
      %v2288 = vsel %vm793, %v2276, %v2278
      %v2289 = vsel %vm793, %v2280, %v2282
      %v2290 = vsel %vm793, %v2284, %v2286
      %v2299 = vsel %vm793, 0.0, %v2272
      %v2300 = vsel %vm793, 0.0, %v2276
      %v2301 = vsel %vm793, 0.0, %v2280
      %v2302 = vsel %vm793, 0.0, %v2284
      %v2303 = vmul.f32 %v2299, %v661
      %v2304 = vmul.f32 %v2287, %v662
      %v2305 = vmul.f32 %v2300, %v661
      %v2306 = vmul.f32 %v2288, %v662
      %v2307 = vmul.f32 %v2301, %v661
      %v2308 = vmul.f32 %v2289, %v662
      %v2309 = vmul.f32 %v2302, %v661
      %v2310 = vmul.f32 %v2290, %v662
      %2311 = vrot.lane.b32.xlu0 %v2251, 16
      %v2312 = vpop.permute.xlu0 %2311
      %2313 = vrot.lane.b32.xlu0 %v2252, 16
      %v2314 = vpop.permute.xlu0 %2313
      %2315 = vrot.lane.b32.xlu0 %v2253, 16
      %v2316 = vpop.permute.xlu0 %2315
      %2317 = vrot.lane.b32.xlu0 %v2254, 16
      %v2318 = vpop.permute.xlu0 %2317
      %2319 = vrot.lane.b32.xlu0 %v2255, 16
      %v2320 = vpop.permute.xlu0 %2319
      %2321 = vrot.lane.b32.xlu0 %v2256, 16
      %v2322 = vpop.permute.xlu0 %2321
      %2323 = vrot.lane.b32.xlu0 %v2257, 16
      %v2324 = vpop.permute.xlu0 %2323
      %2325 = vrot.lane.b32.xlu0 %v2258, 16
      %v2326 = vpop.permute.xlu0 %2325
      %v2327 = vsel %vm814, %v2312, %v2314
      %v2328 = vsel %vm814, %v2316, %v2318
      %v2329 = vsel %vm814, %v2320, %v2322
      %v2330 = vsel %vm814, %v2324, %v2326
      %v2339 = vsel %vm814, 0.0, %v2312
      %v2340 = vsel %vm814, 0.0, %v2316
      %v2341 = vsel %vm814, 0.0, %v2320
      %v2342 = vsel %vm814, 0.0, %v2324
      %2343 = vrot.lane.b32.xlu0 %v2251, 15
      %v2344 = vpop.permute.xlu0 %2343
      %2345 = vrot.lane.b32.xlu0 %v2252, 15
      %v2346 = vpop.permute.xlu0 %2345
      %2347 = vrot.lane.b32.xlu0 %v2253, 15
      %v2348 = vpop.permute.xlu0 %2347
      %2349 = vrot.lane.b32.xlu0 %v2254, 15
      %v2350 = vpop.permute.xlu0 %2349
      %2351 = vrot.lane.b32.xlu0 %v2255, 15
      %v2352 = vpop.permute.xlu0 %2351
      %2353 = vrot.lane.b32.xlu0 %v2256, 15
      %v2354 = vpop.permute.xlu0 %2353
      %2355 = vrot.lane.b32.xlu0 %v2257, 15
      %v2356 = vpop.permute.xlu0 %2355
      %2357 = vrot.lane.b32.xlu0 %v2258, 15
      %v2358 = vpop.permute.xlu0 %2357
      %v2359 = vsel %vm831, %v2344, %v2346
      %v2360 = vsel %vm831, %v2348, %v2350
      %v2361 = vsel %vm831, %v2352, %v2354
      %v2362 = vsel %vm831, %v2356, %v2358
      %v2371 = vsel %vm831, 0.0, %v2344
      %v2372 = vsel %vm831, 0.0, %v2348
      %v2373 = vsel %vm831, 0.0, %v2352
      %v2374 = vsel %vm831, 0.0, %v2356
      %v2375 = vmul.f32 %v2371, %v667
      %v2376 = vmul.f32 %v2359, %v668
      %v2377 = vmul.f32 %v2372, %v667
      %v2378 = vmul.f32 %v2360, %v668
      %v2379 = vmul.f32 %v2373, %v667
      %v2380 = vmul.f32 %v2361, %v668
      %v2381 = vmul.f32 %v2374, %v667
      %v2382 = vmul.f32 %v2362, %v668
      %2383 = vrot.lane.b32.xlu0 %v2251, 1
      %v2384 = vpop.permute.xlu0 %2383
      %2385 = vrot.lane.b32.xlu0 %v2252, 1
      %v2386 = vpop.permute.xlu0 %2385
      %2387 = vrot.lane.b32.xlu0 %v2253, 1
      %v2388 = vpop.permute.xlu0 %2387
      %2389 = vrot.lane.b32.xlu0 %v2254, 1
      %v2390 = vpop.permute.xlu0 %2389
      %2391 = vrot.lane.b32.xlu0 %v2255, 1
      %v2392 = vpop.permute.xlu0 %2391
      %2393 = vrot.lane.b32.xlu0 %v2256, 1
      %v2394 = vpop.permute.xlu0 %2393
      %2395 = vrot.lane.b32.xlu0 %v2257, 1
      %v2396 = vpop.permute.xlu0 %2395
      %2397 = vrot.lane.b32.xlu0 %v2258, 1
      %v2398 = vpop.permute.xlu0 %2397
      %v2399 = vsel %vm852, %v2384, %v2386
      %v2400 = vsel %vm852, %v2388, %v2390
      %v2401 = vsel %vm852, %v2392, %v2394
      %v2402 = vsel %vm852, %v2396, %v2398
      %v2411 = vsel %vm852, 0.0, %v2384
      %v2412 = vsel %vm852, 0.0, %v2388
      %v2413 = vsel %vm852, 0.0, %v2392
      %v2414 = vsel %vm852, 0.0, %v2396
      %v2415 = vmul.f32 %v2411, %v661
      %v2416 = vmul.f32 %v2399, %v662
      %v2417 = vmul.f32 %v2412, %v661
      %v2418 = vmul.f32 %v2400, %v662
      %v2419 = vmul.f32 %v2413, %v661
      %v2420 = vmul.f32 %v2401, %v662
      %v2421 = vmul.f32 %v2414, %v661
      %v2422 = vmul.f32 %v2402, %v662
      %2423 = vrot.lane.b32.xlu0 %v2251, 127
      %v2424 = vpop.permute.xlu0 %2423
      %2425 = vrot.lane.b32.xlu0 %v2252, 127
      %v2426 = vpop.permute.xlu0 %2425
      %2427 = vrot.lane.b32.xlu0 %v2253, 127
      %v2428 = vpop.permute.xlu0 %2427
      %2429 = vrot.lane.b32.xlu0 %v2254, 127
      %v2430 = vpop.permute.xlu0 %2429
      %2431 = vrot.lane.b32.xlu0 %v2255, 127
      %v2432 = vpop.permute.xlu0 %2431
      %2433 = vrot.lane.b32.xlu0 %v2256, 127
      %v2434 = vpop.permute.xlu0 %2433
      %2435 = vrot.lane.b32.xlu0 %v2257, 127
      %v2436 = vpop.permute.xlu0 %2435
      %2437 = vrot.lane.b32.xlu0 %v2258, 127
      %v2438 = vpop.permute.xlu0 %2437
      %v2439 = vsel %vm873, %v2424, %v2426
      %v2440 = vsel %vm873, %v2428, %v2430
      %v2441 = vsel %vm873, %v2432, %v2434
      %v2442 = vsel %vm873, %v2436, %v2438
      %v2451 = vsel %vm873, %v2426, 0.0
      %v2452 = vsel %vm873, %v2430, 0.0
      %v2453 = vsel %vm873, %v2434, 0.0
      %v2454 = vsel %vm873, %v2438, 0.0
      %v2455 = vmul.f32 %v2439, %v667
      %v2456 = vmul.f32 %v2451, %v668
      %v2457 = vmul.f32 %v2440, %v667
      %v2458 = vmul.f32 %v2452, %v668
      %v2459 = vmul.f32 %v2441, %v667
      %v2460 = vmul.f32 %v2453, %v668
      %v2461 = vmul.f32 %v2442, %v667
      %v2462 = vmul.f32 %v2454, %v668
      %2463 = vrot.lane.b32.xlu0 %v2251, 113
      %v2464 = vpop.permute.xlu0 %2463
      %2465 = vrot.lane.b32.xlu0 %v2252, 113
      %v2466 = vpop.permute.xlu0 %2465
      %2467 = vrot.lane.b32.xlu0 %v2253, 113
      %v2468 = vpop.permute.xlu0 %2467
      %2469 = vrot.lane.b32.xlu0 %v2254, 113
      %v2470 = vpop.permute.xlu0 %2469
      %2471 = vrot.lane.b32.xlu0 %v2255, 113
      %v2472 = vpop.permute.xlu0 %2471
      %2473 = vrot.lane.b32.xlu0 %v2256, 113
      %v2474 = vpop.permute.xlu0 %2473
      %2475 = vrot.lane.b32.xlu0 %v2257, 113
      %v2476 = vpop.permute.xlu0 %2475
      %2477 = vrot.lane.b32.xlu0 %v2258, 113
      %v2478 = vpop.permute.xlu0 %2477
      %v2479 = vsel %vm894, %v2464, %v2466
      %v2480 = vsel %vm894, %v2468, %v2470
      %v2481 = vsel %vm894, %v2472, %v2474
      %v2482 = vsel %vm894, %v2476, %v2478
      %v2491 = vsel %vm894, %v2466, 0.0
      %v2492 = vsel %vm894, %v2470, 0.0
      %v2493 = vsel %vm894, %v2474, 0.0
      %v2494 = vsel %vm894, %v2478, 0.0
      %v2495 = vmul.f32 %v2479, %v661
      %v2496 = vmul.f32 %v2491, %v662
      %v2497 = vmul.f32 %v2480, %v661
      %v2498 = vmul.f32 %v2492, %v662
      %v2499 = vmul.f32 %v2481, %v661
      %v2500 = vmul.f32 %v2493, %v662
      %v2501 = vmul.f32 %v2482, %v661
      %v2502 = vmul.f32 %v2494, %v662
      %2503 = vrot.lane.b32.xlu0 %v2251, 112
      %v2504 = vpop.permute.xlu0 %2503
      %2505 = vrot.lane.b32.xlu0 %v2252, 112
      %v2506 = vpop.permute.xlu0 %2505
      %2507 = vrot.lane.b32.xlu0 %v2253, 112
      %v2508 = vpop.permute.xlu0 %2507
      %2509 = vrot.lane.b32.xlu0 %v2254, 112
      %v2510 = vpop.permute.xlu0 %2509
      %2511 = vrot.lane.b32.xlu0 %v2255, 112
      %v2512 = vpop.permute.xlu0 %2511
      %2513 = vrot.lane.b32.xlu0 %v2256, 112
      %v2514 = vpop.permute.xlu0 %2513
      %2515 = vrot.lane.b32.xlu0 %v2257, 112
      %v2516 = vpop.permute.xlu0 %2515
      %2517 = vrot.lane.b32.xlu0 %v2258, 112
      %v2518 = vpop.permute.xlu0 %2517
      %v2519 = vsel %vm915, %v2504, %v2506
      %v2520 = vsel %vm915, %v2508, %v2510
      %v2521 = vsel %vm915, %v2512, %v2514
      %v2522 = vsel %vm915, %v2516, %v2518
      %v2531 = vsel %vm915, %v2506, 0.0
      %v2532 = vsel %vm915, %v2510, 0.0
      %v2533 = vsel %vm915, %v2514, 0.0
      %v2534 = vsel %vm915, %v2518, 0.0
      %2535 = vrot.lane.b32.xlu0 %v2251, 111
      %v2536 = vpop.permute.xlu0 %2535
      %2537 = vrot.lane.b32.xlu0 %v2252, 111
      %v2538 = vpop.permute.xlu0 %2537
      %2539 = vrot.lane.b32.xlu0 %v2253, 111
      %v2540 = vpop.permute.xlu0 %2539
      %2541 = vrot.lane.b32.xlu0 %v2254, 111
      %v2542 = vpop.permute.xlu0 %2541
      %2543 = vrot.lane.b32.xlu0 %v2255, 111
      %v2544 = vpop.permute.xlu0 %2543
      %2545 = vrot.lane.b32.xlu0 %v2256, 111
      %v2546 = vpop.permute.xlu0 %2545
      %2547 = vrot.lane.b32.xlu0 %v2257, 111
      %v2548 = vpop.permute.xlu0 %2547
      %2549 = vrot.lane.b32.xlu0 %v2258, 111
      %v2550 = vpop.permute.xlu0 %2549
      %v2551 = vsel %vm932, %v2536, %v2538
      %v2552 = vsel %vm932, %v2540, %v2542
      %v2553 = vsel %vm932, %v2544, %v2546
      %v2554 = vsel %vm932, %v2548, %v2550
      %v2563 = vsel %vm932, %v2538, 0.0
      %v2564 = vsel %vm932, %v2542, 0.0
      %v2565 = vsel %vm932, %v2546, 0.0
      %v2566 = vsel %vm932, %v2550, 0.0
      %v2567 = vmul.f32 %v2551, %v667
      %v2568 = vmul.f32 %v2563, %v668
      %v2569 = vmul.f32 %v2552, %v667
      %v2570 = vmul.f32 %v2564, %v668
      %v2571 = vmul.f32 %v2553, %v667
      %v2572 = vmul.f32 %v2565, %v668
      %v2573 = vmul.f32 %v2554, %v667
      %v2574 = vmul.f32 %v2566, %v668
      %2576 = vset.pattern.permute.xlu0 0
      %2577 = vperm.xlu0 %2576, %v2259
      %v2578 = vpop.permute.xlu0 %2577
      %2581 = vset.pattern.permute.xlu0 0
      %2582 = vperm.xlu0 %2581, %v2260
      %v2583 = vpop.permute.xlu0 %2582
      %2586 = vset.pattern.permute.xlu0 0
      %2587 = vperm.xlu0 %2586, %v2261
      %v2588 = vpop.permute.xlu0 %2587
      %2591 = vset.pattern.permute.xlu0 0
      %2592 = vperm.xlu0 %2591, %v2262
      %v2593 = vpop.permute.xlu0 %2592
      %v2595 = vmul.f32 %v2303, %v2578
      %v2596 = vmul.f32 %v2304, %v2578
      %v2597 = vmul.f32 %v2305, %v2583
      %v2598 = vmul.f32 %v2306, %v2583
      %v2599 = vmul.f32 %v2307, %v2588
      %v2600 = vmul.f32 %v2308, %v2588
      %v2601 = vmul.f32 %v2309, %v2593
      %v2602 = vmul.f32 %v2310, %v2593
      %v2603 = vadd.f32 %v2595, 0.0
      %v2604 = vadd.f32 %v2596, 0.0
      %v2605 = vadd.f32 %v2597, 0.0
      %v2606 = vadd.f32 %v2598, 0.0
      %v2607 = vadd.f32 %v2599, 0.0
      %v2608 = vadd.f32 %v2600, 0.0
      %v2609 = vadd.f32 %v2601, 0.0
      %v2610 = vadd.f32 %v2602, 0.0
      %2611 = vset.pattern.permute.xlu0 1
      %2612 = vperm.xlu0 %2611, %v2259
      %v2613 = vpop.permute.xlu0 %2612
      %2615 = vset.pattern.permute.xlu0 1
      %2616 = vperm.xlu0 %2615, %v2260
      %v2617 = vpop.permute.xlu0 %2616
      %2619 = vset.pattern.permute.xlu0 1
      %2620 = vperm.xlu0 %2619, %v2261
      %v2621 = vpop.permute.xlu0 %2620
      %2623 = vset.pattern.permute.xlu0 1
      %2624 = vperm.xlu0 %2623, %v2262
      %v2625 = vpop.permute.xlu0 %2624
      %v2627 = vmul.f32 %v2339, %v2613
      %v2628 = vmul.f32 %v2327, %v2613
      %v2629 = vmul.f32 %v2340, %v2617
      %v2630 = vmul.f32 %v2328, %v2617
      %v2631 = vmul.f32 %v2341, %v2621
      %v2632 = vmul.f32 %v2329, %v2621
      %v2633 = vmul.f32 %v2342, %v2625
      %v2634 = vmul.f32 %v2330, %v2625
      %v2635 = vadd.f32 %v2603, %v2627
      %v2636 = vadd.f32 %v2604, %v2628
      %v2637 = vadd.f32 %v2605, %v2629
      %v2638 = vadd.f32 %v2606, %v2630
      %v2639 = vadd.f32 %v2607, %v2631
      %v2640 = vadd.f32 %v2608, %v2632
      %v2641 = vadd.f32 %v2609, %v2633
      %v2642 = vadd.f32 %v2610, %v2634
      %2643 = vset.pattern.permute.xlu0 2
      %2644 = vperm.xlu0 %2643, %v2259
      %v2645 = vpop.permute.xlu0 %2644
      %2647 = vset.pattern.permute.xlu0 2
      %2648 = vperm.xlu0 %2647, %v2260
      %v2649 = vpop.permute.xlu0 %2648
      %2651 = vset.pattern.permute.xlu0 2
      %2652 = vperm.xlu0 %2651, %v2261
      %v2653 = vpop.permute.xlu0 %2652
      %2655 = vset.pattern.permute.xlu0 2
      %2656 = vperm.xlu0 %2655, %v2262
      %v2657 = vpop.permute.xlu0 %2656
      %v2659 = vmul.f32 %v2375, %v2645
      %v2660 = vmul.f32 %v2376, %v2645
      %v2661 = vmul.f32 %v2377, %v2649
      %v2662 = vmul.f32 %v2378, %v2649
      %v2663 = vmul.f32 %v2379, %v2653
      %v2664 = vmul.f32 %v2380, %v2653
      %v2665 = vmul.f32 %v2381, %v2657
      %v2666 = vmul.f32 %v2382, %v2657
      %v2667 = vadd.f32 %v2635, %v2659
      %v2668 = vadd.f32 %v2636, %v2660
      %v2669 = vadd.f32 %v2637, %v2661
      %v2670 = vadd.f32 %v2638, %v2662
      %v2671 = vadd.f32 %v2639, %v2663
      %v2672 = vadd.f32 %v2640, %v2664
      %v2673 = vadd.f32 %v2641, %v2665
      %v2674 = vadd.f32 %v2642, %v2666
      %2675 = vset.pattern.permute.xlu0 3
      %2676 = vperm.xlu0 %2675, %v2259
      %v2677 = vpop.permute.xlu0 %2676
      %2679 = vset.pattern.permute.xlu0 3
      %2680 = vperm.xlu0 %2679, %v2260
      %v2681 = vpop.permute.xlu0 %2680
      %2683 = vset.pattern.permute.xlu0 3
      %2684 = vperm.xlu0 %2683, %v2261
      %v2685 = vpop.permute.xlu0 %2684
      %2687 = vset.pattern.permute.xlu0 3
      %2688 = vperm.xlu0 %2687, %v2262
      %v2689 = vpop.permute.xlu0 %2688
      %v2691 = vmul.f32 %v2415, %v2677
      %v2692 = vmul.f32 %v2416, %v2677
      %v2693 = vmul.f32 %v2417, %v2681
      %v2694 = vmul.f32 %v2418, %v2681
      %v2695 = vmul.f32 %v2419, %v2685
      %v2696 = vmul.f32 %v2420, %v2685
      %v2697 = vmul.f32 %v2421, %v2689
      %v2698 = vmul.f32 %v2422, %v2689
      %v2699 = vadd.f32 %v2667, %v2691
      %v2700 = vadd.f32 %v2668, %v2692
      %v2701 = vadd.f32 %v2669, %v2693
      %v2702 = vadd.f32 %v2670, %v2694
      %v2703 = vadd.f32 %v2671, %v2695
      %v2704 = vadd.f32 %v2672, %v2696
      %v2705 = vadd.f32 %v2673, %v2697
      %v2706 = vadd.f32 %v2674, %v2698
      %2707 = vset.pattern.permute.xlu0 4
      %2708 = vperm.xlu0 %2707, %v2259
      %v2709 = vpop.permute.xlu0 %2708
      %2711 = vset.pattern.permute.xlu0 4
      %2712 = vperm.xlu0 %2711, %v2260
      %v2713 = vpop.permute.xlu0 %2712
      %2715 = vset.pattern.permute.xlu0 4
      %2716 = vperm.xlu0 %2715, %v2261
      %v2717 = vpop.permute.xlu0 %2716
      %2719 = vset.pattern.permute.xlu0 4
      %2720 = vperm.xlu0 %2719, %v2262
      %v2721 = vpop.permute.xlu0 %2720
      %v2723 = vmul.f32 %v2251, %v2709
      %v2724 = vmul.f32 %v2252, %v2709
      %v2725 = vmul.f32 %v2253, %v2713
      %v2726 = vmul.f32 %v2254, %v2713
      %v2727 = vmul.f32 %v2255, %v2717
      %v2728 = vmul.f32 %v2256, %v2717
      %v2729 = vmul.f32 %v2257, %v2721
      %v2730 = vmul.f32 %v2258, %v2721
      %v2731 = vadd.f32 %v2699, %v2723
      %v2732 = vadd.f32 %v2700, %v2724
      %v2733 = vadd.f32 %v2701, %v2725
      %v2734 = vadd.f32 %v2702, %v2726
      %v2735 = vadd.f32 %v2703, %v2727
      %v2736 = vadd.f32 %v2704, %v2728
      %v2737 = vadd.f32 %v2705, %v2729
      %v2738 = vadd.f32 %v2706, %v2730
      %2739 = vset.pattern.permute.xlu0 5
      %2740 = vperm.xlu0 %2739, %v2259
      %v2741 = vpop.permute.xlu0 %2740
      %2743 = vset.pattern.permute.xlu0 5
      %2744 = vperm.xlu0 %2743, %v2260
      %v2745 = vpop.permute.xlu0 %2744
      %2747 = vset.pattern.permute.xlu0 5
      %2748 = vperm.xlu0 %2747, %v2261
      %v2749 = vpop.permute.xlu0 %2748
      %2751 = vset.pattern.permute.xlu0 5
      %2752 = vperm.xlu0 %2751, %v2262
      %v2753 = vpop.permute.xlu0 %2752
      %v2755 = vmul.f32 %v2455, %v2741
      %v2756 = vmul.f32 %v2456, %v2741
      %v2757 = vmul.f32 %v2457, %v2745
      %v2758 = vmul.f32 %v2458, %v2745
      %v2759 = vmul.f32 %v2459, %v2749
      %v2760 = vmul.f32 %v2460, %v2749
      %v2761 = vmul.f32 %v2461, %v2753
      %v2762 = vmul.f32 %v2462, %v2753
      %v2763 = vadd.f32 %v2731, %v2755
      %v2764 = vadd.f32 %v2732, %v2756
      %v2765 = vadd.f32 %v2733, %v2757
      %v2766 = vadd.f32 %v2734, %v2758
      %v2767 = vadd.f32 %v2735, %v2759
      %v2768 = vadd.f32 %v2736, %v2760
      %v2769 = vadd.f32 %v2737, %v2761
      %v2770 = vadd.f32 %v2738, %v2762
      %2771 = vset.pattern.permute.xlu0 6
      %2772 = vperm.xlu0 %2771, %v2259
      %v2773 = vpop.permute.xlu0 %2772
      %2775 = vset.pattern.permute.xlu0 6
      %2776 = vperm.xlu0 %2775, %v2260
      %v2777 = vpop.permute.xlu0 %2776
      %2779 = vset.pattern.permute.xlu0 6
      %2780 = vperm.xlu0 %2779, %v2261
      %v2781 = vpop.permute.xlu0 %2780
      %2783 = vset.pattern.permute.xlu0 6
      %2784 = vperm.xlu0 %2783, %v2262
      %v2785 = vpop.permute.xlu0 %2784
      %v2787 = vmul.f32 %v2495, %v2773
      %v2788 = vmul.f32 %v2496, %v2773
      %v2789 = vmul.f32 %v2497, %v2777
      %v2790 = vmul.f32 %v2498, %v2777
      %v2791 = vmul.f32 %v2499, %v2781
      %v2792 = vmul.f32 %v2500, %v2781
      %v2793 = vmul.f32 %v2501, %v2785
      %v2794 = vmul.f32 %v2502, %v2785
      %v2795 = vadd.f32 %v2763, %v2787
      %v2796 = vadd.f32 %v2764, %v2788
      %v2797 = vadd.f32 %v2765, %v2789
      %v2798 = vadd.f32 %v2766, %v2790
      %v2799 = vadd.f32 %v2767, %v2791
      %v2800 = vadd.f32 %v2768, %v2792
      %v2801 = vadd.f32 %v2769, %v2793
      %v2802 = vadd.f32 %v2770, %v2794
      %2803 = vset.pattern.permute.xlu0 7
      %2804 = vperm.xlu0 %2803, %v2259
      %v2805 = vpop.permute.xlu0 %2804
      %2807 = vset.pattern.permute.xlu0 7
      %2808 = vperm.xlu0 %2807, %v2260
      %v2809 = vpop.permute.xlu0 %2808
      %2811 = vset.pattern.permute.xlu0 7
      %2812 = vperm.xlu0 %2811, %v2261
      %v2813 = vpop.permute.xlu0 %2812
      %2815 = vset.pattern.permute.xlu0 7
      %2816 = vperm.xlu0 %2815, %v2262
      %v2817 = vpop.permute.xlu0 %2816
      %v2819 = vmul.f32 %v2519, %v2805
      %v2820 = vmul.f32 %v2531, %v2805
      %v2821 = vmul.f32 %v2520, %v2809
      %v2822 = vmul.f32 %v2532, %v2809
      %v2823 = vmul.f32 %v2521, %v2813
      %v2824 = vmul.f32 %v2533, %v2813
      %v2825 = vmul.f32 %v2522, %v2817
      %v2826 = vmul.f32 %v2534, %v2817
      %v2827 = vadd.f32 %v2795, %v2819
      %v2828 = vadd.f32 %v2796, %v2820
      %v2829 = vadd.f32 %v2797, %v2821
      %v2830 = vadd.f32 %v2798, %v2822
      %v2831 = vadd.f32 %v2799, %v2823
      %v2832 = vadd.f32 %v2800, %v2824
      %v2833 = vadd.f32 %v2801, %v2825
      %v2834 = vadd.f32 %v2802, %v2826
      %2835 = vset.pattern.permute.xlu0 8
      %2836 = vperm.xlu0 %2835, %v2259
      %v2837 = vpop.permute.xlu0 %2836
      %2839 = vset.pattern.permute.xlu0 8
      %2840 = vperm.xlu0 %2839, %v2260
      %v2841 = vpop.permute.xlu0 %2840
      %2843 = vset.pattern.permute.xlu0 8
      %2844 = vperm.xlu0 %2843, %v2261
      %v2845 = vpop.permute.xlu0 %2844
      %2847 = vset.pattern.permute.xlu0 8
      %2848 = vperm.xlu0 %2847, %v2262
      %v2849 = vpop.permute.xlu0 %2848
      %v2851 = vmul.f32 %v2567, %v2837
      %v2852 = vmul.f32 %v2568, %v2837
      %v2853 = vmul.f32 %v2569, %v2841
      %v2854 = vmul.f32 %v2570, %v2841
      %v2855 = vmul.f32 %v2571, %v2845
      %v2856 = vmul.f32 %v2572, %v2845
      %v2857 = vmul.f32 %v2573, %v2849
      %v2858 = vmul.f32 %v2574, %v2849
      %v2859 = vadd.f32 %v2827, %v2851
      %v2860 = vadd.f32 %v2828, %v2852
      %v2861 = vadd.f32 %v2829, %v2853
      %v2862 = vadd.f32 %v2830, %v2854
      %v2863 = vadd.f32 %v2831, %v2855
      %v2864 = vadd.f32 %v2832, %v2856
      %v2865 = vadd.f32 %v2833, %v2857
      %v2866 = vadd.f32 %v2834, %v2858
      %v2867 = vld [vmem:[%s14] sm:$0xff]
      %v2868 = vld [vmem:[%s14 + $0x8] sm:$0xff]
      %v2869 = vld [vmem:[%s14 + $0x10] sm:$0xff]
      %v2870 = vld [vmem:[%s14 + $0x18] sm:$0xff]
      %2872 = vset.pattern.permute.xlu0 0
      %2873 = vperm.xlu0 %2872, %v2867
      %v2874 = vpop.permute.xlu0 %2873
      %2877 = vset.pattern.permute.xlu0 0
      %2878 = vperm.xlu0 %2877, %v2868
      %v2879 = vpop.permute.xlu0 %2878
      %2882 = vset.pattern.permute.xlu0 0
      %2883 = vperm.xlu0 %2882, %v2869
      %v2884 = vpop.permute.xlu0 %2883
      %2887 = vset.pattern.permute.xlu0 0
      %2888 = vperm.xlu0 %2887, %v2870
      %v2889 = vpop.permute.xlu0 %2888
      %v2891 = vadd.f32 %v2859, %v2874
      %v2892 = vadd.f32 %v2860, %v2874
      %v2893 = vadd.f32 %v2861, %v2879
      %v2894 = vadd.f32 %v2862, %v2879
      %v2895 = vadd.f32 %v2863, %v2884
      %v2896 = vadd.f32 %v2864, %v2884
      %v2897 = vadd.f32 %v2865, %v2889
      %v2898 = vadd.f32 %v2866, %v2889
      %v2899 = vmax.f32 %v2891, 0.0
      %v2900 = vmax.f32 %v2892, 0.0
      %v2901 = vmax.f32 %v2893, 0.0
      %v2902 = vmax.f32 %v2894, 0.0
      %v2903 = vmax.f32 %v2895, 0.0
      %v2904 = vmax.f32 %v2896, 0.0
      %v2905 = vmax.f32 %v2897, 0.0
      %v2906 = vmax.f32 %v2898, 0.0
      %v2907 = vld [vmem:[%s15] sm:$0xff]
      %v2908 = vld [vmem:[%s15 + $0x8] sm:$0xff]
      %v2909 = vld [vmem:[%s15 + $0x10] sm:$0xff]
      %v2910 = vld [vmem:[%s15 + $0x18] sm:$0xff]
      %v2911 = vld [vmem:[%s16] sm:$0xff]
      %v2912 = vld [vmem:[%s16 + $0x8] sm:$0xff]
      %v2913 = vld [vmem:[%s16 + $0x10] sm:$0xff]
      %v2914 = vld [vmem:[%s16 + $0x18] sm:$0xff]
      %2916 = vset.pattern.permute.xlu0 0
      %2917 = vperm.xlu0 %2916, %v2911
      %v2918 = vpop.permute.xlu0 %2917
      %2921 = vset.pattern.permute.xlu0 0
      %2922 = vperm.xlu0 %2921, %v2912
      %v2923 = vpop.permute.xlu0 %2922
      %2926 = vset.pattern.permute.xlu0 0
      %2927 = vperm.xlu0 %2926, %v2913
      %v2928 = vpop.permute.xlu0 %2927
      %2931 = vset.pattern.permute.xlu0 0
      %2932 = vperm.xlu0 %2931, %v2914
      %v2933 = vpop.permute.xlu0 %2932
      %vm2935 = vcmask 261120
      %v2937 = vsel %vm2935, %v2907, 0
      %v2940 = vsel %vm2935, %v2908, 0
      %v2943 = vsel %vm2935, %v2909, 0
      %v2946 = vsel %vm2935, %v2910, 0
      %2948 = vmatprep.subr.mxu0 0.0
      %2949 = vmatpush1.msra.mxu0 0.0
      %2950 = vmatprep.subr.mxu0 0.0
      %2951 = vmatpush1.msra.mxu0 0.0
      %2952 = vmatprep.subr.mxu0 0.0
      %2953 = vmatpush1.msra.mxu0 0.0
      %2954 = vmatprep.subr.mxu0 0.0
      %2955 = vmatpush1.msra.mxu0 0.0
      %2956 = vmatprep.subr.mxu0 0.0
      %2957 = vmatpush1.msra.mxu0 0.0
      %2958 = vmatprep.subr.mxu0 0.0
      %2959 = vmatpush1.msra.mxu0 0.0
      %2960 = vmatprep.subr.mxu0 0.0
      %2961 = vmatpush1.msra.mxu0 0.0
      %2962 = vmatprep.subr.mxu0 0.0
      %2963 = vmatpush1.msra.mxu0 0.0
      %2964 = vmatprep.subr.mxu0 0.0
      %2965 = vmatpush1.msra.mxu0 0.0
      %2966 = vmatprep.subr.mxu0 0.0
      %2967 = vmatpush1.msra.mxu0 0.0
      %2968 = vmatprep.subr.mxu0 0.0
      %2969 = vmatpush1.msra.mxu0 0.0
      %2970 = vmatprep.subr.mxu0 0.0
      %2971 = vmatpush1.msra.mxu0 0.0
      %2972 = vmatprep.subr.mxu0 %v2906
      %2973 = vmatpush1.msra.mxu0 %v2905
      %2974 = vmatprep.subr.mxu0 %v2904
      %2975 = vmatpush1.msra.mxu0 %v2903
      %2976 = vmatprep.subr.mxu0 %v2902
      %2977 = vmatpush1.msra.mxu0 %v2901
      %2978 = vmatprep.subr.mxu0 %v2900
      %2979 = vmatpush1.msra.mxu0 %v2899
      %2980 = vmatprep.subr.mxu0 0.0
      %2981 = vmatpush2.msra.mxu0 0.0
      %2982 = vmatprep.subr.mxu0 0.0
      %2983 = vmatpush2.msra.mxu0 0.0
      %2984 = vmatprep.subr.mxu0 0.0
      %2985 = vmatpush2.msra.mxu0 0.0
      %2986 = vmatprep.subr.mxu0 0.0
      %2987 = vmatpush2.msra.mxu0 0.0
      %2988 = vmatprep.subr.mxu0 0.0
      %2989 = vmatpush2.msra.mxu0 0.0
      %2990 = vmatprep.subr.mxu0 0.0
      %2991 = vmatpush2.msra.mxu0 0.0
      %2992 = vmatprep.subr.mxu0 0.0
      %2993 = vmatpush2.msra.mxu0 0.0
      %2994 = vmatprep.subr.mxu0 0.0
      %2995 = vmatpush2.msra.mxu0 0.0
      %2996 = vmatprep.subr.mxu0 0.0
      %2997 = vmatpush2.msra.mxu0 0.0
      %2998 = vmatprep.subr.mxu0 0.0
      %2999 = vmatpush2.msra.mxu0 0.0
      %3000 = vmatprep.subr.mxu0 0.0
      %3001 = vmatpush2.msra.mxu0 0.0
      %3002 = vmatprep.subr.mxu0 0.0
      %3003 = vmatpush2.msra.mxu0 0.0
      %3004 = vmatprep.subr.mxu0 0.0
      %3005 = vmatpush2.msra.mxu0 0.0
      %3006 = vmatprep.subr.mxu0 0.0
      %3007 = vmatpush2.msra.mxu0 0.0
      %3008 = vmatprep.subr.mxu0 0.0
      %3009 = vmatpush2.msra.mxu0 0.0
      %3010 = vmatprep.subr.mxu0 0.0
      %3011 = vmatpush2.msra.mxu0 0.0
      %3012 = vmatprep.mubr.f32.mxu0 0.0
      %3013 = vmatmul.mubr.f32.gmra.mxu0 %v2937
      %v3014 = vpop.f32.mrf.mxu0
      %v3015 = vadd.f32 %v2918, %v3014
      %v3016 = vpop.f32.mrf.mxu0
      %v3017 = vadd.f32 %v2918, %v3016
      %3018 = vmatprep.mubr.f32.mxu0 0.0
      %3019 = vmatmul.mubr.f32.gmra.mxu0 %v2940
      %v3020 = vpop.f32.mrf.mxu0
      %v3021 = vadd.f32 %v2923, %v3020
      %v3022 = vpop.f32.mrf.mxu0
      %v3023 = vadd.f32 %v2923, %v3022
      %3024 = vmatprep.mubr.f32.mxu0 0.0
      %3025 = vmatmul.mubr.f32.gmra.mxu0 %v2943
      %v3026 = vpop.f32.mrf.mxu0
      %v3027 = vadd.f32 %v2928, %v3026
      %v3028 = vpop.f32.mrf.mxu0
      %v3029 = vadd.f32 %v2928, %v3028
      %3030 = vmatprep.mubr.f32.mxu0 0.0
      %3031 = vmatmul.mubr.f32.gmra.mxu0 %v2946
      %v3032 = vpop.f32.mrf.mxu0
      %v3033 = vadd.f32 %v2933, %v3032
      %v3034 = vpop.f32.mrf.mxu0
      %v3035 = vadd.f32 %v2933, %v3034
      %3036 = vdwg.mxu0
      %v3037 = vmax.f32 %v3015, 0.0
      %v3038 = vmax.f32 %v3017, 0.0
      %v3039 = vmax.f32 %v3021, 0.0
      %v3040 = vmax.f32 %v3023, 0.0
      %v3041 = vmax.f32 %v3027, 0.0
      %v3042 = vmax.f32 %v3029, 0.0
      %v3043 = vmax.f32 %v3033, 0.0
      %v3044 = vmax.f32 %v3035, 0.0
      %v3045 = vld [vmem:[%s17] sm:$0xff]
      %v3046 = vld [vmem:[%s18] sm:$0xff]
      %3048 = vset.pattern.permute.xlu0 0
      %3049 = vperm.xlu0 %3048, %v3046
      %v3050 = vpop.permute.xlu0 %3049
      %v3053 = vsel %vm2935, %v3045, 0
      %3055 = vmatprep.subr.mxu0 0.0
      %3056 = vmatpush1.msra.mxu0 0.0
      %3057 = vmatprep.subr.mxu0 0.0
      %3058 = vmatpush1.msra.mxu0 0.0
      %3059 = vmatprep.subr.mxu0 0.0
      %3060 = vmatpush1.msra.mxu0 0.0
      %3061 = vmatprep.subr.mxu0 0.0
      %3062 = vmatpush1.msra.mxu0 0.0
      %3063 = vmatprep.subr.mxu0 0.0
      %3064 = vmatpush1.msra.mxu0 0.0
      %3065 = vmatprep.subr.mxu0 0.0
      %3066 = vmatpush1.msra.mxu0 0.0
      %3067 = vmatprep.subr.mxu0 0.0
      %3068 = vmatpush1.msra.mxu0 0.0
      %3069 = vmatprep.subr.mxu0 0.0
      %3070 = vmatpush1.msra.mxu0 0.0
      %3071 = vmatprep.subr.mxu0 0.0
      %3072 = vmatpush1.msra.mxu0 0.0
      %3073 = vmatprep.subr.mxu0 0.0
      %3074 = vmatpush1.msra.mxu0 0.0
      %3075 = vmatprep.subr.mxu0 0.0
      %3076 = vmatpush1.msra.mxu0 0.0
      %3077 = vmatprep.subr.mxu0 0.0
      %3078 = vmatpush1.msra.mxu0 0.0
      %3079 = vmatprep.subr.mxu0 %v3044
      %3080 = vmatpush1.msra.mxu0 %v3043
      %3081 = vmatprep.subr.mxu0 %v3042
      %3082 = vmatpush1.msra.mxu0 %v3041
      %3083 = vmatprep.subr.mxu0 %v3040
      %3084 = vmatpush1.msra.mxu0 %v3039
      %3085 = vmatprep.subr.mxu0 %v3038
      %3086 = vmatpush1.msra.mxu0 %v3037
      %3087 = vmatprep.subr.mxu0 0.0
      %3088 = vmatpush2.msra.mxu0 0.0
      %3089 = vmatprep.subr.mxu0 0.0
      %3090 = vmatpush2.msra.mxu0 0.0
      %3091 = vmatprep.subr.mxu0 0.0
      %3092 = vmatpush2.msra.mxu0 0.0
      %3093 = vmatprep.subr.mxu0 0.0
      %3094 = vmatpush2.msra.mxu0 0.0
      %3095 = vmatprep.subr.mxu0 0.0
      %3096 = vmatpush2.msra.mxu0 0.0
      %3097 = vmatprep.subr.mxu0 0.0
      %3098 = vmatpush2.msra.mxu0 0.0
      %3099 = vmatprep.subr.mxu0 0.0
      %3100 = vmatpush2.msra.mxu0 0.0
      %3101 = vmatprep.subr.mxu0 0.0
      %3102 = vmatpush2.msra.mxu0 0.0
      %3103 = vmatprep.subr.mxu0 0.0
      %3104 = vmatpush2.msra.mxu0 0.0
      %3105 = vmatprep.subr.mxu0 0.0
      %3106 = vmatpush2.msra.mxu0 0.0
      %3107 = vmatprep.subr.mxu0 0.0
      %3108 = vmatpush2.msra.mxu0 0.0
      %3109 = vmatprep.subr.mxu0 0.0
      %3110 = vmatpush2.msra.mxu0 0.0
      %3111 = vmatprep.subr.mxu0 0.0
      %3112 = vmatpush2.msra.mxu0 0.0
      %3113 = vmatprep.subr.mxu0 0.0
      %3114 = vmatpush2.msra.mxu0 0.0
      %3115 = vmatprep.subr.mxu0 0.0
      %3116 = vmatpush2.msra.mxu0 0.0
      %3117 = vmatprep.subr.mxu0 0.0
      %3118 = vmatpush2.msra.mxu0 0.0
      %3119 = vmatprep.mubr.f32.mxu0 0.0
      %3120 = vmatmul.mubr.f32.gmra.mxu0 %v3053
      %v3121 = vpop.f32.mrf.mxu0
      %v3122 = vadd.f32 %v3050, %v3121
      %v3123 = vpop.f32.mrf.mxu0
      %v3124 = vadd.f32 %v3050, %v3123
      %3125 = vdwg.mxu0
      %v3126 = vadd.f32 %v3122, %v2119
      %v3127 = vadd.f32 %v3124, %v2120
      %v3128 = vld [vmem:[%s19] sm:$0xff]
      %v3130 = vsel %vm686, %v3128, 0
      %3132 = vmatprep.subr.mxu0 0.0
      %3133 = vmatpush1.msra.mxu0 0.0
      %3134 = vmatprep.subr.mxu0 0.0
      %3135 = vmatpush1.msra.mxu0 0.0
      %3136 = vmatprep.subr.mxu0 0.0
      %3137 = vmatpush1.msra.mxu0 0.0
      %3138 = vmatprep.subr.mxu0 0.0
      %3139 = vmatpush1.msra.mxu0 0.0
      %3140 = vmatprep.subr.mxu0 0.0
      %3141 = vmatpush1.msra.mxu0 0.0
      %3142 = vmatprep.subr.mxu0 0.0
      %3143 = vmatpush1.msra.mxu0 0.0
      %3144 = vmatprep.subr.mxu0 0.0
      %3145 = vmatpush1.msra.mxu0 0.0
      %3146 = vmatprep.subr.mxu0 0.0
      %3147 = vmatpush1.msra.mxu0 0.0
      %3148 = vmatprep.subr.mxu0 0.0
      %3149 = vmatpush1.msra.mxu0 0.0
      %3150 = vmatprep.subr.mxu0 0.0
      %3151 = vmatpush1.msra.mxu0 0.0
      %3152 = vmatprep.subr.mxu0 0.0
      %3153 = vmatpush1.msra.mxu0 0.0
      %3154 = vmatprep.subr.mxu0 0.0
      %3155 = vmatpush1.msra.mxu0 0.0
      %3156 = vmatprep.subr.mxu0 0.0
      %3157 = vmatpush1.msra.mxu0 0.0
      %3158 = vmatprep.subr.mxu0 0.0
      %3159 = vmatpush1.msra.mxu0 0.0
      %3160 = vmatprep.subr.mxu0 0.0
      %3161 = vmatpush1.msra.mxu0 0.0
      %3162 = vmatprep.subr.mxu0 %v696
      %3163 = vmatpush1.msra.mxu0 %v694
      %3164 = vmatprep.subr.mxu0 0.0
      %3165 = vmatpush2.msra.mxu0 0.0
      %3166 = vmatprep.subr.mxu0 0.0
      %3167 = vmatpush2.msra.mxu0 0.0
      %3168 = vmatprep.subr.mxu0 0.0
      %3169 = vmatpush2.msra.mxu0 0.0
      %3170 = vmatprep.subr.mxu0 0.0
      %3171 = vmatpush2.msra.mxu0 0.0
      %3172 = vmatprep.subr.mxu0 0.0
      %3173 = vmatpush2.msra.mxu0 0.0
      %3174 = vmatprep.subr.mxu0 0.0
      %3175 = vmatpush2.msra.mxu0 0.0
      %3176 = vmatprep.subr.mxu0 0.0
      %3177 = vmatpush2.msra.mxu0 0.0
      %3178 = vmatprep.subr.mxu0 0.0
      %3179 = vmatpush2.msra.mxu0 0.0
      %3180 = vmatprep.subr.mxu0 0.0
      %3181 = vmatpush2.msra.mxu0 0.0
      %3182 = vmatprep.subr.mxu0 0.0
      %3183 = vmatpush2.msra.mxu0 0.0
      %3184 = vmatprep.subr.mxu0 0.0
      %3185 = vmatpush2.msra.mxu0 0.0
      %3186 = vmatprep.subr.mxu0 0.0
      %3187 = vmatpush2.msra.mxu0 0.0
      %3188 = vmatprep.subr.mxu0 0.0
      %3189 = vmatpush2.msra.mxu0 0.0
      %3190 = vmatprep.subr.mxu0 0.0
      %3191 = vmatpush2.msra.mxu0 0.0
      %3192 = vmatprep.subr.mxu0 0.0
      %3193 = vmatpush2.msra.mxu0 0.0
      %3194 = vmatprep.subr.mxu0 0.0
      %3195 = vmatpush2.msra.mxu0 0.0
      %3196 = vmatprep.mubr.f32.mxu0 0.0
      %3197 = vmatmul.mubr.f32.gmra.mxu0 %v3130
      %v3198 = vpop.f32.mrf.mxu0
      %v3199 = vadd.f32 0.0, %v3198
      %v3200 = vpop.f32.mrf.mxu0
      %v3201 = vadd.f32 0.0, %v3200
      %3202 = vdwg.mxu0
      %v3203 = vadd.f32 %v3126, %v3199
      %v3204 = vadd.f32 %v3127, %v3201
      %3205 = vst [vmem:[%s629] sm:$0xff] %v3203
      %3206 = vst [vmem:[%s629 + $0x8] sm:$0xff] %v3204
      %p3207 = scmp.lt.s32.totalorder %s31, 1
      %s3208 = scalar_select %p3207, %s31, 1
      %s3209 = smul.addr %s3208, 2
      %s3210 = smul.addr %s3209, 8
      %s3211 = scalar_lea.vmem %s20, %s3210
      // Predicated region
      $region101: #{block_forward.1} parent=99 // pred_check
        %p3212 = pneg %p474
      $region102: #{block_forward.1} parent=99 // pred_check_branch
        %3214 = sbr.rel (%p3212) target = $region104
      $region103: #{block_forward.1} parent=99 // pred_region
        _
      $region104: #{block_forward.1} parent=99 // pred_fallthru
        _
    $region100: #{block_forward.1} parent=5 // pred_fallthru
      _
    %p3215 = scmp.le.s32.totalorder 2, %s26
    // Predicated region
    $region105: #{block_forward.1} parent=5 // pred_check
      %p3216 = pneg %p3215
    $region106: #{block_forward.1} parent=5 // pred_check_branch
      %3218 = sbr.rel (%p3216) target = $region108
    $region107: #{block_forward.1} parent=5 // pred_region
      %s3219 = ssub.s32 %s26, 2
      // Predicated region
      $region109: #{block_forward.1} parent=107 // pred_check
        %p3220 = pneg %p480
      $region110: #{block_forward.1} parent=107 // pred_check_branch
        %3222 = sbr.rel (%p3220) target = $region112
      $region111: #{block_forward.1} parent=107 // pred_region
        %p3223 = scmp.lt.s32.totalorder %s32, 1
        %s3224 = scalar_select %p3223, %s32, 1
        %s3225 = smul.addr %s3224, 2
        %s3226 = smul.addr %s3225, 8
        %s3227 = scalar_lea.vmem %s20, %s3226
      $region112: #{block_forward.1} parent=107 // pred_fallthru
        _
    $region108: #{block_forward.1} parent=5 // pred_fallthru
      _
  $region6: #{block_forward.1} parent=0 // loop_footer
    %s30 = sadd.s32 1, %s26
  $region7: #{block_forward.1} parent=0 // loop_footer_branch
    %25 = sbr.rel target = $region3
  $region8: #{block_forward.1} parent=0 // loop_exit
    _

</llo_original>
